<compile_context>
chip_gen: v7x
topology: tpu7x:2x2x1
jax: 0.10.0
libtpu: 0.0.40
codegen_flags: <defaults>
</compile_context>

<pallas_src>
import jax
import jax.numpy as jnp
from jax.experimental import pallas as pl
from jax.experimental.pallas import tpu as pltpu


def _round_up(x: int, m: int) -> int:
    return ((x + m - 1) // m) * m


# ----------------------------------------------------------------------------
# Kernel
# ----------------------------------------------------------------------------
def glove_classifier_kernel(
    x_ref,       # (T*Bp, E)   time-major, flattened, batch padded to 8
    h0_ref,      # (2, Bp, Hp) initial hidden, hidden padded to 128
    wih0_ref,    # (E,  3*Hp)  layer-0 input weights, gate blocks lane-aligned
    whh0_ref,    # (Hp, 3*Hp)
    bi0_ref,     # (1,  3*Hp)  combined bias: [b_ir+b_hr | b_iz+b_hz | b_in]
    bhn0_ref,    # (1,  Hp)    b_hn (kept separate: multiplied by r)
    wih1_ref, whh1_ref, bi1_ref, bhn1_ref,     # layer-1 GRU params, same layout
    w1_ref, b1_ref,   # fc1: (Hp, H1), (1, H1)
    w2_ref, b2_ref,   # fc2: (H1, H2), (1, H2)
    w3_ref, b3_ref,   # fc3: (H2, 1),  (1, 1)
    out_ref,          # (Bp, 1)
):
    Bp = h0_ref.shape[1]
    Hp = h0_ref.shape[2]
    T = x_ref.shape[0] // Bp

    # Hoisted, time-invariant layer-0 input projection for all timesteps at
    # once; its bias (with r/z hh-biases folded in) is added once here.
    gi0_all = (jnp.dot(x_ref[...], wih0_ref[...],
                       preferred_element_type=jnp.float32)
               + bi0_ref[...])                                   # (T*Bp, 3Hp)

    # Only weights that sit on the serial chain are held live across the loop.
    whh0 = whh0_ref[...]
    wih1 = wih1_ref[...]
    whh1 = whh1_ref[...]
    # Hoist the broadcasts (JAX does not CSE broadcast_in_dim per iteration).
    bi1 = jnp.broadcast_to(bi1_ref[...], (Bp, 3 * Hp))
    bhn0 = jnp.broadcast_to(bhn0_ref[...], (Bp, Hp))
    bhn1 = jnp.broadcast_to(bhn1_ref[...], (Bp, Hp))

    h0 = h0_ref[0]   # (Bp, Hp)
    h1 = h0_ref[1]   # (Bp, Hp)

    # Fully unrolled time loop (T static, small). Gate slices are at multiples
    # of 128 lanes, so they are pure vreg selects. Padded hidden lanes stay
    # exactly 0 through the recurrence (zero weight cols / zero biases).
    for t in range(T):
        # ---- GRU layer 0
        gi = gi0_all[t * Bp:(t + 1) * Bp, :]                      # (Bp, 3Hp)
        gh = jnp.dot(h0, whh0, preferred_element_type=jnp.float32)
        r = jax.nn.sigmoid(gi[:, :Hp] + gh[:, :Hp])
        z = jax.nn.sigmoid(gi[:, Hp:2 * Hp] + gh[:, Hp:2 * Hp])
        n = jnp.tanh(gi[:, 2 * Hp:] + r * (gh[:, 2 * Hp:] + bhn0))
        h0 = (1.0 - z) * n + z * h0
        # ---- GRU layer 1
        gi = jnp.dot(h0, wih1, preferred_element_type=jnp.float32) + bi1
        gh = jnp.dot(h1, whh1, preferred_element_type=jnp.float32)
        r = jax.nn.sigmoid(gi[:, :Hp] + gh[:, :Hp])
        z = jax.nn.sigmoid(gi[:, Hp:2 * Hp] + gh[:, Hp:2 * Hp])
        n = jnp.tanh(gi[:, 2 * Hp:] + r * (gh[:, 2 * Hp:] + bhn1))
        h1 = (1.0 - z) * n + z * h1

    # MLP head on the last-timestep hidden of the top GRU layer
    # (== output[:, -1, :]). Head weights are read here, at point of use.
    y = jnp.maximum(jnp.dot(h1, w1_ref[...],
                            preferred_element_type=jnp.float32) + b1_ref[...], 0.0)
    y = jnp.maximum(jnp.dot(y, w2_ref[...],
                            preferred_element_type=jnp.float32) + b2_ref[...], 0.0)
    out_ref[...] = jnp.dot(y, w3_ref[...],
                           preferred_element_type=jnp.float32) + b3_ref[...]


# ----------------------------------------------------------------------------
# Wrapper: layout / padding prep + pallas_call
# ----------------------------------------------------------------------------
def _pad_gate_weight(w, H, Hp, in_pad=None):
    """(in, 3H) -> (in_pad or in, 3Hp): each gate gets its own Hp lane block."""
    in_dim = w.shape[0]
    rows = in_dim if in_pad is None else in_pad
    out = jnp.zeros((rows, 3 * Hp), jnp.float32)
    for g in range(3):
        out = out.at[:in_dim, g * Hp:g * Hp + H].set(w[:, g * H:(g + 1) * H])
    return out


def _pack_biases(bih, bhh, H, Hp):
    """Fold r/z hh-biases into the input-side bias; keep b_hn separate."""
    bih = bih.reshape(-1).astype(jnp.float32)
    bhh = bhh.reshape(-1).astype(jnp.float32)
    bi = jnp.zeros((1, 3 * Hp), jnp.float32)
    bi = bi.at[0, 0 * Hp:0 * Hp + H].set(bih[0:H] + bhh[0:H])
    bi = bi.at[0, 1 * Hp:1 * Hp + H].set(bih[H:2 * H] + bhh[H:2 * H])
    bi = bi.at[0, 2 * Hp:2 * Hp + H].set(bih[2 * H:3 * H])
    bhn = jnp.zeros((1, Hp), jnp.float32).at[0, :H].set(bhh[2 * H:3 * H])
    return bi, bhn


def glove_classifier_forward(x_btE, h0, params):
    """x_btE: (B, T, E) batch_first like the PyTorch module.
    params: PyTorch-layout GRU/linear weights, linears pre-transposed (in,out)."""
    (wih0, whh0, bih0, bhh0, wih1, whh1, bih1, bhh1,
     w1, b1, w2, b2, w3, b3) = params
    B, T, E = x_btE.shape
    H = whh0.shape[0]
    H1 = w1.shape[1]
    H2 = w2.shape[1]

    Hp = _round_up(H, 128)    # lane-aligned gate blocks
    Bp = _round_up(B, 8)      # sublane-aligned batch

    # Time-major, batch-padded, flattened input so the kernel does a single
    # batched input projection and takes sublane-aligned static row slices.
    x_tbe = jnp.transpose(x_btE.astype(jnp.float32), (1, 0, 2))
    x_tbe = jnp.pad(x_tbe, ((0, 0), (0, Bp - B), (0, 0)))
    x2d = x_tbe.reshape(T * Bp, E)

    h0p = jnp.pad(h0.astype(jnp.float32), ((0, 0), (0, Bp - B), (0, Hp - H)))

    wih0_p = _pad_gate_weight(wih0, H, Hp)                # (E,  3Hp)
    whh0_p = _pad_gate_weight(whh0, H, Hp, in_pad=Hp)     # (Hp, 3Hp)
    wih1_p = _pad_gate_weight(wih1, H, Hp, in_pad=Hp)
    whh1_p = _pad_gate_weight(whh1, H, Hp, in_pad=Hp)
    bi0_p, bhn0_p = _pack_biases(bih0, bhh0, H, Hp)
    bi1_p, bhn1_p = _pack_biases(bih1, bhh1, H, Hp)

    w1_p = jnp.zeros((Hp, H1), jnp.float32).at[:H].set(w1.astype(jnp.float32))
    b1_p = b1.reshape(1, H1).astype(jnp.float32)
    w2_p = w2.astype(jnp.float32)
    b2_p = b2.reshape(1, H2).astype(jnp.float32)
    w3_p = w3.astype(jnp.float32)
    b3_p = b3.reshape(1, 1).astype(jnp.float32)

    operands = (x2d, h0p,
                wih0_p, whh0_p, bi0_p, bhn0_p,
                wih1_p, whh1_p, bi1_p, bhn1_p,
                w1_p, b1_p, w2_p, b2_p, w3_p, b3_p)

    vmem = pl.BlockSpec(memory_space=pltpu.MemorySpace.VMEM)
    out_p = pl.pallas_call(
        glove_classifier_kernel,
        out_shape=jax.ShapeDtypeStruct((Bp, 1), jnp.float32),
        in_specs=[vmem] * len(operands),
        out_specs=vmem,
    )(*operands)
    # NOTE: for real batch sizes, add a grid over Bp//8 blocks with
    # dimension_semantics=("parallel",) so both v7x TensorCores are used.
    return out_p[:B]


# ----------------------------------------------------------------------------
# Independent pure-JAX reference (PyTorch GRU semantics, unpadded layout)
# ----------------------------------------------------------------------------
def _ref_forward(x_btE, h0, params):
    (wih0, whh0, bih0, bhh0, wih1, whh1, bih1, bhh1,
     w1, b1, w2, b2, w3, b3) = params
    H = whh0.shape[0]

    def cell(x_t, h_prev, wih, whh, bih, bhh):
        gi = x_t @ wih + bih            # (B, 3H), gate order [r, z, n]
        gh = h_prev @ whh + bhh
        r = jax.nn.sigmoid(gi[:, :H] + gh[:, :H])
        z = jax.nn.sigmoid(gi[:, H:2 * H] + gh[:, H:2 * H])
        n = jnp.tanh(gi[:, 2 * H:] + r * gh[:, 2 * H:])
        return (1.0 - z) * n + z * h_prev

    h_l0, h_l1 = h0[0], h0[1]
    for t in range(x_btE.shape[1]):
        h_l0 = cell(x_btE[:, t, :], h_l0, wih0, whh0, bih0, bhh0)
        h_l1 = cell(h_l0, h_l1, wih1, whh1, bih1, bhh1)
    y = jnp.maximum(h_l1 @ w1 + b1, 0.0)
    y = jnp.maximum(y @ w2 + b2, 0.0)
    return y @ w3 + b3


if __name__ == "__main__":
    # Small shapes consistent with the module's forward pass.
    B, T, E = 2, 8, 16          # batch, sequence length, embedding_dimension
    H = 32                      # hidden_size
    H1, H2 = 32, 16             # hidden1, hidden2

    key = jax.random.PRNGKey(0)
    keys = jax.random.split(key, 18)

    def init(k, shape, scale=0.1):
        return (scale * jax.random.normal(k, shape)).astype(jnp.float32)

    # GRU layer 0: input_size = E ; GRU layer 1: input_size = H.
    # Weights pre-transposed: (in, 3H); biases (3H,) as in PyTorch.
    wih0 = init(keys[0], (E, 3 * H))
    whh0 = init(keys[1], (H, 3 * H))
    bih0 = init(keys[2], (3 * H,))
    bhh0 = init(keys[3], (3 * H,))
    wih1 = init(keys[4], (H, 3 * H))
    whh1 = init(keys[5], (H, 3 * H))
    bih1 = init(keys[6], (3 * H,))
    bhh1 = init(keys[7], (3 * H,))
    # MLP head (weights pre-transposed to (in, out)).
    w1 = init(keys[8], (H, H1))
    b1 = init(keys[9], (H1,))
    w2 = init(keys[10], (H1, H2))
    b2 = init(keys[11], (H2,))
    w3 = init(keys[12], (H2, 1))
    b3 = init(keys[13], (1,))

    params = (wih0, whh0, bih0, bhh0, wih1, whh1, bih1, bhh1,
              w1, b1, w2, b2, w3, b3)

    # Inputs and a deterministic stand-in for torch.randn initial hidden state.
    x = jax.random.normal(keys[14], (B, T, E), dtype=jnp.float32)
    h0 = jax.random.normal(keys[15], (2, B, H), dtype=jnp.float32)

    out = glove_classifier_forward(x, h0, params)
    out = jax.block_until_ready(out)

    ref = _ref_forward(x, h0, params)
    assert out.shape == (B, 1), out.shape
    assert jnp.allclose(out, ref, atol=1e-4, rtol=1e-4), (out, ref)

    print("KERNEL_OK")
</pallas_src>

<mosaic_0001>
module attributes {stable_mosaic.version = 11 : i64} {
  func.func @glove_classifier_kernel(%arg0: memref<64x16xf32, #tpu.memory_space<vmem>>, %arg1: memref<2x8x128xf32, #tpu.memory_space<vmem>>, %arg2: memref<16x384xf32, #tpu.memory_space<vmem>>, %arg3: memref<128x384xf32, #tpu.memory_space<vmem>>, %arg4: memref<1x384xf32, #tpu.memory_space<vmem>>, %arg5: memref<1x128xf32, #tpu.memory_space<vmem>>, %arg6: memref<128x384xf32, #tpu.memory_space<vmem>>, %arg7: memref<128x384xf32, #tpu.memory_space<vmem>>, %arg8: memref<1x384xf32, #tpu.memory_space<vmem>>, %arg9: memref<1x128xf32, #tpu.memory_space<vmem>>, %arg10: memref<128x32xf32, #tpu.memory_space<vmem>>, %arg11: memref<1x32xf32, #tpu.memory_space<vmem>>, %arg12: memref<32x16xf32, #tpu.memory_space<vmem>>, %arg13: memref<1x16xf32, #tpu.memory_space<vmem>>, %arg14: memref<16x1xf32, #tpu.memory_space<vmem>>, %arg15: memref<1x1xf32, #tpu.memory_space<vmem>>, %arg16: memref<8x1xf32, #tpu.memory_space<vmem>>) attributes {dimension_semantics = [], scalar_prefetch = 0 : i64, scratch_operands = 0 : i64, tpu.core_type = #tpu.core_type<tc>} {
    %c0 = arith.constant 0 : index
    %c0_0 = arith.constant 0 : index
    %0 = vector.load %arg0[%c0, %c0_0] : memref<64x16xf32, #tpu.memory_space<vmem>>, vector<64x16xf32>
    %c0_1 = arith.constant 0 : index
    %c0_2 = arith.constant 0 : index
    %1 = vector.load %arg2[%c0_1, %c0_2] : memref<16x384xf32, #tpu.memory_space<vmem>>, vector<16x384xf32>
    %cst = arith.constant dense<0.000000e+00> : vector<64x384xf32>
    %2 = tpu.matmul %0, %1, %cst {dimension_numbers = #tpu.dot_dimension_numbers<[1], [0], [0], [1], [0, 0, 1, 1], [], []>} : vector<64x16xf32>, vector<16x384xf32>, vector<64x384xf32> -> vector<64x384xf32>
    %c0_3 = arith.constant 0 : index
    %c0_4 = arith.constant 0 : index
    %3 = vector.load %arg4[%c0_3, %c0_4] : memref<1x384xf32, #tpu.memory_space<vmem>>, vector<1x384xf32>
    %4 = vector.broadcast %3 : vector<1x384xf32> to vector<64x384xf32>
    %5 = arith.addf %2, %4 : vector<64x384xf32>
    %c0_5 = arith.constant 0 : index
    %c0_6 = arith.constant 0 : index
    %6 = vector.load %arg3[%c0_5, %c0_6] : memref<128x384xf32, #tpu.memory_space<vmem>>, vector<128x384xf32>
    %c0_7 = arith.constant 0 : index
    %c0_8 = arith.constant 0 : index
    %7 = vector.load %arg6[%c0_7, %c0_8] : memref<128x384xf32, #tpu.memory_space<vmem>>, vector<128x384xf32>
    %c0_9 = arith.constant 0 : index
    %c0_10 = arith.constant 0 : index
    %8 = vector.load %arg7[%c0_9, %c0_10] : memref<128x384xf32, #tpu.memory_space<vmem>>, vector<128x384xf32>
    %c0_11 = arith.constant 0 : index
    %c0_12 = arith.constant 0 : index
    %9 = vector.load %arg8[%c0_11, %c0_12] : memref<1x384xf32, #tpu.memory_space<vmem>>, vector<1x384xf32>
    %10 = vector.shape_cast %9 : vector<1x384xf32> to vector<1x384xf32>
    %11 = vector.broadcast %10 : vector<1x384xf32> to vector<8x384xf32>
    %c0_13 = arith.constant 0 : index
    %c0_14 = arith.constant 0 : index
    %12 = vector.load %arg5[%c0_13, %c0_14] : memref<1x128xf32, #tpu.memory_space<vmem>>, vector<1x128xf32>
    %13 = vector.shape_cast %12 : vector<1x128xf32> to vector<1x128xf32>
    %14 = vector.broadcast %13 : vector<1x128xf32> to vector<8x128xf32>
    %c0_15 = arith.constant 0 : index
    %c0_16 = arith.constant 0 : index
    %15 = vector.load %arg9[%c0_15, %c0_16] : memref<1x128xf32, #tpu.memory_space<vmem>>, vector<1x128xf32>
    %16 = vector.shape_cast %15 : vector<1x128xf32> to vector<1x128xf32>
    %17 = vector.broadcast %16 : vector<1x128xf32> to vector<8x128xf32>
    %c0_17 = arith.constant 0 : index
    %c0_18 = arith.constant 0 : index
    %c0_19 = arith.constant 0 : index
    %18 = vector.load %arg1[%c0_17, %c0_18, %c0_19] : memref<2x8x128xf32, #tpu.memory_space<vmem>>, vector<1x8x128xf32>
    %19 = vector.shape_cast %18 : vector<1x8x128xf32> to vector<8x128xf32>
    %c1 = arith.constant 1 : index
    %c0_20 = arith.constant 0 : index
    %c0_21 = arith.constant 0 : index
    %20 = vector.load %arg1[%c1, %c0_20, %c0_21] : memref<2x8x128xf32, #tpu.memory_space<vmem>>, vector<1x8x128xf32>
    %21 = vector.shape_cast %20 : vector<1x8x128xf32> to vector<8x128xf32>
    %22 = vector.extract_strided_slice %5 {offsets = [0, 0], sizes = [8, 384], strides = [1, 1]} : vector<64x384xf32> to vector<8x384xf32>
    %cst_22 = arith.constant dense<0.000000e+00> : vector<8x384xf32>
    %23 = tpu.matmul %19, %6, %cst_22 {dimension_numbers = #tpu.dot_dimension_numbers<[1], [0], [0], [1], [0, 0, 1, 1], [], []>} : vector<8x128xf32>, vector<128x384xf32>, vector<8x384xf32> -> vector<8x384xf32>
    %24 = vector.extract_strided_slice %22 {offsets = [0, 0], sizes = [8, 128], strides = [1, 1]} : vector<8x384xf32> to vector<8x128xf32>
    %25 = vector.extract_strided_slice %23 {offsets = [0, 0], sizes = [8, 128], strides = [1, 1]} : vector<8x384xf32> to vector<8x128xf32>
    %26 = arith.addf %24, %25 : vector<8x128xf32>
    %27 = arith.negf %26 : vector<8x128xf32>
    %28 = math.exp %27 : vector<8x128xf32>
    %cst_23 = arith.constant 1.000000e+00 : f32
    %29 = vector.broadcast %cst_23 : f32 to vector<8x128xf32>
    %30 = arith.addf %29, %28 : vector<8x128xf32>
    %31 = arith.divf %29, %30 : vector<8x128xf32>
    %32 = vector.extract_strided_slice %22 {offsets = [0, 128], sizes = [8, 128], strides = [1, 1]} : vector<8x384xf32> to vector<8x128xf32>
    %33 = vector.extract_strided_slice %23 {offsets = [0, 128], sizes = [8, 128], strides = [1, 1]} : vector<8x384xf32> to vector<8x128xf32>
    %34 = arith.addf %32, %33 : vector<8x128xf32>
    %35 = arith.negf %34 : vector<8x128xf32>
    %36 = math.exp %35 : vector<8x128xf32>
    %cst_24 = arith.constant 1.000000e+00 : f32
    %37 = vector.broadcast %cst_24 : f32 to vector<8x128xf32>
    %38 = arith.addf %37, %36 : vector<8x128xf32>
    %39 = arith.divf %37, %38 : vector<8x128xf32>
    %40 = vector.extract_strided_slice %22 {offsets = [0, 256], sizes = [8, 128], strides = [1, 1]} : vector<8x384xf32> to vector<8x128xf32>
    %41 = vector.extract_strided_slice %23 {offsets = [0, 256], sizes = [8, 128], strides = [1, 1]} : vector<8x384xf32> to vector<8x128xf32>
    %42 = arith.addf %41, %14 : vector<8x128xf32>
    %43 = arith.mulf %31, %42 : vector<8x128xf32>
    %44 = arith.addf %40, %43 : vector<8x128xf32>
    %45 = math.tanh %44 : vector<8x128xf32>
    %cst_25 = arith.constant 1.000000e+00 : f32
    %46 = vector.broadcast %cst_25 : f32 to vector<8x128xf32>
    %47 = arith.subf %46, %39 : vector<8x128xf32>
    %48 = arith.mulf %47, %45 : vector<8x128xf32>
    %49 = arith.mulf %39, %19 : vector<8x128xf32>
    %50 = arith.addf %48, %49 : vector<8x128xf32>
    %cst_26 = arith.constant dense<0.000000e+00> : vector<8x384xf32>
    %51 = tpu.matmul %50, %7, %cst_26 {dimension_numbers = #tpu.dot_dimension_numbers<[1], [0], [0], [1], [0, 0, 1, 1], [], []>} : vector<8x128xf32>, vector<128x384xf32>, vector<8x384xf32> -> vector<8x384xf32>
    %52 = arith.addf %51, %11 : vector<8x384xf32>
    %cst_27 = arith.constant dense<0.000000e+00> : vector<8x384xf32>
    %53 = tpu.matmul %21, %8, %cst_27 {dimension_numbers = #tpu.dot_dimension_numbers<[1], [0], [0], [1], [0, 0, 1, 1], [], []>} : vector<8x128xf32>, vector<128x384xf32>, vector<8x384xf32> -> vector<8x384xf32>
    %54 = vector.extract_strided_slice %52 {offsets = [0, 0], sizes = [8, 128], strides = [1, 1]} : vector<8x384xf32> to vector<8x128xf32>
    %55 = vector.extract_strided_slice %53 {offsets = [0, 0], sizes = [8, 128], strides = [1, 1]} : vector<8x384xf32> to vector<8x128xf32>
    %56 = arith.addf %54, %55 : vector<8x128xf32>
    %57 = arith.negf %56 : vector<8x128xf32>
    %58 = math.exp %57 : vector<8x128xf32>
    %cst_28 = arith.constant 1.000000e+00 : f32
    %59 = vector.broadcast %cst_28 : f32 to vector<8x128xf32>
    %60 = arith.addf %59, %58 : vector<8x128xf32>
    %61 = arith.divf %59, %60 : vector<8x128xf32>
    %62 = vector.extract_strided_slice %52 {offsets = [0, 128], sizes = [8, 128], strides = [1, 1]} : vector<8x384xf32> to vector<8x128xf32>
    %63 = vector.extract_strided_slice %53 {offsets = [0, 128], sizes = [8, 128], strides = [1, 1]} : vector<8x384xf32> to vector<8x128xf32>
    %64 = arith.addf %62, %63 : vector<8x128xf32>
    %65 = arith.negf %64 : vector<8x128xf32>
    %66 = math.exp %65 : vector<8x128xf32>
    %cst_29 = arith.constant 1.000000e+00 : f32
    %67 = vector.broadcast %cst_29 : f32 to vector<8x128xf32>
    %68 = arith.addf %67, %66 : vector<8x128xf32>
    %69 = arith.divf %67, %68 : vector<8x128xf32>
    %70 = vector.extract_strided_slice %52 {offsets = [0, 256], sizes = [8, 128], strides = [1, 1]} : vector<8x384xf32> to vector<8x128xf32>
    %71 = vector.extract_strided_slice %53 {offsets = [0, 256], sizes = [8, 128], strides = [1, 1]} : vector<8x384xf32> to vector<8x128xf32>
    %72 = arith.addf %71, %17 : vector<8x128xf32>
    %73 = arith.mulf %61, %72 : vector<8x128xf32>
    %74 = arith.addf %70, %73 : vector<8x128xf32>
    %75 = math.tanh %74 : vector<8x128xf32>
    %cst_30 = arith.constant 1.000000e+00 : f32
    %76 = vector.broadcast %cst_30 : f32 to vector<8x128xf32>
    %77 = arith.subf %76, %69 : vector<8x128xf32>
    %78 = arith.mulf %77, %75 : vector<8x128xf32>
    %79 = arith.mulf %69, %21 : vector<8x128xf32>
    %80 = arith.addf %78, %79 : vector<8x128xf32>
    %81 = vector.extract_strided_slice %5 {offsets = [8, 0], sizes = [8, 384], strides = [1, 1]} : vector<64x384xf32> to vector<8x384xf32>
    %cst_31 = arith.constant dense<0.000000e+00> : vector<8x384xf32>
    %82 = tpu.matmul %50, %6, %cst_31 {dimension_numbers = #tpu.dot_dimension_numbers<[1], [0], [0], [1], [0, 0, 1, 1], [], []>} : vector<8x128xf32>, vector<128x384xf32>, vector<8x384xf32> -> vector<8x384xf32>
    %83 = vector.extract_strided_slice %81 {offsets = [0, 0], sizes = [8, 128], strides = [1, 1]} : vector<8x384xf32> to vector<8x128xf32>
    %84 = vector.extract_strided_slice %82 {offsets = [0, 0], sizes = [8, 128], strides = [1, 1]} : vector<8x384xf32> to vector<8x128xf32>
    %85 = arith.addf %83, %84 : vector<8x128xf32>
    %86 = arith.negf %85 : vector<8x128xf32>
    %87 = math.exp %86 : vector<8x128xf32>
    %cst_32 = arith.constant 1.000000e+00 : f32
    %88 = vector.broadcast %cst_32 : f32 to vector<8x128xf32>
    %89 = arith.addf %88, %87 : vector<8x128xf32>
    %90 = arith.divf %88, %89 : vector<8x128xf32>
    %91 = vector.extract_strided_slice %81 {offsets = [0, 128], sizes = [8, 128], strides = [1, 1]} : vector<8x384xf32> to vector<8x128xf32>
    %92 = vector.extract_strided_slice %82 {offsets = [0, 128], sizes = [8, 128], strides = [1, 1]} : vector<8x384xf32> to vector<8x128xf32>
    %93 = arith.addf %91, %92 : vector<8x128xf32>
    %94 = arith.negf %93 : vector<8x128xf32>
    %95 = math.exp %94 : vector<8x128xf32>
    %cst_33 = arith.constant 1.000000e+00 : f32
    %96 = vector.broadcast %cst_33 : f32 to vector<8x128xf32>
    %97 = arith.addf %96, %95 : vector<8x128xf32>
    %98 = arith.divf %96, %97 : vector<8x128xf32>
    %99 = vector.extract_strided_slice %81 {offsets = [0, 256], sizes = [8, 128], strides = [1, 1]} : vector<8x384xf32> to vector<8x128xf32>
    %100 = vector.extract_strided_slice %82 {offsets = [0, 256], sizes = [8, 128], strides = [1, 1]} : vector<8x384xf32> to vector<8x128xf32>
    %101 = arith.addf %100, %14 : vector<8x128xf32>
    %102 = arith.mulf %90, %101 : vector<8x128xf32>
    %103 = arith.addf %99, %102 : vector<8x128xf32>
    %104 = math.tanh %103 : vector<8x128xf32>
    %cst_34 = arith.constant 1.000000e+00 : f32
    %105 = vector.broadcast %cst_34 : f32 to vector<8x128xf32>
    %106 = arith.subf %105, %98 : vector<8x128xf32>
    %107 = arith.mulf %106, %104 : vector<8x128xf32>
    %108 = arith.mulf %98, %50 : vector<8x128xf32>
    %109 = arith.addf %107, %108 : vector<8x128xf32>
    %cst_35 = arith.constant dense<0.000000e+00> : vector<8x384xf32>
    %110 = tpu.matmul %109, %7, %cst_35 {dimension_numbers = #tpu.dot_dimension_numbers<[1], [0], [0], [1], [0, 0, 1, 1], [], []>} : vector<8x128xf32>, vector<128x384xf32>, vector<8x384xf32> -> vector<8x384xf32>
    %111 = arith.addf %110, %11 : vector<8x384xf32>
    %cst_36 = arith.constant dense<0.000000e+00> : vector<8x384xf32>
    %112 = tpu.matmul %80, %8, %cst_36 {dimension_numbers = #tpu.dot_dimension_numbers<[1], [0], [0], [1], [0, 0, 1, 1], [], []>} : vector<8x128xf32>, vector<128x384xf32>, vector<8x384xf32> -> vector<8x384xf32>
    %113 = vector.extract_strided_slice %111 {offsets = [0, 0], sizes = [8, 128], strides = [1, 1]} : vector<8x384xf32> to vector<8x128xf32>
    %114 = vector.extract_strided_slice %112 {offsets = [0, 0], sizes = [8, 128], strides = [1, 1]} : vector<8x384xf32> to vector<8x128xf32>
    %115 = arith.addf %113, %114 : vector<8x128xf32>
    %116 = arith.negf %115 : vector<8x128xf32>
    %117 = math.exp %116 : vector<8x128xf32>
    %cst_37 = arith.constant 1.000000e+00 : f32
    %118 = vector.broadcast %cst_37 : f32 to vector<8x128xf32>
    %119 = arith.addf %118, %117 : vector<8x128xf32>
    %120 = arith.divf %118, %119 : vector<8x128xf32>
    %121 = vector.extract_strided_slice %111 {offsets = [0, 128], sizes = [8, 128], strides = [1, 1]} : vector<8x384xf32> to vector<8x128xf32>
    %122 = vector.extract_strided_slice %112 {offsets = [0, 128], sizes = [8, 128], strides = [1, 1]} : vector<8x384xf32> to vector<8x128xf32>
    %123 = arith.addf %121, %122 : vector<8x128xf32>
    %124 = arith.negf %123 : vector<8x128xf32>
    %125 = math.exp %124 : vector<8x128xf32>
    %cst_38 = arith.constant 1.000000e+00 : f32
    %126 = vector.broadcast %cst_38 : f32 to vector<8x128xf32>
    %127 = arith.addf %126, %125 : vector<8x128xf32>
    %128 = arith.divf %126, %127 : vector<8x128xf32>
    %129 = vector.extract_strided_slice %111 {offsets = [0, 256], sizes = [8, 128], strides = [1, 1]} : vector<8x384xf32> to vector<8x128xf32>
    %130 = vector.extract_strided_slice %112 {offsets = [0, 256], sizes = [8, 128], strides = [1, 1]} : vector<8x384xf32> to vector<8x128xf32>
    %131 = arith.addf %130, %17 : vector<8x128xf32>
    %132 = arith.mulf %120, %131 : vector<8x128xf32>
    %133 = arith.addf %129, %132 : vector<8x128xf32>
    %134 = math.tanh %133 : vector<8x128xf32>
    %cst_39 = arith.constant 1.000000e+00 : f32
    %135 = vector.broadcast %cst_39 : f32 to vector<8x128xf32>
    %136 = arith.subf %135, %128 : vector<8x128xf32>
    %137 = arith.mulf %136, %134 : vector<8x128xf32>
    %138 = arith.mulf %128, %80 : vector<8x128xf32>
    %139 = arith.addf %137, %138 : vector<8x128xf32>
    %140 = vector.extract_strided_slice %5 {offsets = [16, 0], sizes = [8, 384], strides = [1, 1]} : vector<64x384xf32> to vector<8x384xf32>
    %cst_40 = arith.constant dense<0.000000e+00> : vector<8x384xf32>
    %141 = tpu.matmul %109, %6, %cst_40 {dimension_numbers = #tpu.dot_dimension_numbers<[1], [0], [0], [1], [0, 0, 1, 1], [], []>} : vector<8x128xf32>, vector<128x384xf32>, vector<8x384xf32> -> vector<8x384xf32>
    %142 = vector.extract_strided_slice %140 {offsets = [0, 0], sizes = [8, 128], strides = [1, 1]} : vector<8x384xf32> to vector<8x128xf32>
    %143 = vector.extract_strided_slice %141 {offsets = [0, 0], sizes = [8, 128], strides = [1, 1]} : vector<8x384xf32> to vector<8x128xf32>
    %144 = arith.addf %142, %143 : vector<8x128xf32>
    %145 = arith.negf %144 : vector<8x128xf32>
    %146 = math.exp %145 : vector<8x128xf32>
    %cst_41 = arith.constant 1.000000e+00 : f32
    %147 = vector.broadcast %cst_41 : f32 to vector<8x128xf32>
    %148 = arith.addf %147, %146 : vector<8x128xf32>
    %149 = arith.divf %147, %148 : vector<8x128xf32>
    %150 = vector.extract_strided_slice %140 {offsets = [0, 128], sizes = [8, 128], strides = [1, 1]} : vector<8x384xf32> to vector<8x128xf32>
    %151 = vector.extract_strided_slice %141 {offsets = [0, 128], sizes = [8, 128], strides = [1, 1]} : vector<8x384xf32> to vector<8x128xf32>
    %152 = arith.addf %150, %151 : vector<8x128xf32>
    %153 = arith.negf %152 : vector<8x128xf32>
    %154 = math.exp %153 : vector<8x128xf32>
    %cst_42 = arith.constant 1.000000e+00 : f32
    %155 = vector.broadcast %cst_42 : f32 to vector<8x128xf32>
    %156 = arith.addf %155, %154 : vector<8x128xf32>
    %157 = arith.divf %155, %156 : vector<8x128xf32>
    %158 = vector.extract_strided_slice %140 {offsets = [0, 256], sizes = [8, 128], strides = [1, 1]} : vector<8x384xf32> to vector<8x128xf32>
    %159 = vector.extract_strided_slice %141 {offsets = [0, 256], sizes = [8, 128], strides = [1, 1]} : vector<8x384xf32> to vector<8x128xf32>
    %160 = arith.addf %159, %14 : vector<8x128xf32>
    %161 = arith.mulf %149, %160 : vector<8x128xf32>
    %162 = arith.addf %158, %161 : vector<8x128xf32>
    %163 = math.tanh %162 : vector<8x128xf32>
    %cst_43 = arith.constant 1.000000e+00 : f32
    %164 = vector.broadcast %cst_43 : f32 to vector<8x128xf32>
    %165 = arith.subf %164, %157 : vector<8x128xf32>
    %166 = arith.mulf %165, %163 : vector<8x128xf32>
    %167 = arith.mulf %157, %109 : vector<8x128xf32>
    %168 = arith.addf %166, %167 : vector<8x128xf32>
    %cst_44 = arith.constant dense<0.000000e+00> : vector<8x384xf32>
    %169 = tpu.matmul %168, %7, %cst_44 {dimension_numbers = #tpu.dot_dimension_numbers<[1], [0], [0], [1], [0, 0, 1, 1], [], []>} : vector<8x128xf32>, vector<128x384xf32>, vector<8x384xf32> -> vector<8x384xf32>
    %170 = arith.addf %169, %11 : vector<8x384xf32>
    %cst_45 = arith.constant dense<0.000000e+00> : vector<8x384xf32>
    %171 = tpu.matmul %139, %8, %cst_45 {dimension_numbers = #tpu.dot_dimension_numbers<[1], [0], [0], [1], [0, 0, 1, 1], [], []>} : vector<8x128xf32>, vector<128x384xf32>, vector<8x384xf32> -> vector<8x384xf32>
    %172 = vector.extract_strided_slice %170 {offsets = [0, 0], sizes = [8, 128], strides = [1, 1]} : vector<8x384xf32> to vector<8x128xf32>
    %173 = vector.extract_strided_slice %171 {offsets = [0, 0], sizes = [8, 128], strides = [1, 1]} : vector<8x384xf32> to vector<8x128xf32>
    %174 = arith.addf %172, %173 : vector<8x128xf32>
    %175 = arith.negf %174 : vector<8x128xf32>
    %176 = math.exp %175 : vector<8x128xf32>
    %cst_46 = arith.constant 1.000000e+00 : f32
    %177 = vector.broadcast %cst_46 : f32 to vector<8x128xf32>
    %178 = arith.addf %177, %176 : vector<8x128xf32>
    %179 = arith.divf %177, %178 : vector<8x128xf32>
    %180 = vector.extract_strided_slice %170 {offsets = [0, 128], sizes = [8, 128], strides = [1, 1]} : vector<8x384xf32> to vector<8x128xf32>
    %181 = vector.extract_strided_slice %171 {offsets = [0, 128], sizes = [8, 128], strides = [1, 1]} : vector<8x384xf32> to vector<8x128xf32>
    %182 = arith.addf %180, %181 : vector<8x128xf32>
    %183 = arith.negf %182 : vector<8x128xf32>
    %184 = math.exp %183 : vector<8x128xf32>
    %cst_47 = arith.constant 1.000000e+00 : f32
    %185 = vector.broadcast %cst_47 : f32 to vector<8x128xf32>
    %186 = arith.addf %185, %184 : vector<8x128xf32>
    %187 = arith.divf %185, %186 : vector<8x128xf32>
    %188 = vector.extract_strided_slice %170 {offsets = [0, 256], sizes = [8, 128], strides = [1, 1]} : vector<8x384xf32> to vector<8x128xf32>
    %189 = vector.extract_strided_slice %171 {offsets = [0, 256], sizes = [8, 128], strides = [1, 1]} : vector<8x384xf32> to vector<8x128xf32>
    %190 = arith.addf %189, %17 : vector<8x128xf32>
    %191 = arith.mulf %179, %190 : vector<8x128xf32>
    %192 = arith.addf %188, %191 : vector<8x128xf32>
    %193 = math.tanh %192 : vector<8x128xf32>
    %cst_48 = arith.constant 1.000000e+00 : f32
    %194 = vector.broadcast %cst_48 : f32 to vector<8x128xf32>
    %195 = arith.subf %194, %187 : vector<8x128xf32>
    %196 = arith.mulf %195, %193 : vector<8x128xf32>
    %197 = arith.mulf %187, %139 : vector<8x128xf32>
    %198 = arith.addf %196, %197 : vector<8x128xf32>
    %199 = vector.extract_strided_slice %5 {offsets = [24, 0], sizes = [8, 384], strides = [1, 1]} : vector<64x384xf32> to vector<8x384xf32>
    %cst_49 = arith.constant dense<0.000000e+00> : vector<8x384xf32>
    %200 = tpu.matmul %168, %6, %cst_49 {dimension_numbers = #tpu.dot_dimension_numbers<[1], [0], [0], [1], [0, 0, 1, 1], [], []>} : vector<8x128xf32>, vector<128x384xf32>, vector<8x384xf32> -> vector<8x384xf32>
    %201 = vector.extract_strided_slice %199 {offsets = [0, 0], sizes = [8, 128], strides = [1, 1]} : vector<8x384xf32> to vector<8x128xf32>
    %202 = vector.extract_strided_slice %200 {offsets = [0, 0], sizes = [8, 128], strides = [1, 1]} : vector<8x384xf32> to vector<8x128xf32>
    %203 = arith.addf %201, %202 : vector<8x128xf32>
    %204 = arith.negf %203 : vector<8x128xf32>
    %205 = math.exp %204 : vector<8x128xf32>
    %cst_50 = arith.constant 1.000000e+00 : f32
    %206 = vector.broadcast %cst_50 : f32 to vector<8x128xf32>
    %207 = arith.addf %206, %205 : vector<8x128xf32>
    %208 = arith.divf %206, %207 : vector<8x128xf32>
    %209 = vector.extract_strided_slice %199 {offsets = [0, 128], sizes = [8, 128], strides = [1, 1]} : vector<8x384xf32> to vector<8x128xf32>
    %210 = vector.extract_strided_slice %200 {offsets = [0, 128], sizes = [8, 128], strides = [1, 1]} : vector<8x384xf32> to vector<8x128xf32>
    %211 = arith.addf %209, %210 : vector<8x128xf32>
    %212 = arith.negf %211 : vector<8x128xf32>
    %213 = math.exp %212 : vector<8x128xf32>
    %cst_51 = arith.constant 1.000000e+00 : f32
    %214 = vector.broadcast %cst_51 : f32 to vector<8x128xf32>
    %215 = arith.addf %214, %213 : vector<8x128xf32>
    %216 = arith.divf %214, %215 : vector<8x128xf32>
    %217 = vector.extract_strided_slice %199 {offsets = [0, 256], sizes = [8, 128], strides = [1, 1]} : vector<8x384xf32> to vector<8x128xf32>
    %218 = vector.extract_strided_slice %200 {offsets = [0, 256], sizes = [8, 128], strides = [1, 1]} : vector<8x384xf32> to vector<8x128xf32>
    %219 = arith.addf %218, %14 : vector<8x128xf32>
    %220 = arith.mulf %208, %219 : vector<8x128xf32>
    %221 = arith.addf %217, %220 : vector<8x128xf32>
    %222 = math.tanh %221 : vector<8x128xf32>
    %cst_52 = arith.constant 1.000000e+00 : f32
    %223 = vector.broadcast %cst_52 : f32 to vector<8x128xf32>
    %224 = arith.subf %223, %216 : vector<8x128xf32>
    %225 = arith.mulf %224, %222 : vector<8x128xf32>
    %226 = arith.mulf %216, %168 : vector<8x128xf32>
    %227 = arith.addf %225, %226 : vector<8x128xf32>
    %cst_53 = arith.constant dense<0.000000e+00> : vector<8x384xf32>
    %228 = tpu.matmul %227, %7, %cst_53 {dimension_numbers = #tpu.dot_dimension_numbers<[1], [0], [0], [1], [0, 0, 1, 1], [], []>} : vector<8x128xf32>, vector<128x384xf32>, vector<8x384xf32> -> vector<8x384xf32>
    %229 = arith.addf %228, %11 : vector<8x384xf32>
    %cst_54 = arith.constant dense<0.000000e+00> : vector<8x384xf32>
    %230 = tpu.matmul %198, %8, %cst_54 {dimension_numbers = #tpu.dot_dimension_numbers<[1], [0], [0], [1], [0, 0, 1, 1], [], []>} : vector<8x128xf32>, vector<128x384xf32>, vector<8x384xf32> -> vector<8x384xf32>
    %231 = vector.extract_strided_slice %229 {offsets = [0, 0], sizes = [8, 128], strides = [1, 1]} : vector<8x384xf32> to vector<8x128xf32>
    %232 = vector.extract_strided_slice %230 {offsets = [0, 0], sizes = [8, 128], strides = [1, 1]} : vector<8x384xf32> to vector<8x128xf32>
    %233 = arith.addf %231, %232 : vector<8x128xf32>
    %234 = arith.negf %233 : vector<8x128xf32>
    %235 = math.exp %234 : vector<8x128xf32>
    %cst_55 = arith.constant 1.000000e+00 : f32
    %236 = vector.broadcast %cst_55 : f32 to vector<8x128xf32>
    %237 = arith.addf %236, %235 : vector<8x128xf32>
    %238 = arith.divf %236, %237 : vector<8x128xf32>
    %239 = vector.extract_strided_slice %229 {offsets = [0, 128], sizes = [8, 128], strides = [1, 1]} : vector<8x384xf32> to vector<8x128xf32>
    %240 = vector.extract_strided_slice %230 {offsets = [0, 128], sizes = [8, 128], strides = [1, 1]} : vector<8x384xf32> to vector<8x128xf32>
    %241 = arith.addf %239, %240 : vector<8x128xf32>
    %242 = arith.negf %241 : vector<8x128xf32>
    %243 = math.exp %242 : vector<8x128xf32>
    %cst_56 = arith.constant 1.000000e+00 : f32
    %244 = vector.broadcast %cst_56 : f32 to vector<8x128xf32>
    %245 = arith.addf %244, %243 : vector<8x128xf32>
    %246 = arith.divf %244, %245 : vector<8x128xf32>
    %247 = vector.extract_strided_slice %229 {offsets = [0, 256], sizes = [8, 128], strides = [1, 1]} : vector<8x384xf32> to vector<8x128xf32>
    %248 = vector.extract_strided_slice %230 {offsets = [0, 256], sizes = [8, 128], strides = [1, 1]} : vector<8x384xf32> to vector<8x128xf32>
    %249 = arith.addf %248, %17 : vector<8x128xf32>
    %250 = arith.mulf %238, %249 : vector<8x128xf32>
    %251 = arith.addf %247, %250 : vector<8x128xf32>
    %252 = math.tanh %251 : vector<8x128xf32>
    %cst_57 = arith.constant 1.000000e+00 : f32
    %253 = vector.broadcast %cst_57 : f32 to vector<8x128xf32>
    %254 = arith.subf %253, %246 : vector<8x128xf32>
    %255 = arith.mulf %254, %252 : vector<8x128xf32>
    %256 = arith.mulf %246, %198 : vector<8x128xf32>
    %257 = arith.addf %255, %256 : vector<8x128xf32>
    %258 = vector.extract_strided_slice %5 {offsets = [32, 0], sizes = [8, 384], strides = [1, 1]} : vector<64x384xf32> to vector<8x384xf32>
    %cst_58 = arith.constant dense<0.000000e+00> : vector<8x384xf32>
    %259 = tpu.matmul %227, %6, %cst_58 {dimension_numbers = #tpu.dot_dimension_numbers<[1], [0], [0], [1], [0, 0, 1, 1], [], []>} : vector<8x128xf32>, vector<128x384xf32>, vector<8x384xf32> -> vector<8x384xf32>
    %260 = vector.extract_strided_slice %258 {offsets = [0, 0], sizes = [8, 128], strides = [1, 1]} : vector<8x384xf32> to vector<8x128xf32>
    %261 = vector.extract_strided_slice %259 {offsets = [0, 0], sizes = [8, 128], strides = [1, 1]} : vector<8x384xf32> to vector<8x128xf32>
    %262 = arith.addf %260, %261 : vector<8x128xf32>
    %263 = arith.negf %262 : vector<8x128xf32>
    %264 = math.exp %263 : vector<8x128xf32>
    %cst_59 = arith.constant 1.000000e+00 : f32
    %265 = vector.broadcast %cst_59 : f32 to vector<8x128xf32>
    %266 = arith.addf %265, %264 : vector<8x128xf32>
    %267 = arith.divf %265, %266 : vector<8x128xf32>
    %268 = vector.extract_strided_slice %258 {offsets = [0, 128], sizes = [8, 128], strides = [1, 1]} : vector<8x384xf32> to vector<8x128xf32>
    %269 = vector.extract_strided_slice %259 {offsets = [0, 128], sizes = [8, 128], strides = [1, 1]} : vector<8x384xf32> to vector<8x128xf32>
    %270 = arith.addf %268, %269 : vector<8x128xf32>
    %271 = arith.negf %270 : vector<8x128xf32>
    %272 = math.exp %271 : vector<8x128xf32>
    %cst_60 = arith.constant 1.000000e+00 : f32
    %273 = vector.broadcast %cst_60 : f32 to vector<8x128xf32>
    %274 = arith.addf %273, %272 : vector<8x128xf32>
    %275 = arith.divf %273, %274 : vector<8x128xf32>
    %276 = vector.extract_strided_slice %258 {offsets = [0, 256], sizes = [8, 128], strides = [1, 1]} : vector<8x384xf32> to vector<8x128xf32>
    %277 = vector.extract_strided_slice %259 {offsets = [0, 256], sizes = [8, 128], strides = [1, 1]} : vector<8x384xf32> to vector<8x128xf32>
    %278 = arith.addf %277, %14 : vector<8x128xf32>
    %279 = arith.mulf %267, %278 : vector<8x128xf32>
    %280 = arith.addf %276, %279 : vector<8x128xf32>
    %281 = math.tanh %280 : vector<8x128xf32>
    %cst_61 = arith.constant 1.000000e+00 : f32
    %282 = vector.broadcast %cst_61 : f32 to vector<8x128xf32>
    %283 = arith.subf %282, %275 : vector<8x128xf32>
    %284 = arith.mulf %283, %281 : vector<8x128xf32>
    %285 = arith.mulf %275, %227 : vector<8x128xf32>
    %286 = arith.addf %284, %285 : vector<8x128xf32>
    %cst_62 = arith.constant dense<0.000000e+00> : vector<8x384xf32>
    %287 = tpu.matmul %286, %7, %cst_62 {dimension_numbers = #tpu.dot_dimension_numbers<[1], [0], [0], [1], [0, 0, 1, 1], [], []>} : vector<8x128xf32>, vector<128x384xf32>, vector<8x384xf32> -> vector<8x384xf32>
    %288 = arith.addf %287, %11 : vector<8x384xf32>
    %cst_63 = arith.constant dense<0.000000e+00> : vector<8x384xf32>
    %289 = tpu.matmul %257, %8, %cst_63 {dimension_numbers = #tpu.dot_dimension_numbers<[1], [0], [0], [1], [0, 0, 1, 1], [], []>} : vector<8x128xf32>, vector<128x384xf32>, vector<8x384xf32> -> vector<8x384xf32>
    %290 = vector.extract_strided_slice %288 {offsets = [0, 0], sizes = [8, 128], strides = [1, 1]} : vector<8x384xf32> to vector<8x128xf32>
    %291 = vector.extract_strided_slice %289 {offsets = [0, 0], sizes = [8, 128], strides = [1, 1]} : vector<8x384xf32> to vector<8x128xf32>
    %292 = arith.addf %290, %291 : vector<8x128xf32>
    %293 = arith.negf %292 : vector<8x128xf32>
    %294 = math.exp %293 : vector<8x128xf32>
    %cst_64 = arith.constant 1.000000e+00 : f32
    %295 = vector.broadcast %cst_64 : f32 to vector<8x128xf32>
    %296 = arith.addf %295, %294 : vector<8x128xf32>
    %297 = arith.divf %295, %296 : vector<8x128xf32>
    %298 = vector.extract_strided_slice %288 {offsets = [0, 128], sizes = [8, 128], strides = [1, 1]} : vector<8x384xf32> to vector<8x128xf32>
    %299 = vector.extract_strided_slice %289 {offsets = [0, 128], sizes = [8, 128], strides = [1, 1]} : vector<8x384xf32> to vector<8x128xf32>
    %300 = arith.addf %298, %299 : vector<8x128xf32>
    %301 = arith.negf %300 : vector<8x128xf32>
    %302 = math.exp %301 : vector<8x128xf32>
    %cst_65 = arith.constant 1.000000e+00 : f32
    %303 = vector.broadcast %cst_65 : f32 to vector<8x128xf32>
    %304 = arith.addf %303, %302 : vector<8x128xf32>
    %305 = arith.divf %303, %304 : vector<8x128xf32>
    %306 = vector.extract_strided_slice %288 {offsets = [0, 256], sizes = [8, 128], strides = [1, 1]} : vector<8x384xf32> to vector<8x128xf32>
    %307 = vector.extract_strided_slice %289 {offsets = [0, 256], sizes = [8, 128], strides = [1, 1]} : vector<8x384xf32> to vector<8x128xf32>
    %308 = arith.addf %307, %17 : vector<8x128xf32>
    %309 = arith.mulf %297, %308 : vector<8x128xf32>
    %310 = arith.addf %306, %309 : vector<8x128xf32>
    %311 = math.tanh %310 : vector<8x128xf32>
    %cst_66 = arith.constant 1.000000e+00 : f32
    %312 = vector.broadcast %cst_66 : f32 to vector<8x128xf32>
    %313 = arith.subf %312, %305 : vector<8x128xf32>
    %314 = arith.mulf %313, %311 : vector<8x128xf32>
    %315 = arith.mulf %305, %257 : vector<8x128xf32>
    %316 = arith.addf %314, %315 : vector<8x128xf32>
    %317 = vector.extract_strided_slice %5 {offsets = [40, 0], sizes = [8, 384], strides = [1, 1]} : vector<64x384xf32> to vector<8x384xf32>
    %cst_67 = arith.constant dense<0.000000e+00> : vector<8x384xf32>
    %318 = tpu.matmul %286, %6, %cst_67 {dimension_numbers = #tpu.dot_dimension_numbers<[1], [0], [0], [1], [0, 0, 1, 1], [], []>} : vector<8x128xf32>, vector<128x384xf32>, vector<8x384xf32> -> vector<8x384xf32>
    %319 = vector.extract_strided_slice %317 {offsets = [0, 0], sizes = [8, 128], strides = [1, 1]} : vector<8x384xf32> to vector<8x128xf32>
    %320 = vector.extract_strided_slice %318 {offsets = [0, 0], sizes = [8, 128], strides = [1, 1]} : vector<8x384xf32> to vector<8x128xf32>
    %321 = arith.addf %319, %320 : vector<8x128xf32>
    %322 = arith.negf %321 : vector<8x128xf32>
    %323 = math.exp %322 : vector<8x128xf32>
    %cst_68 = arith.constant 1.000000e+00 : f32
    %324 = vector.broadcast %cst_68 : f32 to vector<8x128xf32>
    %325 = arith.addf %324, %323 : vector<8x128xf32>
    %326 = arith.divf %324, %325 : vector<8x128xf32>
    %327 = vector.extract_strided_slice %317 {offsets = [0, 128], sizes = [8, 128], strides = [1, 1]} : vector<8x384xf32> to vector<8x128xf32>
    %328 = vector.extract_strided_slice %318 {offsets = [0, 128], sizes = [8, 128], strides = [1, 1]} : vector<8x384xf32> to vector<8x128xf32>
    %329 = arith.addf %327, %328 : vector<8x128xf32>
    %330 = arith.negf %329 : vector<8x128xf32>
    %331 = math.exp %330 : vector<8x128xf32>
    %cst_69 = arith.constant 1.000000e+00 : f32
    %332 = vector.broadcast %cst_69 : f32 to vector<8x128xf32>
    %333 = arith.addf %332, %331 : vector<8x128xf32>
    %334 = arith.divf %332, %333 : vector<8x128xf32>
    %335 = vector.extract_strided_slice %317 {offsets = [0, 256], sizes = [8, 128], strides = [1, 1]} : vector<8x384xf32> to vector<8x128xf32>
    %336 = vector.extract_strided_slice %318 {offsets = [0, 256], sizes = [8, 128], strides = [1, 1]} : vector<8x384xf32> to vector<8x128xf32>
    %337 = arith.addf %336, %14 : vector<8x128xf32>
    %338 = arith.mulf %326, %337 : vector<8x128xf32>
    %339 = arith.addf %335, %338 : vector<8x128xf32>
    %340 = math.tanh %339 : vector<8x128xf32>
    %cst_70 = arith.constant 1.000000e+00 : f32
    %341 = vector.broadcast %cst_70 : f32 to vector<8x128xf32>
    %342 = arith.subf %341, %334 : vector<8x128xf32>
    %343 = arith.mulf %342, %340 : vector<8x128xf32>
    %344 = arith.mulf %334, %286 : vector<8x128xf32>
    %345 = arith.addf %343, %344 : vector<8x128xf32>
    %cst_71 = arith.constant dense<0.000000e+00> : vector<8x384xf32>
    %346 = tpu.matmul %345, %7, %cst_71 {dimension_numbers = #tpu.dot_dimension_numbers<[1], [0], [0], [1], [0, 0, 1, 1], [], []>} : vector<8x128xf32>, vector<128x384xf32>, vector<8x384xf32> -> vector<8x384xf32>
    %347 = arith.addf %346, %11 : vector<8x384xf32>
    %cst_72 = arith.constant dense<0.000000e+00> : vector<8x384xf32>
    %348 = tpu.matmul %316, %8, %cst_72 {dimension_numbers = #tpu.dot_dimension_numbers<[1], [0], [0], [1], [0, 0, 1, 1], [], []>} : vector<8x128xf32>, vector<128x384xf32>, vector<8x384xf32> -> vector<8x384xf32>
    %349 = vector.extract_strided_slice %347 {offsets = [0, 0], sizes = [8, 128], strides = [1, 1]} : vector<8x384xf32> to vector<8x128xf32>
    %350 = vector.extract_strided_slice %348 {offsets = [0, 0], sizes = [8, 128], strides = [1, 1]} : vector<8x384xf32> to vector<8x128xf32>
    %351 = arith.addf %349, %350 : vector<8x128xf32>
    %352 = arith.negf %351 : vector<8x128xf32>
    %353 = math.exp %352 : vector<8x128xf32>
    %cst_73 = arith.constant 1.000000e+00 : f32
    %354 = vector.broadcast %cst_73 : f32 to vector<8x128xf32>
    %355 = arith.addf %354, %353 : vector<8x128xf32>
    %356 = arith.divf %354, %355 : vector<8x128xf32>
    %357 = vector.extract_strided_slice %347 {offsets = [0, 128], sizes = [8, 128], strides = [1, 1]} : vector<8x384xf32> to vector<8x128xf32>
    %358 = vector.extract_strided_slice %348 {offsets = [0, 128], sizes = [8, 128], strides = [1, 1]} : vector<8x384xf32> to vector<8x128xf32>
    %359 = arith.addf %357, %358 : vector<8x128xf32>
    %360 = arith.negf %359 : vector<8x128xf32>
    %361 = math.exp %360 : vector<8x128xf32>
    %cst_74 = arith.constant 1.000000e+00 : f32
    %362 = vector.broadcast %cst_74 : f32 to vector<8x128xf32>
    %363 = arith.addf %362, %361 : vector<8x128xf32>
    %364 = arith.divf %362, %363 : vector<8x128xf32>
    %365 = vector.extract_strided_slice %347 {offsets = [0, 256], sizes = [8, 128], strides = [1, 1]} : vector<8x384xf32> to vector<8x128xf32>
    %366 = vector.extract_strided_slice %348 {offsets = [0, 256], sizes = [8, 128], strides = [1, 1]} : vector<8x384xf32> to vector<8x128xf32>
    %367 = arith.addf %366, %17 : vector<8x128xf32>
    %368 = arith.mulf %356, %367 : vector<8x128xf32>
    %369 = arith.addf %365, %368 : vector<8x128xf32>
    %370 = math.tanh %369 : vector<8x128xf32>
    %cst_75 = arith.constant 1.000000e+00 : f32
    %371 = vector.broadcast %cst_75 : f32 to vector<8x128xf32>
    %372 = arith.subf %371, %364 : vector<8x128xf32>
    %373 = arith.mulf %372, %370 : vector<8x128xf32>
    %374 = arith.mulf %364, %316 : vector<8x128xf32>
    %375 = arith.addf %373, %374 : vector<8x128xf32>
    %376 = vector.extract_strided_slice %5 {offsets = [48, 0], sizes = [8, 384], strides = [1, 1]} : vector<64x384xf32> to vector<8x384xf32>
    %cst_76 = arith.constant dense<0.000000e+00> : vector<8x384xf32>
    %377 = tpu.matmul %345, %6, %cst_76 {dimension_numbers = #tpu.dot_dimension_numbers<[1], [0], [0], [1], [0, 0, 1, 1], [], []>} : vector<8x128xf32>, vector<128x384xf32>, vector<8x384xf32> -> vector<8x384xf32>
    %378 = vector.extract_strided_slice %376 {offsets = [0, 0], sizes = [8, 128], strides = [1, 1]} : vector<8x384xf32> to vector<8x128xf32>
    %379 = vector.extract_strided_slice %377 {offsets = [0, 0], sizes = [8, 128], strides = [1, 1]} : vector<8x384xf32> to vector<8x128xf32>
    %380 = arith.addf %378, %379 : vector<8x128xf32>
    %381 = arith.negf %380 : vector<8x128xf32>
    %382 = math.exp %381 : vector<8x128xf32>
    %cst_77 = arith.constant 1.000000e+00 : f32
    %383 = vector.broadcast %cst_77 : f32 to vector<8x128xf32>
    %384 = arith.addf %383, %382 : vector<8x128xf32>
    %385 = arith.divf %383, %384 : vector<8x128xf32>
    %386 = vector.extract_strided_slice %376 {offsets = [0, 128], sizes = [8, 128], strides = [1, 1]} : vector<8x384xf32> to vector<8x128xf32>
    %387 = vector.extract_strided_slice %377 {offsets = [0, 128], sizes = [8, 128], strides = [1, 1]} : vector<8x384xf32> to vector<8x128xf32>
    %388 = arith.addf %386, %387 : vector<8x128xf32>
    %389 = arith.negf %388 : vector<8x128xf32>
    %390 = math.exp %389 : vector<8x128xf32>
    %cst_78 = arith.constant 1.000000e+00 : f32
    %391 = vector.broadcast %cst_78 : f32 to vector<8x128xf32>
    %392 = arith.addf %391, %390 : vector<8x128xf32>
    %393 = arith.divf %391, %392 : vector<8x128xf32>
    %394 = vector.extract_strided_slice %376 {offsets = [0, 256], sizes = [8, 128], strides = [1, 1]} : vector<8x384xf32> to vector<8x128xf32>
    %395 = vector.extract_strided_slice %377 {offsets = [0, 256], sizes = [8, 128], strides = [1, 1]} : vector<8x384xf32> to vector<8x128xf32>
    %396 = arith.addf %395, %14 : vector<8x128xf32>
    %397 = arith.mulf %385, %396 : vector<8x128xf32>
    %398 = arith.addf %394, %397 : vector<8x128xf32>
    %399 = math.tanh %398 : vector<8x128xf32>
    %cst_79 = arith.constant 1.000000e+00 : f32
    %400 = vector.broadcast %cst_79 : f32 to vector<8x128xf32>
    %401 = arith.subf %400, %393 : vector<8x128xf32>
    %402 = arith.mulf %401, %399 : vector<8x128xf32>
    %403 = arith.mulf %393, %345 : vector<8x128xf32>
    %404 = arith.addf %402, %403 : vector<8x128xf32>
    %cst_80 = arith.constant dense<0.000000e+00> : vector<8x384xf32>
    %405 = tpu.matmul %404, %7, %cst_80 {dimension_numbers = #tpu.dot_dimension_numbers<[1], [0], [0], [1], [0, 0, 1, 1], [], []>} : vector<8x128xf32>, vector<128x384xf32>, vector<8x384xf32> -> vector<8x384xf32>
    %406 = arith.addf %405, %11 : vector<8x384xf32>
    %cst_81 = arith.constant dense<0.000000e+00> : vector<8x384xf32>
    %407 = tpu.matmul %375, %8, %cst_81 {dimension_numbers = #tpu.dot_dimension_numbers<[1], [0], [0], [1], [0, 0, 1, 1], [], []>} : vector<8x128xf32>, vector<128x384xf32>, vector<8x384xf32> -> vector<8x384xf32>
    %408 = vector.extract_strided_slice %406 {offsets = [0, 0], sizes = [8, 128], strides = [1, 1]} : vector<8x384xf32> to vector<8x128xf32>
    %409 = vector.extract_strided_slice %407 {offsets = [0, 0], sizes = [8, 128], strides = [1, 1]} : vector<8x384xf32> to vector<8x128xf32>
    %410 = arith.addf %408, %409 : vector<8x128xf32>
    %411 = arith.negf %410 : vector<8x128xf32>
    %412 = math.exp %411 : vector<8x128xf32>
    %cst_82 = arith.constant 1.000000e+00 : f32
    %413 = vector.broadcast %cst_82 : f32 to vector<8x128xf32>
    %414 = arith.addf %413, %412 : vector<8x128xf32>
    %415 = arith.divf %413, %414 : vector<8x128xf32>
    %416 = vector.extract_strided_slice %406 {offsets = [0, 128], sizes = [8, 128], strides = [1, 1]} : vector<8x384xf32> to vector<8x128xf32>
    %417 = vector.extract_strided_slice %407 {offsets = [0, 128], sizes = [8, 128], strides = [1, 1]} : vector<8x384xf32> to vector<8x128xf32>
    %418 = arith.addf %416, %417 : vector<8x128xf32>
    %419 = arith.negf %418 : vector<8x128xf32>
    %420 = math.exp %419 : vector<8x128xf32>
    %cst_83 = arith.constant 1.000000e+00 : f32
    %421 = vector.broadcast %cst_83 : f32 to vector<8x128xf32>
    %422 = arith.addf %421, %420 : vector<8x128xf32>
    %423 = arith.divf %421, %422 : vector<8x128xf32>
    %424 = vector.extract_strided_slice %406 {offsets = [0, 256], sizes = [8, 128], strides = [1, 1]} : vector<8x384xf32> to vector<8x128xf32>
    %425 = vector.extract_strided_slice %407 {offsets = [0, 256], sizes = [8, 128], strides = [1, 1]} : vector<8x384xf32> to vector<8x128xf32>
    %426 = arith.addf %425, %17 : vector<8x128xf32>
    %427 = arith.mulf %415, %426 : vector<8x128xf32>
    %428 = arith.addf %424, %427 : vector<8x128xf32>
    %429 = math.tanh %428 : vector<8x128xf32>
    %cst_84 = arith.constant 1.000000e+00 : f32
    %430 = vector.broadcast %cst_84 : f32 to vector<8x128xf32>
    %431 = arith.subf %430, %423 : vector<8x128xf32>
    %432 = arith.mulf %431, %429 : vector<8x128xf32>
    %433 = arith.mulf %423, %375 : vector<8x128xf32>
    %434 = arith.addf %432, %433 : vector<8x128xf32>
    %435 = vector.extract_strided_slice %5 {offsets = [56, 0], sizes = [8, 384], strides = [1, 1]} : vector<64x384xf32> to vector<8x384xf32>
    %cst_85 = arith.constant dense<0.000000e+00> : vector<8x384xf32>
    %436 = tpu.matmul %404, %6, %cst_85 {dimension_numbers = #tpu.dot_dimension_numbers<[1], [0], [0], [1], [0, 0, 1, 1], [], []>} : vector<8x128xf32>, vector<128x384xf32>, vector<8x384xf32> -> vector<8x384xf32>
    %437 = vector.extract_strided_slice %435 {offsets = [0, 0], sizes = [8, 128], strides = [1, 1]} : vector<8x384xf32> to vector<8x128xf32>
    %438 = vector.extract_strided_slice %436 {offsets = [0, 0], sizes = [8, 128], strides = [1, 1]} : vector<8x384xf32> to vector<8x128xf32>
    %439 = arith.addf %437, %438 : vector<8x128xf32>
    %440 = arith.negf %439 : vector<8x128xf32>
    %441 = math.exp %440 : vector<8x128xf32>
    %cst_86 = arith.constant 1.000000e+00 : f32
    %442 = vector.broadcast %cst_86 : f32 to vector<8x128xf32>
    %443 = arith.addf %442, %441 : vector<8x128xf32>
    %444 = arith.divf %442, %443 : vector<8x128xf32>
    %445 = vector.extract_strided_slice %435 {offsets = [0, 128], sizes = [8, 128], strides = [1, 1]} : vector<8x384xf32> to vector<8x128xf32>
    %446 = vector.extract_strided_slice %436 {offsets = [0, 128], sizes = [8, 128], strides = [1, 1]} : vector<8x384xf32> to vector<8x128xf32>
    %447 = arith.addf %445, %446 : vector<8x128xf32>
    %448 = arith.negf %447 : vector<8x128xf32>
    %449 = math.exp %448 : vector<8x128xf32>
    %cst_87 = arith.constant 1.000000e+00 : f32
    %450 = vector.broadcast %cst_87 : f32 to vector<8x128xf32>
    %451 = arith.addf %450, %449 : vector<8x128xf32>
    %452 = arith.divf %450, %451 : vector<8x128xf32>
    %453 = vector.extract_strided_slice %435 {offsets = [0, 256], sizes = [8, 128], strides = [1, 1]} : vector<8x384xf32> to vector<8x128xf32>
    %454 = vector.extract_strided_slice %436 {offsets = [0, 256], sizes = [8, 128], strides = [1, 1]} : vector<8x384xf32> to vector<8x128xf32>
    %455 = arith.addf %454, %14 : vector<8x128xf32>
    %456 = arith.mulf %444, %455 : vector<8x128xf32>
    %457 = arith.addf %453, %456 : vector<8x128xf32>
    %458 = math.tanh %457 : vector<8x128xf32>
    %cst_88 = arith.constant 1.000000e+00 : f32
    %459 = vector.broadcast %cst_88 : f32 to vector<8x128xf32>
    %460 = arith.subf %459, %452 : vector<8x128xf32>
    %461 = arith.mulf %460, %458 : vector<8x128xf32>
    %462 = arith.mulf %452, %404 : vector<8x128xf32>
    %463 = arith.addf %461, %462 : vector<8x128xf32>
    %cst_89 = arith.constant dense<0.000000e+00> : vector<8x384xf32>
    %464 = tpu.matmul %463, %7, %cst_89 {dimension_numbers = #tpu.dot_dimension_numbers<[1], [0], [0], [1], [0, 0, 1, 1], [], []>} : vector<8x128xf32>, vector<128x384xf32>, vector<8x384xf32> -> vector<8x384xf32>
    %465 = arith.addf %464, %11 : vector<8x384xf32>
    %cst_90 = arith.constant dense<0.000000e+00> : vector<8x384xf32>
    %466 = tpu.matmul %434, %8, %cst_90 {dimension_numbers = #tpu.dot_dimension_numbers<[1], [0], [0], [1], [0, 0, 1, 1], [], []>} : vector<8x128xf32>, vector<128x384xf32>, vector<8x384xf32> -> vector<8x384xf32>
    %467 = vector.extract_strided_slice %465 {offsets = [0, 0], sizes = [8, 128], strides = [1, 1]} : vector<8x384xf32> to vector<8x128xf32>
    %468 = vector.extract_strided_slice %466 {offsets = [0, 0], sizes = [8, 128], strides = [1, 1]} : vector<8x384xf32> to vector<8x128xf32>
    %469 = arith.addf %467, %468 : vector<8x128xf32>
    %470 = arith.negf %469 : vector<8x128xf32>
    %471 = math.exp %470 : vector<8x128xf32>
    %cst_91 = arith.constant 1.000000e+00 : f32
    %472 = vector.broadcast %cst_91 : f32 to vector<8x128xf32>
    %473 = arith.addf %472, %471 : vector<8x128xf32>
    %474 = arith.divf %472, %473 : vector<8x128xf32>
    %475 = vector.extract_strided_slice %465 {offsets = [0, 128], sizes = [8, 128], strides = [1, 1]} : vector<8x384xf32> to vector<8x128xf32>
    %476 = vector.extract_strided_slice %466 {offsets = [0, 128], sizes = [8, 128], strides = [1, 1]} : vector<8x384xf32> to vector<8x128xf32>
    %477 = arith.addf %475, %476 : vector<8x128xf32>
    %478 = arith.negf %477 : vector<8x128xf32>
    %479 = math.exp %478 : vector<8x128xf32>
    %cst_92 = arith.constant 1.000000e+00 : f32
    %480 = vector.broadcast %cst_92 : f32 to vector<8x128xf32>
    %481 = arith.addf %480, %479 : vector<8x128xf32>
    %482 = arith.divf %480, %481 : vector<8x128xf32>
    %483 = vector.extract_strided_slice %465 {offsets = [0, 256], sizes = [8, 128], strides = [1, 1]} : vector<8x384xf32> to vector<8x128xf32>
    %484 = vector.extract_strided_slice %466 {offsets = [0, 256], sizes = [8, 128], strides = [1, 1]} : vector<8x384xf32> to vector<8x128xf32>
    %485 = arith.addf %484, %17 : vector<8x128xf32>
    %486 = arith.mulf %474, %485 : vector<8x128xf32>
    %487 = arith.addf %483, %486 : vector<8x128xf32>
    %488 = math.tanh %487 : vector<8x128xf32>
    %cst_93 = arith.constant 1.000000e+00 : f32
    %489 = vector.broadcast %cst_93 : f32 to vector<8x128xf32>
    %490 = arith.subf %489, %482 : vector<8x128xf32>
    %491 = arith.mulf %490, %488 : vector<8x128xf32>
    %492 = arith.mulf %482, %434 : vector<8x128xf32>
    %493 = arith.addf %491, %492 : vector<8x128xf32>
    %c0_94 = arith.constant 0 : index
    %c0_95 = arith.constant 0 : index
    %494 = vector.load %arg10[%c0_94, %c0_95] : memref<128x32xf32, #tpu.memory_space<vmem>>, vector<128x32xf32>
    %cst_96 = arith.constant dense<0.000000e+00> : vector<8x32xf32>
    %495 = tpu.matmul %493, %494, %cst_96 {dimension_numbers = #tpu.dot_dimension_numbers<[1], [0], [0], [1], [0, 0, 1, 1], [], []>} : vector<8x128xf32>, vector<128x32xf32>, vector<8x32xf32> -> vector<8x32xf32>
    %c0_97 = arith.constant 0 : index
    %c0_98 = arith.constant 0 : index
    %496 = vector.load %arg11[%c0_97, %c0_98] : memref<1x32xf32, #tpu.memory_space<vmem>>, vector<1x32xf32>
    %497 = vector.broadcast %496 : vector<1x32xf32> to vector<8x32xf32>
    %498 = arith.addf %495, %497 : vector<8x32xf32>
    %cst_99 = arith.constant 0.000000e+00 : f32
    %499 = vector.broadcast %cst_99 : f32 to vector<8x32xf32>
    %500 = arith.maximumf %498, %499 : vector<8x32xf32>
    %c0_100 = arith.constant 0 : index
    %c0_101 = arith.constant 0 : index
    %501 = vector.load %arg12[%c0_100, %c0_101] : memref<32x16xf32, #tpu.memory_space<vmem>>, vector<32x16xf32>
    %cst_102 = arith.constant dense<0.000000e+00> : vector<8x16xf32>
    %502 = tpu.matmul %500, %501, %cst_102 {dimension_numbers = #tpu.dot_dimension_numbers<[1], [0], [0], [1], [0, 0, 1, 1], [], []>} : vector<8x32xf32>, vector<32x16xf32>, vector<8x16xf32> -> vector<8x16xf32>
    %c0_103 = arith.constant 0 : index
    %c0_104 = arith.constant 0 : index
    %503 = vector.load %arg13[%c0_103, %c0_104] : memref<1x16xf32, #tpu.memory_space<vmem>>, vector<1x16xf32>
    %504 = vector.broadcast %503 : vector<1x16xf32> to vector<8x16xf32>
    %505 = arith.addf %502, %504 : vector<8x16xf32>
    %cst_105 = arith.constant 0.000000e+00 : f32
    %506 = vector.broadcast %cst_105 : f32 to vector<8x16xf32>
    %507 = arith.maximumf %505, %506 : vector<8x16xf32>
    %c0_106 = arith.constant 0 : index
    %c0_107 = arith.constant 0 : index
    %508 = vector.load %arg14[%c0_106, %c0_107] : memref<16x1xf32, #tpu.memory_space<vmem>>, vector<16x1xf32>
    %cst_108 = arith.constant dense<0.000000e+00> : vector<8x1xf32>
    %509 = tpu.matmul %507, %508, %cst_108 {dimension_numbers = #tpu.dot_dimension_numbers<[1], [0], [0], [1], [0, 0, 1, 1], [], []>} : vector<8x16xf32>, vector<16x1xf32>, vector<8x1xf32> -> vector<8x1xf32>
    %c0_109 = arith.constant 0 : index
    %c0_110 = arith.constant 0 : index
    %510 = vector.load %arg15[%c0_109, %c0_110] : memref<1x1xf32, #tpu.memory_space<vmem>>, vector<1x1xf32>
    %511 = vector.broadcast %510 : vector<1x1xf32> to vector<8x1xf32>
    %512 = arith.addf %509, %511 : vector<8x1xf32>
    %c0_111 = arith.constant 0 : index
    %c0_112 = arith.constant 0 : index
    %513 = vector.load %arg16[%c0_111, %c0_112] : memref<8x1xf32, #tpu.memory_space<vmem>>, vector<8x1xf32>
    tpu.vector_store %arg16[%c0_111, %c0_112], %512 {strides = array<i32>} : memref<8x1xf32, #tpu.memory_space<vmem>>, vector<8x1xf32>,
    return
  }
}

</mosaic_0001>

<llo_original>
// kernel: tpu_custom_call.1
$region0: #{tpu_custom_call.1}
  #allocation0 [shape = 'u32[]', space=smem, size = 0x4, offset = 0x4, fixed_abs, tag = 'smem constant byte address 0x4 - core index']
  #allocation1 [shape = 'u32[144,128]{1,0:T(1,128)}', space=vmem, size = 0x12000, scoped, tag = 'internal scratch']
  #allocation2 [shape = 'f32[1,1]{1,0:T(1,128)S(1)}', space=vmem, size = 0x200, scoped, tag = 'scoped memory for tpu_custom_call.1']
  %s0 = inlined_call_operand.vmem [shape: f32[64,16], index: 0, kind: input, shape index: {}]
  %s1 = inlined_call_operand.vmem [shape: f32[2,8,128], index: 1, kind: input, shape index: {}]
  %s2 = inlined_call_operand.vmem [shape: f32[16,384], index: 2, kind: input, shape index: {}]
  %s3 = inlined_call_operand.hbm [shape: f32[128,384], index: 3, kind: input, shape index: {}]
  %s4 = inlined_call_operand.vmem [shape: f32[1,384], index: 4, kind: input, shape index: {}]
  %s5 = inlined_call_operand.vmem [shape: f32[1,128], index: 5, kind: input, shape index: {}]
  %s6 = inlined_call_operand.hbm [shape: f32[128,384], index: 6, kind: input, shape index: {}]
  %s7 = inlined_call_operand.hbm [shape: f32[128,384], index: 7, kind: input, shape index: {}]
  %s8 = inlined_call_operand.vmem [shape: f32[1,384], index: 8, kind: input, shape index: {}]
  %s9 = inlined_call_operand.vmem [shape: f32[1,128], index: 9, kind: input, shape index: {}]
  %s10 = inlined_call_operand.vmem [shape: f32[128,32], index: 10, kind: input, shape index: {}]
  %s11 = inlined_call_operand.vmem [shape: f32[1,32], index: 11, kind: input, shape index: {}]
  %s12 = inlined_call_operand.vmem [shape: f32[32,16], index: 12, kind: input, shape index: {}]
  %s13 = inlined_call_operand.vmem [shape: f32[1,16], index: 13, kind: input, shape index: {}]
  %s14 = inlined_call_operand.vmem [shape: f32[16,1], index: 14, kind: input, shape index: {}]
  %s15 = inlined_call_operand.<no memory space> [shape: f32[1,1], index: 15, kind: input, shape index: {}]
  %s16 = inlined_call_operand.vmem [shape: f32[8,1], index: 16, kind: output, shape index: {}]
  %s17 = sld [smem:[#allocation0]]
  $region86: #{tpu_custom_call.1} parent=0
    _
  %s19 = ssub.s32 1, %s17
  %s20 = scalar_select 0, %s19, %s17
  %v21 = vstv %s15
  %22 = vst [vmem:[#allocation2] sm:$0x1] %v21
  $region1: #{tpu_custom_call.1} parent=0
    #allocation3 [shape = 'u8[196608]{0}', space=vmem, size = 0x30000, scoped, tag = 'input window, operand 3, single buffered']
    #allocation4 [shape = 's32[1]{0}', space=sflag, size = 0x4, scoped, tag = 'scoped memory for tpu_custom_call.1']
    #allocation5 [shape = 'u8[196608]{0}', space=vmem, size = 0x30000, scoped, tag = 'input window, operand 6, single buffered']
    #allocation6 [shape = 's32[1]{0}', space=sflag, size = 0x4, scoped, tag = 'scoped memory for tpu_custom_call.1']
    #allocation7 [shape = 'u8[196608]{0}', space=vmem, size = 0x30000, scoped, tag = 'input window, operand 7, single buffered']
    %23 = vsyncpa [#allocation4], 0
    %24 = vsyncpa [#allocation6], 0
    // Predicated region
    $region2: #{tpu_custom_call.1} parent=1 // pred_check
      _
    $region3: #{tpu_custom_call.1} parent=1 // pred_check_branch
      %26 = sbr.rel (0) target = $region5
    $region4: #{tpu_custom_call.1} parent=1 // pred_region
      _
    $region5: #{tpu_custom_call.1} parent=1 // pred_fallthru
      _
    // Predicated region
    $region6: #{tpu_custom_call.1} parent=1 // pred_check
      _
    $region7: #{tpu_custom_call.1} parent=1 // pred_check_branch
      %28 = sbr.rel (0) target = $region9
    $region8: #{tpu_custom_call.1} parent=1 // pred_region
      _
    $region9: #{tpu_custom_call.1} parent=1 // pred_fallthru
      _
    // Predicated region
    $region10: #{tpu_custom_call.1} parent=1 // pred_check
      _
    $region11: #{tpu_custom_call.1} parent=1 // pred_check_branch
      %30 = sbr.rel (0) target = $region13
    $region12: #{tpu_custom_call.1} parent=1 // pred_region
      _
    $region13: #{tpu_custom_call.1} parent=1 // pred_fallthru
      _
    // Predicated region
    $region14: #{tpu_custom_call.1} parent=1 // pred_check
      _
    $region15: #{tpu_custom_call.1} parent=1 // pred_check_branch
      %32 = sbr.rel (0) target = $region17
    $region16: #{tpu_custom_call.1} parent=1 // pred_region
      %s34 = ssub.s32 6144, 6144
      %35 = vsyncadd [#allocation4], %s34
      %s36 = sshll.u32 [#allocation3], 4
      %s37 = int_to_ptr.vmem [resolvable:$true] %s36
      %42 = dma.hbm_to_vmem [thread:$0]  %s3, 6144, %s37, [#allocation4], 384, 384, 24
    $region17: #{tpu_custom_call.1} parent=1 // pred_fallthru
      _
    // Predicated region
    $region18: #{tpu_custom_call.1} parent=1 // pred_check
      _
    $region19: #{tpu_custom_call.1} parent=1 // pred_check_branch
      %44 = sbr.rel (0) target = $region21
    $region20: #{tpu_custom_call.1} parent=1 // pred_region
      _
    $region21: #{tpu_custom_call.1} parent=1 // pred_fallthru
      _
    // Predicated region
    $region22: #{tpu_custom_call.1} parent=1 // pred_check
      _
    $region23: #{tpu_custom_call.1} parent=1 // pred_check_branch
      %46 = sbr.rel (0) target = $region25
    $region24: #{tpu_custom_call.1} parent=1 // pred_region
      _
    $region25: #{tpu_custom_call.1} parent=1 // pred_fallthru
      _
    // Predicated region
    $region26: #{tpu_custom_call.1} parent=1 // pred_check
      _
    $region27: #{tpu_custom_call.1} parent=1 // pred_check_branch
      %48 = sbr.rel (0) target = $region29
    $region28: #{tpu_custom_call.1} parent=1 // pred_region
      %s50 = ssub.s32 6144, 6144
      %51 = vsyncadd [#allocation6], %s50
      %s52 = sshll.u32 [#allocation5], 4
      %s53 = int_to_ptr.vmem [resolvable:$true] %s52
      %58 = dma.hbm_to_vmem [thread:$0]  %s6, 6144, %s53, [#allocation6], 384, 384, 24
    $region29: #{tpu_custom_call.1} parent=1 // pred_fallthru
      _
    // Predicated region
    $region30: #{tpu_custom_call.1} parent=1 // pred_check
      _
    $region31: #{tpu_custom_call.1} parent=1 // pred_check_branch
      %60 = sbr.rel (0) target = $region33
    $region32: #{tpu_custom_call.1} parent=1 // pred_region
      %s62 = ssub.s32 6144, 6144
      %63 = vsyncadd [#allocation6], %s62
      %s64 = sshll.u32 [#allocation7], 4
      %s65 = int_to_ptr.vmem [resolvable:$true] %s64
      %70 = dma.hbm_to_vmem [thread:$0]  %s7, 6144, %s65, [#allocation6], 384, 384, 24
    $region33: #{tpu_custom_call.1} parent=1 // pred_fallthru
      _
    // Predicated region
    $region34: #{tpu_custom_call.1} parent=1 // pred_check
      _
    $region35: #{tpu_custom_call.1} parent=1 // pred_check_branch
      %72 = sbr.rel (0) target = $region37
    $region36: #{tpu_custom_call.1} parent=1 // pred_region
      _
    $region37: #{tpu_custom_call.1} parent=1 // pred_fallthru
      _
    // Predicated region
    $region38: #{tpu_custom_call.1} parent=1 // pred_check
      _
    $region39: #{tpu_custom_call.1} parent=1 // pred_check_branch
      %74 = sbr.rel (0) target = $region41
    $region40: #{tpu_custom_call.1} parent=1 // pred_region
      _
    $region41: #{tpu_custom_call.1} parent=1 // pred_fallthru
      _
    // Predicated region
    $region42: #{tpu_custom_call.1} parent=1 // pred_check
      _
    $region43: #{tpu_custom_call.1} parent=1 // pred_check_branch
      %76 = sbr.rel (0) target = $region45
    $region44: #{tpu_custom_call.1} parent=1 // pred_region
      _
    $region45: #{tpu_custom_call.1} parent=1 // pred_fallthru
      _
    // Predicated region
    $region46: #{tpu_custom_call.1} parent=1 // pred_check
      _
    $region47: #{tpu_custom_call.1} parent=1 // pred_check_branch
      %78 = sbr.rel (0) target = $region49
    $region48: #{tpu_custom_call.1} parent=1 // pred_region
      _
    $region49: #{tpu_custom_call.1} parent=1 // pred_fallthru
      _
    // Predicated region
    $region50: #{tpu_custom_call.1} parent=1 // pred_check
      _
    $region51: #{tpu_custom_call.1} parent=1 // pred_check_branch
      %80 = sbr.rel (0) target = $region53
    $region52: #{tpu_custom_call.1} parent=1 // pred_region
      _
    $region53: #{tpu_custom_call.1} parent=1 // pred_fallthru
      _
    // Predicated region
    $region54: #{tpu_custom_call.1} parent=1 // pred_check
      _
    $region55: #{tpu_custom_call.1} parent=1 // pred_check_branch
      %82 = sbr.rel (0) target = $region57
    $region56: #{tpu_custom_call.1} parent=1 // pred_region
      _
    $region57: #{tpu_custom_call.1} parent=1 // pred_fallthru
      _
    // Predicated region
    $region58: #{tpu_custom_call.1} parent=1 // pred_check
      _
    $region59: #{tpu_custom_call.1} parent=1 // pred_check_branch
      %84 = sbr.rel (0) target = $region61
    $region60: #{tpu_custom_call.1} parent=1 // pred_region
      _
    $region61: #{tpu_custom_call.1} parent=1 // pred_fallthru
      _
    // Predicated region
    $region62: #{tpu_custom_call.1} parent=1 // pred_check
      _
    $region63: #{tpu_custom_call.1} parent=1 // pred_check_branch
      %86 = sbr.rel (0) target = $region65
    $region64: #{tpu_custom_call.1} parent=1 // pred_region
      _
    $region65: #{tpu_custom_call.1} parent=1 // pred_fallthru
      _
    // Predicated region
    $region66: #{tpu_custom_call.1} parent=1 // pred_check
      _
    $region67: #{tpu_custom_call.1} parent=1 // pred_check_branch
      %88 = sbr.rel (0) target = $region69
    $region68: #{tpu_custom_call.1} parent=1 // pred_region
      %89 = dma.done [#allocation4], 6144
    $region69: #{tpu_custom_call.1} parent=1 // pred_fallthru
      _
    // Predicated region
    $region70: #{tpu_custom_call.1} parent=1 // pred_check
      _
    $region71: #{tpu_custom_call.1} parent=1 // pred_check_branch
      %91 = sbr.rel (0) target = $region73
    $region72: #{tpu_custom_call.1} parent=1 // pred_region
      %92 = dma.done [#allocation6], 6144
    $region73: #{tpu_custom_call.1} parent=1 // pred_fallthru
      _
    // Predicated region
    $region74: #{tpu_custom_call.1} parent=1 // pred_check
      _
    $region75: #{tpu_custom_call.1} parent=1 // pred_check_branch
      %94 = sbr.rel (0) target = $region77
    $region76: #{tpu_custom_call.1} parent=1 // pred_region
      %95 = dma.done [#allocation6], 6144
    $region77: #{tpu_custom_call.1} parent=1 // pred_fallthru
      _
    %v96 = vld [vmem:[%s0] sm:$0xff]
    %v97 = vld [vmem:[%s0 + $0x8] sm:$0xff]
    %v98 = vld [vmem:[%s0 + $0x10] sm:$0xff]
    %v99 = vld [vmem:[%s0 + $0x18] sm:$0xff]
    %v100 = vld [vmem:[%s0 + $0x20] sm:$0xff]
    %v101 = vld [vmem:[%s0 + $0x28] sm:$0xff]
    %v102 = vld [vmem:[%s0 + $0x30] sm:$0xff]
    %v103 = vld [vmem:[%s0 + $0x38] sm:$0xff]
    %v104 = vld [vmem:[%s2] sm:$0xff]
    %v105 = vld [vmem:[%s2 + $0x8] sm:$0xff]
    %v106 = vld [vmem:[%s2 + $0x10] sm:$0xff]
    %v107 = vld [vmem:[%s2 + $0x18] sm:$0xff]
    %v108 = vld [vmem:[%s2 + $0x20] sm:$0xff]
    %v109 = vld [vmem:[%s2 + $0x28] sm:$0xff]
    %v110 = vld [vmem:[%s4] sm:$0x7]
    %v112 = vlaneseq
    %v113 = vshrl.u32 %v112, 7
    %v114 = vsub.s32 0, %v113
    %v115 = vrot.slane %v110, %v114
    %v116 = vlaneseq
    %v117 = vshrl.u32 %v116, 7
    %v118 = vsub.s32 1, %v117
    %v119 = vrot.slane %v110, %v118
    %v120 = vlaneseq
    %v121 = vshrl.u32 %v120, 7
    %v122 = vsub.s32 2, %v121
    %v123 = vrot.slane %v110, %v122
    %vm127 = vcmask 130048
    %v129 = vsel %vm127, %v96, 0
    %v132 = vsel %vm127, %v97, 0
    %v135 = vsel %vm127, %v98, 0
    %v138 = vsel %vm127, %v99, 0
    %v141 = vsel %vm127, %v100, 0
    %v144 = vsel %vm127, %v101, 0
    %v147 = vsel %vm127, %v102, 0
    %v150 = vsel %vm127, %v103, 0
    %152 = vmatprep.subr.mxu0 %v105
    %153 = vmatpush1.msra.mxu0 %v104
    %154 = vmatprep.subr.mxu0 %v108
    %155 = vmatpush1.msra.mxu0 %v107
    %156 = vmatprep.subr.mxu0 0.0
    %157 = vmatpush1.msra.mxu0 0.0
    %158 = vmatprep.subr.mxu0 0.0
    %159 = vmatpush1.msra.mxu0 0.0
    %160 = vmatprep.subr.mxu0 0.0
    %161 = vmatpush1.msra.mxu0 0.0
    %162 = vmatprep.subr.mxu0 0.0
    %163 = vmatpush1.msra.mxu0 0.0
    %164 = vmatprep.subr.mxu0 0.0
    %165 = vmatpush1.msra.mxu0 0.0
    %166 = vmatprep.subr.mxu0 0.0
    %167 = vmatpush1.msra.mxu0 0.0
    %168 = vmatprep.subr.mxu0 0.0
    %169 = vmatpush1.msra.mxu0 0.0
    %170 = vmatprep.subr.mxu0 0.0
    %171 = vmatpush1.msra.mxu0 0.0
    %172 = vmatprep.subr.mxu0 0.0
    %173 = vmatpush1.msra.mxu0 0.0
    %174 = vmatprep.subr.mxu0 0.0
    %175 = vmatpush1.msra.mxu0 0.0
    %176 = vmatprep.subr.mxu0 0.0
    %177 = vmatpush1.msra.mxu0 0.0
    %178 = vmatprep.subr.mxu0 0.0
    %179 = vmatpush1.msra.mxu0 0.0
    %180 = vmatprep.subr.mxu0 0.0
    %181 = vmatpush1.msra.mxu0 0.0
    %182 = vmatprep.subr.mxu0 0.0
    %183 = vmatpush1.msra.mxu0 0.0
    %184 = vmatprep.subr.mxu0 0.0
    %185 = vmatpush1.msra.mxu0 0.0
    %186 = vmatprep.subr.mxu0 0.0
    %187 = vmatpush1.msra.mxu0 0.0
    %188 = vmatprep.subr.mxu0 0.0
    %189 = vmatpush1.msra.mxu0 0.0
    %190 = vmatprep.subr.mxu0 0.0
    %191 = vmatpush1.msra.mxu0 0.0
    %192 = vmatprep.subr.mxu0 0.0
    %193 = vmatpush1.msra.mxu0 0.0
    %194 = vmatprep.subr.mxu0 0.0
    %195 = vmatpush1.msra.mxu0 0.0
    %196 = vmatprep.subr.mxu0 0.0
    %197 = vmatpush1.msra.mxu0 0.0
    %198 = vmatprep.subr.mxu0 0.0
    %199 = vmatpush1.msra.mxu0 0.0
    %200 = vmatprep.subr.mxu0 0.0
    %201 = vmatpush1.msra.mxu0 0.0
    %202 = vmatprep.subr.mxu0 0.0
    %203 = vmatpush1.msra.mxu0 0.0
    %204 = vmatprep.subr.mxu0 0.0
    %205 = vmatpush1.msra.mxu0 0.0
    %206 = vmatprep.subr.mxu0 0.0
    %207 = vmatpush1.msra.mxu0 0.0
    %208 = vmatprep.subr.mxu0 0.0
    %209 = vmatpush1.msra.mxu0 0.0
    %210 = vmatprep.subr.mxu0 0.0
    %211 = vmatpush1.msra.mxu0 0.0
    %212 = vmatprep.subr.mxu0 0.0
    %213 = vmatpush1.msra.mxu0 0.0
    %214 = vmatprep.subr.mxu0 0.0
    %215 = vmatpush1.msra.mxu0 0.0
    %216 = vmatprep.mubr.f32.mxu0 0.0
    %217 = vmatmul.mubr.f32.gmra.mrb[0].mxu0 %v129
    %v218 = vpop.f32.mrb[0].mxu0
    %v219 = vadd.f32 %v115, %v218
    %v220 = vpop.f32.mrb[0].mxu0
    %v221 = vadd.f32 %v119, %v220
    %222 = vmatprep.mubr.f32.mxu0 0.0
    %223 = vmatmul.mubr.f32.gmra.mrb[0].mxu0 %v132
    %v224 = vpop.f32.mrb[0].mxu0
    %v225 = vadd.f32 %v115, %v224
    %v226 = vpop.f32.mrb[0].mxu0
    %v227 = vadd.f32 %v119, %v226
    %228 = vmatprep.mubr.f32.mxu0 0.0
    %229 = vmatmul.mubr.f32.gmra.mrb[0].mxu0 %v135
    %v230 = vpop.f32.mrb[0].mxu0
    %v231 = vadd.f32 %v115, %v230
    %v232 = vpop.f32.mrb[0].mxu0
    %v233 = vadd.f32 %v119, %v232
    %234 = vmatprep.mubr.f32.mxu0 0.0
    %235 = vmatmul.mubr.f32.gmra.mrb[0].mxu0 %v138
    %v236 = vpop.f32.mrb[0].mxu0
    %v237 = vadd.f32 %v115, %v236
    %v238 = vpop.f32.mrb[0].mxu0
    %v239 = vadd.f32 %v119, %v238
    %240 = vmatprep.mubr.f32.mxu0 0.0
    %241 = vmatmul.mubr.f32.gmra.mrb[0].mxu0 %v141
    %v242 = vpop.f32.mrb[0].mxu0
    %v243 = vadd.f32 %v115, %v242
    %v244 = vpop.f32.mrb[0].mxu0
    %v245 = vadd.f32 %v119, %v244
    %246 = vmatprep.mubr.f32.mxu0 0.0
    %247 = vmatmul.mubr.f32.gmra.mrb[0].mxu0 %v144
    %v248 = vpop.f32.mrb[0].mxu0
    %v249 = vadd.f32 %v115, %v248
    %v250 = vpop.f32.mrb[0].mxu0
    %v251 = vadd.f32 %v119, %v250
    %252 = vmatprep.mubr.f32.mxu0 0.0
    %253 = vmatmul.mubr.f32.gmra.mrb[0].mxu0 %v147
    %v254 = vpop.f32.mrb[0].mxu0
    %v255 = vadd.f32 %v115, %v254
    %v256 = vpop.f32.mrb[0].mxu0
    %v257 = vadd.f32 %v119, %v256
    %258 = vmatprep.mubr.f32.mxu0 0.0
    %259 = vmatmul.mubr.f32.gmra.mrb[0].mxu0 %v150
    %v260 = vpop.f32.mrb[0].mxu0
    %v261 = vadd.f32 %v115, %v260
    %v262 = vpop.f32.mrb[0].mxu0
    %v263 = vadd.f32 %v119, %v262
    %264 = vdwg.mxu0
    %265 = vmatprep.subr.mxu0 0.0
    %266 = vmatpush1.msra.mxu0 %v106
    %267 = vmatprep.subr.mxu0 0.0
    %268 = vmatpush1.msra.mxu0 %v109
    %269 = vmatprep.subr.mxu0 0.0
    %270 = vmatpush1.msra.mxu0 0.0
    %271 = vmatprep.subr.mxu0 0.0
    %272 = vmatpush1.msra.mxu0 0.0
    %273 = vmatprep.subr.mxu0 0.0
    %274 = vmatpush1.msra.mxu0 0.0
    %275 = vmatprep.subr.mxu0 0.0
    %276 = vmatpush1.msra.mxu0 0.0
    %277 = vmatprep.subr.mxu0 0.0
    %278 = vmatpush1.msra.mxu0 0.0
    %279 = vmatprep.subr.mxu0 0.0
    %280 = vmatpush1.msra.mxu0 0.0
    %281 = vmatprep.subr.mxu0 0.0
    %282 = vmatpush1.msra.mxu0 0.0
    %283 = vmatprep.subr.mxu0 0.0
    %284 = vmatpush1.msra.mxu0 0.0
    %285 = vmatprep.subr.mxu0 0.0
    %286 = vmatpush1.msra.mxu0 0.0
    %287 = vmatprep.subr.mxu0 0.0
    %288 = vmatpush1.msra.mxu0 0.0
    %289 = vmatprep.subr.mxu0 0.0
    %290 = vmatpush1.msra.mxu0 0.0
    %291 = vmatprep.subr.mxu0 0.0
    %292 = vmatpush1.msra.mxu0 0.0
    %293 = vmatprep.subr.mxu0 0.0
    %294 = vmatpush1.msra.mxu0 0.0
    %295 = vmatprep.subr.mxu0 0.0
    %296 = vmatpush1.msra.mxu0 0.0
    %297 = vmatprep.subr.mxu0 0.0
    %298 = vmatpush1.msra.mxu0 0.0
    %299 = vmatprep.subr.mxu0 0.0
    %300 = vmatpush1.msra.mxu0 0.0
    %301 = vmatprep.subr.mxu0 0.0
    %302 = vmatpush1.msra.mxu0 0.0
    %303 = vmatprep.subr.mxu0 0.0
    %304 = vmatpush1.msra.mxu0 0.0
    %305 = vmatprep.subr.mxu0 0.0
    %306 = vmatpush1.msra.mxu0 0.0
    %307 = vmatprep.subr.mxu0 0.0
    %308 = vmatpush1.msra.mxu0 0.0
    %309 = vmatprep.subr.mxu0 0.0
    %310 = vmatpush1.msra.mxu0 0.0
    %311 = vmatprep.subr.mxu0 0.0
    %312 = vmatpush1.msra.mxu0 0.0
    %313 = vmatprep.subr.mxu0 0.0
    %314 = vmatpush1.msra.mxu0 0.0
    %315 = vmatprep.subr.mxu0 0.0
    %316 = vmatpush1.msra.mxu0 0.0
    %317 = vmatprep.subr.mxu0 0.0
    %318 = vmatpush1.msra.mxu0 0.0
    %319 = vmatprep.subr.mxu0 0.0
    %320 = vmatpush1.msra.mxu0 0.0
    %321 = vmatprep.subr.mxu0 0.0
    %322 = vmatpush1.msra.mxu0 0.0
    %323 = vmatprep.subr.mxu0 0.0
    %324 = vmatpush1.msra.mxu0 0.0
    %325 = vmatprep.subr.mxu0 0.0
    %326 = vmatpush1.msra.mxu0 0.0
    %327 = vmatprep.subr.mxu0 0.0
    %328 = vmatpush1.msra.mxu0 0.0
    %329 = vmatprep.mubr.f32.mxu0 0.0
    %330 = vmatmul.mubr.f32.gmra.mrb[0].mxu0 %v129
    %v331 = vpop.f32.mrb[0].mxu0
    %v332 = vadd.f32 %v123, %v331
    %v333 = vpop.f32.mrb[0].mxu0
    %334 = vmatprep.mubr.f32.mxu0 0.0
    %335 = vmatmul.mubr.f32.gmra.mrb[0].mxu0 %v132
    %v336 = vpop.f32.mrb[0].mxu0
    %v337 = vadd.f32 %v123, %v336
    %v338 = vpop.f32.mrb[0].mxu0
    %339 = vmatprep.mubr.f32.mxu0 0.0
    %340 = vmatmul.mubr.f32.gmra.mrb[0].mxu0 %v135
    %v341 = vpop.f32.mrb[0].mxu0
    %v342 = vadd.f32 %v123, %v341
    %v343 = vpop.f32.mrb[0].mxu0
    %344 = vmatprep.mubr.f32.mxu0 0.0
    %345 = vmatmul.mubr.f32.gmra.mrb[0].mxu0 %v138
    %v346 = vpop.f32.mrb[0].mxu0
    %v347 = vadd.f32 %v123, %v346
    %v348 = vpop.f32.mrb[0].mxu0
    %349 = vmatprep.mubr.f32.mxu0 0.0
    %350 = vmatmul.mubr.f32.gmra.mrb[0].mxu0 %v141
    %v351 = vpop.f32.mrb[0].mxu0
    %v352 = vadd.f32 %v123, %v351
    %v353 = vpop.f32.mrb[0].mxu0
    %354 = vmatprep.mubr.f32.mxu0 0.0
    %355 = vmatmul.mubr.f32.gmra.mrb[0].mxu0 %v144
    %v356 = vpop.f32.mrb[0].mxu0
    %v357 = vadd.f32 %v123, %v356
    %v358 = vpop.f32.mrb[0].mxu0
    %359 = vmatprep.mubr.f32.mxu0 0.0
    %360 = vmatmul.mubr.f32.gmra.mrb[0].mxu0 %v147
    %v361 = vpop.f32.mrb[0].mxu0
    %v362 = vadd.f32 %v123, %v361
    %v363 = vpop.f32.mrb[0].mxu0
    %364 = vmatprep.mubr.f32.mxu0 0.0
    %365 = vmatmul.mubr.f32.gmra.mrb[0].mxu0 %v150
    %v366 = vpop.f32.mrb[0].mxu0
    %v367 = vadd.f32 %v123, %v366
    %v368 = vpop.f32.mrb[0].mxu0
    %369 = vdwg.mxu0
    %v370 = vld [vmem:[#allocation3] sm:$0xff]
    %v371 = vld [vmem:[#allocation3 + $0x8] sm:$0xff]
    %v372 = vld [vmem:[#allocation3 + $0x10] sm:$0xff]
    %v373 = vld [vmem:[#allocation3 + $0x18] sm:$0xff]
    %v374 = vld [vmem:[#allocation3 + $0x20] sm:$0xff]
    %v375 = vld [vmem:[#allocation3 + $0x28] sm:$0xff]
    %v376 = vld [vmem:[#allocation3 + $0x30] sm:$0xff]
    %v377 = vld [vmem:[#allocation3 + $0x38] sm:$0xff]
    %v378 = vld [vmem:[#allocation3 + $0x40] sm:$0xff]
    %v379 = vld [vmem:[#allocation3 + $0x48] sm:$0xff]
    %v380 = vld [vmem:[#allocation3 + $0x50] sm:$0xff]
    %v381 = vld [vmem:[#allocation3 + $0x58] sm:$0xff]
    %v382 = vld [vmem:[#allocation3 + $0x60] sm:$0xff]
    %v383 = vld [vmem:[#allocation3 + $0x68] sm:$0xff]
    %v384 = vld [vmem:[#allocation3 + $0x70] sm:$0xff]
    %v385 = vld [vmem:[#allocation3 + $0x78] sm:$0xff]
    %v386 = vld [vmem:[#allocation3 + $0x80] sm:$0xff]
    %v387 = vld [vmem:[#allocation3 + $0x88] sm:$0xff]
    %v388 = vld [vmem:[#allocation3 + $0x90] sm:$0xff]
    %v389 = vld [vmem:[#allocation3 + $0x98] sm:$0xff]
    %v390 = vld [vmem:[#allocation3 + $0xa0] sm:$0xff]
    %v391 = vld [vmem:[#allocation3 + $0xa8] sm:$0xff]
    %v392 = vld [vmem:[#allocation3 + $0xb0] sm:$0xff]
    %v393 = vld [vmem:[#allocation3 + $0xb8] sm:$0xff]
    %v394 = vld [vmem:[#allocation3 + $0xc0] sm:$0xff]
    %v395 = vld [vmem:[#allocation3 + $0xc8] sm:$0xff]
    %v396 = vld [vmem:[#allocation3 + $0xd0] sm:$0xff]
    %v397 = vld [vmem:[#allocation3 + $0xd8] sm:$0xff]
    %v398 = vld [vmem:[#allocation3 + $0xe0] sm:$0xff]
    %v399 = vld [vmem:[#allocation3 + $0xe8] sm:$0xff]
    %v400 = vld [vmem:[#allocation3 + $0xf0] sm:$0xff]
    %v401 = vld [vmem:[#allocation3 + $0xf8] sm:$0xff]
    %v402 = vld [vmem:[#allocation3 + $0x100] sm:$0xff]
    %v403 = vld [vmem:[#allocation3 + $0x108] sm:$0xff]
    %v404 = vld [vmem:[#allocation3 + $0x110] sm:$0xff]
    %v405 = vld [vmem:[#allocation3 + $0x118] sm:$0xff]
    %v406 = vld [vmem:[#allocation3 + $0x120] sm:$0xff]
    %v407 = vld [vmem:[#allocation3 + $0x128] sm:$0xff]
    %v408 = vld [vmem:[#allocation3 + $0x130] sm:$0xff]
    %v409 = vld [vmem:[#allocation3 + $0x138] sm:$0xff]
    %v410 = vld [vmem:[#allocation3 + $0x140] sm:$0xff]
    %v411 = vld [vmem:[#allocation3 + $0x148] sm:$0xff]
    %v412 = vld [vmem:[#allocation3 + $0x150] sm:$0xff]
    %v413 = vld [vmem:[#allocation3 + $0x158] sm:$0xff]
    %v414 = vld [vmem:[#allocation3 + $0x160] sm:$0xff]
    %v415 = vld [vmem:[#allocation3 + $0x168] sm:$0xff]
    %v416 = vld [vmem:[#allocation3 + $0x170] sm:$0xff]
    %v417 = vld [vmem:[#allocation3 + $0x178] sm:$0xff]
    %v418 = vld [vmem:[#allocation5] sm:$0xff]
    %v419 = vld [vmem:[#allocation5 + $0x8] sm:$0xff]
    %v420 = vld [vmem:[#allocation5 + $0x10] sm:$0xff]
    %v421 = vld [vmem:[#allocation5 + $0x18] sm:$0xff]
    %v422 = vld [vmem:[#allocation5 + $0x20] sm:$0xff]
    %v423 = vld [vmem:[#allocation5 + $0x28] sm:$0xff]
    %v424 = vld [vmem:[#allocation5 + $0x30] sm:$0xff]
    %v425 = vld [vmem:[#allocation5 + $0x38] sm:$0xff]
    %v426 = vld [vmem:[#allocation5 + $0x40] sm:$0xff]
    %v427 = vld [vmem:[#allocation5 + $0x48] sm:$0xff]
    %v428 = vld [vmem:[#allocation5 + $0x50] sm:$0xff]
    %v429 = vld [vmem:[#allocation5 + $0x58] sm:$0xff]
    %v430 = vld [vmem:[#allocation5 + $0x60] sm:$0xff]
    %v431 = vld [vmem:[#allocation5 + $0x68] sm:$0xff]
    %v432 = vld [vmem:[#allocation5 + $0x70] sm:$0xff]
    %v433 = vld [vmem:[#allocation5 + $0x78] sm:$0xff]
    %v434 = vld [vmem:[#allocation5 + $0x80] sm:$0xff]
    %v435 = vld [vmem:[#allocation5 + $0x88] sm:$0xff]
    %v436 = vld [vmem:[#allocation5 + $0x90] sm:$0xff]
    %v437 = vld [vmem:[#allocation5 + $0x98] sm:$0xff]
    %v438 = vld [vmem:[#allocation5 + $0xa0] sm:$0xff]
    %v439 = vld [vmem:[#allocation5 + $0xa8] sm:$0xff]
    %v440 = vld [vmem:[#allocation5 + $0xb0] sm:$0xff]
    %v441 = vld [vmem:[#allocation5 + $0xb8] sm:$0xff]
    %v442 = vld [vmem:[#allocation5 + $0xc0] sm:$0xff]
    %v443 = vld [vmem:[#allocation5 + $0xc8] sm:$0xff]
    %v444 = vld [vmem:[#allocation5 + $0xd0] sm:$0xff]
    %v445 = vld [vmem:[#allocation5 + $0xd8] sm:$0xff]
    %v446 = vld [vmem:[#allocation5 + $0xe0] sm:$0xff]
    %v447 = vld [vmem:[#allocation5 + $0xe8] sm:$0xff]
    %v448 = vld [vmem:[#allocation5 + $0xf0] sm:$0xff]
    %v449 = vld [vmem:[#allocation5 + $0xf8] sm:$0xff]
    %v450 = vld [vmem:[#allocation5 + $0x100] sm:$0xff]
    %v451 = vld [vmem:[#allocation5 + $0x108] sm:$0xff]
    %v452 = vld [vmem:[#allocation5 + $0x110] sm:$0xff]
    %v453 = vld [vmem:[#allocation5 + $0x118] sm:$0xff]
    %v454 = vld [vmem:[#allocation5 + $0x120] sm:$0xff]
    %v455 = vld [vmem:[#allocation5 + $0x128] sm:$0xff]
    %v456 = vld [vmem:[#allocation5 + $0x130] sm:$0xff]
    %v457 = vld [vmem:[#allocation5 + $0x138] sm:$0xff]
    %v458 = vld [vmem:[#allocation5 + $0x140] sm:$0xff]
    %v459 = vld [vmem:[#allocation5 + $0x148] sm:$0xff]
    %v460 = vld [vmem:[#allocation5 + $0x150] sm:$0xff]
    %v461 = vld [vmem:[#allocation5 + $0x158] sm:$0xff]
    %v462 = vld [vmem:[#allocation5 + $0x160] sm:$0xff]
    %v463 = vld [vmem:[#allocation5 + $0x168] sm:$0xff]
    %v464 = vld [vmem:[#allocation5 + $0x170] sm:$0xff]
    %v465 = vld [vmem:[#allocation5 + $0x178] sm:$0xff]
    %v466 = vld [vmem:[#allocation7] sm:$0xff]
    %v467 = vld [vmem:[#allocation7 + $0x8] sm:$0xff]
    %v468 = vld [vmem:[#allocation7 + $0x10] sm:$0xff]
    %v469 = vld [vmem:[#allocation7 + $0x18] sm:$0xff]
    %v470 = vld [vmem:[#allocation7 + $0x20] sm:$0xff]
    %v471 = vld [vmem:[#allocation7 + $0x28] sm:$0xff]
    %v472 = vld [vmem:[#allocation7 + $0x30] sm:$0xff]
    %v473 = vld [vmem:[#allocation7 + $0x38] sm:$0xff]
    %v474 = vld [vmem:[#allocation7 + $0x40] sm:$0xff]
    %v475 = vld [vmem:[#allocation7 + $0x48] sm:$0xff]
    %v476 = vld [vmem:[#allocation7 + $0x50] sm:$0xff]
    %v477 = vld [vmem:[#allocation7 + $0x58] sm:$0xff]
    %v478 = vld [vmem:[#allocation7 + $0x60] sm:$0xff]
    %v479 = vld [vmem:[#allocation7 + $0x68] sm:$0xff]
    %v480 = vld [vmem:[#allocation7 + $0x70] sm:$0xff]
    %v481 = vld [vmem:[#allocation7 + $0x78] sm:$0xff]
    %v482 = vld [vmem:[#allocation7 + $0x80] sm:$0xff]
    %v483 = vld [vmem:[#allocation7 + $0x88] sm:$0xff]
    %v484 = vld [vmem:[#allocation7 + $0x90] sm:$0xff]
    %v485 = vld [vmem:[#allocation7 + $0x98] sm:$0xff]
    %v486 = vld [vmem:[#allocation7 + $0xa0] sm:$0xff]
    %v487 = vld [vmem:[#allocation7 + $0xa8] sm:$0xff]
    %v488 = vld [vmem:[#allocation7 + $0xb0] sm:$0xff]
    %v489 = vld [vmem:[#allocation7 + $0xb8] sm:$0xff]
    %v490 = vld [vmem:[#allocation7 + $0xc0] sm:$0xff]
    %v491 = vld [vmem:[#allocation7 + $0xc8] sm:$0xff]
    %v492 = vld [vmem:[#allocation7 + $0xd0] sm:$0xff]
    %v493 = vld [vmem:[#allocation7 + $0xd8] sm:$0xff]
    %v494 = vld [vmem:[#allocation7 + $0xe0] sm:$0xff]
    %v495 = vld [vmem:[#allocation7 + $0xe8] sm:$0xff]
    %v496 = vld [vmem:[#allocation7 + $0xf0] sm:$0xff]
    %v497 = vld [vmem:[#allocation7 + $0xf8] sm:$0xff]
    %v498 = vld [vmem:[#allocation7 + $0x100] sm:$0xff]
    %v499 = vld [vmem:[#allocation7 + $0x108] sm:$0xff]
    %v500 = vld [vmem:[#allocation7 + $0x110] sm:$0xff]
    %v501 = vld [vmem:[#allocation7 + $0x118] sm:$0xff]
    %v502 = vld [vmem:[#allocation7 + $0x120] sm:$0xff]
    %v503 = vld [vmem:[#allocation7 + $0x128] sm:$0xff]
    %v504 = vld [vmem:[#allocation7 + $0x130] sm:$0xff]
    %v505 = vld [vmem:[#allocation7 + $0x138] sm:$0xff]
    %v506 = vld [vmem:[#allocation7 + $0x140] sm:$0xff]
    %v507 = vld [vmem:[#allocation7 + $0x148] sm:$0xff]
    %v508 = vld [vmem:[#allocation7 + $0x150] sm:$0xff]
    %v509 = vld [vmem:[#allocation7 + $0x158] sm:$0xff]
    %v510 = vld [vmem:[#allocation7 + $0x160] sm:$0xff]
    %v511 = vld [vmem:[#allocation7 + $0x168] sm:$0xff]
    %v512 = vld [vmem:[#allocation7 + $0x170] sm:$0xff]
    %v513 = vld [vmem:[#allocation7 + $0x178] sm:$0xff]
    %v514 = vld [vmem:[%s8] sm:$0x7]
    %v516 = vlaneseq
    %v517 = vshrl.u32 %v516, 7
    %v518 = vsub.s32 0, %v517
    %v519 = vrot.slane %v514, %v518
    %v520 = vlaneseq
    %v521 = vshrl.u32 %v520, 7
    %v522 = vsub.s32 1, %v521
    %v523 = vrot.slane %v514, %v522
    %v524 = vlaneseq
    %v525 = vshrl.u32 %v524, 7
    %v526 = vsub.s32 2, %v525
    %v527 = vrot.slane %v514, %v526
    %v531 = vld [vmem:[%s5] sm:$0x1]
    %v533 = vlaneseq
    %v534 = vshrl.u32 %v533, 7
    %v535 = vsub.s32 0, %v534
    %v536 = vrot.slane %v531, %v535
    %v538 = vld [vmem:[%s9] sm:$0x1]
    %v540 = vlaneseq
    %v541 = vshrl.u32 %v540, 7
    %v542 = vsub.s32 0, %v541
    %v543 = vrot.slane %v538, %v542
    %v545 = vld [vmem:[%s1] sm:$0xff]
    %s546 = scalar_lea.vmem %s1, 8
    %v547 = vld [vmem:[%s546] sm:$0xff]
    %548 = vmatprep.subr.mxu0 %v371
    %549 = vmatpush1.msra.mxu0 %v370
    %550 = vmatprep.subr.mxu0 %v374
    %551 = vmatpush1.msra.mxu0 %v373
    %552 = vmatprep.subr.mxu0 %v377
    %553 = vmatpush1.msra.mxu0 %v376
    %554 = vmatprep.subr.mxu0 %v380
    %555 = vmatpush1.msra.mxu0 %v379
    %556 = vmatprep.subr.mxu0 %v383
    %557 = vmatpush1.msra.mxu0 %v382
    %558 = vmatprep.subr.mxu0 %v386
    %559 = vmatpush1.msra.mxu0 %v385
    %560 = vmatprep.subr.mxu0 %v389
    %561 = vmatpush1.msra.mxu0 %v388
    %562 = vmatprep.subr.mxu0 %v392
    %563 = vmatpush1.msra.mxu0 %v391
    %564 = vmatprep.subr.mxu0 %v395
    %565 = vmatpush1.msra.mxu0 %v394
    %566 = vmatprep.subr.mxu0 %v398
    %567 = vmatpush1.msra.mxu0 %v397
    %568 = vmatprep.subr.mxu0 %v401
    %569 = vmatpush1.msra.mxu0 %v400
    %570 = vmatprep.subr.mxu0 %v404
    %571 = vmatpush1.msra.mxu0 %v403
    %572 = vmatprep.subr.mxu0 %v407
    %573 = vmatpush1.msra.mxu0 %v406
    %574 = vmatprep.subr.mxu0 %v410
    %575 = vmatpush1.msra.mxu0 %v409
    %576 = vmatprep.subr.mxu0 %v413
    %577 = vmatpush1.msra.mxu0 %v412
    %578 = vmatprep.subr.mxu0 %v416
    %579 = vmatpush1.msra.mxu0 %v415
    %580 = vmatprep.subr.mxu0 0.0
    %581 = vmatpush1.msra.mxu0 0.0
    %582 = vmatprep.subr.mxu0 0.0
    %583 = vmatpush1.msra.mxu0 0.0
    %584 = vmatprep.subr.mxu0 0.0
    %585 = vmatpush1.msra.mxu0 0.0
    %586 = vmatprep.subr.mxu0 0.0
    %587 = vmatpush1.msra.mxu0 0.0
    %588 = vmatprep.subr.mxu0 0.0
    %589 = vmatpush1.msra.mxu0 0.0
    %590 = vmatprep.subr.mxu0 0.0
    %591 = vmatpush1.msra.mxu0 0.0
    %592 = vmatprep.subr.mxu0 0.0
    %593 = vmatpush1.msra.mxu0 0.0
    %594 = vmatprep.subr.mxu0 0.0
    %595 = vmatpush1.msra.mxu0 0.0
    %596 = vmatprep.subr.mxu0 0.0
    %597 = vmatpush1.msra.mxu0 0.0
    %598 = vmatprep.subr.mxu0 0.0
    %599 = vmatpush1.msra.mxu0 0.0
    %600 = vmatprep.subr.mxu0 0.0
    %601 = vmatpush1.msra.mxu0 0.0
    %602 = vmatprep.subr.mxu0 0.0
    %603 = vmatpush1.msra.mxu0 0.0
    %604 = vmatprep.subr.mxu0 0.0
    %605 = vmatpush1.msra.mxu0 0.0
    %606 = vmatprep.subr.mxu0 0.0
    %607 = vmatpush1.msra.mxu0 0.0
    %608 = vmatprep.subr.mxu0 0.0
    %609 = vmatpush1.msra.mxu0 0.0
    %610 = vmatprep.subr.mxu0 0.0
    %611 = vmatpush1.msra.mxu0 0.0
    %612 = vmatprep.mubr.f32.mxu0 0.0
    %613 = vmatmul.mubr.f32.gmra.mrb[0].mxu0 %v545
    %v614 = vpop.f32.mrb[0].mxu0
    %v615 = vadd.f32 0.0, %v614
    %v616 = vpop.f32.mrb[0].mxu0
    %v617 = vadd.f32 0.0, %v616
    %618 = vdwg.mxu0
    %619 = vmatprep.subr.mxu0 0.0
    %620 = vmatpush1.msra.mxu0 %v372
    %621 = vmatprep.subr.mxu0 0.0
    %622 = vmatpush1.msra.mxu0 %v375
    %623 = vmatprep.subr.mxu0 0.0
    %624 = vmatpush1.msra.mxu0 %v378
    %625 = vmatprep.subr.mxu0 0.0
    %626 = vmatpush1.msra.mxu0 %v381
    %627 = vmatprep.subr.mxu0 0.0
    %628 = vmatpush1.msra.mxu0 %v384
    %629 = vmatprep.subr.mxu0 0.0
    %630 = vmatpush1.msra.mxu0 %v387
    %631 = vmatprep.subr.mxu0 0.0
    %632 = vmatpush1.msra.mxu0 %v390
    %633 = vmatprep.subr.mxu0 0.0
    %634 = vmatpush1.msra.mxu0 %v393
    %635 = vmatprep.subr.mxu0 0.0
    %636 = vmatpush1.msra.mxu0 %v396
    %637 = vmatprep.subr.mxu0 0.0
    %638 = vmatpush1.msra.mxu0 %v399
    %639 = vmatprep.subr.mxu0 0.0
    %640 = vmatpush1.msra.mxu0 %v402
    %641 = vmatprep.subr.mxu0 0.0
    %642 = vmatpush1.msra.mxu0 %v405
    %643 = vmatprep.subr.mxu0 0.0
    %644 = vmatpush1.msra.mxu0 %v408
    %645 = vmatprep.subr.mxu0 0.0
    %646 = vmatpush1.msra.mxu0 %v411
    %647 = vmatprep.subr.mxu0 0.0
    %648 = vmatpush1.msra.mxu0 %v414
    %649 = vmatprep.subr.mxu0 0.0
    %650 = vmatpush1.msra.mxu0 %v417
    %651 = vmatprep.subr.mxu0 0.0
    %652 = vmatpush1.msra.mxu0 0.0
    %653 = vmatprep.subr.mxu0 0.0
    %654 = vmatpush1.msra.mxu0 0.0
    %655 = vmatprep.subr.mxu0 0.0
    %656 = vmatpush1.msra.mxu0 0.0
    %657 = vmatprep.subr.mxu0 0.0
    %658 = vmatpush1.msra.mxu0 0.0
    %659 = vmatprep.subr.mxu0 0.0
    %660 = vmatpush1.msra.mxu0 0.0
    %661 = vmatprep.subr.mxu0 0.0
    %662 = vmatpush1.msra.mxu0 0.0
    %663 = vmatprep.subr.mxu0 0.0
    %664 = vmatpush1.msra.mxu0 0.0
    %665 = vmatprep.subr.mxu0 0.0
    %666 = vmatpush1.msra.mxu0 0.0
    %667 = vmatprep.subr.mxu0 0.0
    %668 = vmatpush1.msra.mxu0 0.0
    %669 = vmatprep.subr.mxu0 0.0
    %670 = vmatpush1.msra.mxu0 0.0
    %671 = vmatprep.subr.mxu0 0.0
    %672 = vmatpush1.msra.mxu0 0.0
    %673 = vmatprep.subr.mxu0 0.0
    %674 = vmatpush1.msra.mxu0 0.0
    %675 = vmatprep.subr.mxu0 0.0
    %676 = vmatpush1.msra.mxu0 0.0
    %677 = vmatprep.subr.mxu0 0.0
    %678 = vmatpush1.msra.mxu0 0.0
    %679 = vmatprep.subr.mxu0 0.0
    %680 = vmatpush1.msra.mxu0 0.0
    %681 = vmatprep.subr.mxu0 0.0
    %682 = vmatpush1.msra.mxu0 0.0
    %683 = vmatprep.mubr.f32.mxu0 0.0
    %684 = vmatmul.mubr.f32.gmra.mrb[0].mxu0 %v545
    %v685 = vpop.f32.mrb[0].mxu0
    %v686 = vadd.f32 0.0, %v685
    %v687 = vpop.f32.mrb[0].mxu0
    %688 = vdwg.mxu0
    %v689 = vadd.f32 %v219, %v615
    %v690 = vxor.u32 %v689, 2147483648
    %v691 = vmul.f32 %v690, 1.442695
    %v692 = vpow.pop %v691
    %v693 = vadd.f32 %v692, 1.0
    %v694 = vrcp.pop %v693
    %v695 = vmul.f32 1.0, %v694
    %v696 = vadd.f32 %v221, %v617
    %v697 = vxor.u32 %v696, 2147483648
    %v698 = vmul.f32 %v697, 1.442695
    %v699 = vpow.pop %v698
    %v700 = vadd.f32 %v699, 1.0
    %v701 = vrcp.pop %v700
    %v702 = vmul.f32 1.0, %v701
    %v703 = vadd.f32 %v686, %v536
    %v704 = vmul.f32 %v695, %v703
    %v705 = vadd.f32 %v332, %v704
    %v706 = vtanh.pop %v705
    %v707 = vsub.f32 1.0, %v702
    %v708 = vmul.f32 %v707, %v706
    %v709 = vmul.f32 %v702, %v545
    %v710 = vadd.f32 %v708, %v709
    %711 = vmatprep.subr.mxu0 %v419
    %712 = vmatpush1.msra.mxu0 %v418
    %713 = vmatprep.subr.mxu0 %v422
    %714 = vmatpush1.msra.mxu0 %v421
    %715 = vmatprep.subr.mxu0 %v425
    %716 = vmatpush1.msra.mxu0 %v424
    %717 = vmatprep.subr.mxu0 %v428
    %718 = vmatpush1.msra.mxu0 %v427
    %719 = vmatprep.subr.mxu0 %v431
    %720 = vmatpush1.msra.mxu0 %v430
    %721 = vmatprep.subr.mxu0 %v434
    %722 = vmatpush1.msra.mxu0 %v433
    %723 = vmatprep.subr.mxu0 %v437
    %724 = vmatpush1.msra.mxu0 %v436
    %725 = vmatprep.subr.mxu0 %v440
    %726 = vmatpush1.msra.mxu0 %v439
    %727 = vmatprep.subr.mxu0 %v443
    %728 = vmatpush1.msra.mxu0 %v442
    %729 = vmatprep.subr.mxu0 %v446
    %730 = vmatpush1.msra.mxu0 %v445
    %731 = vmatprep.subr.mxu0 %v449
    %732 = vmatpush1.msra.mxu0 %v448
    %733 = vmatprep.subr.mxu0 %v452
    %734 = vmatpush1.msra.mxu0 %v451
    %735 = vmatprep.subr.mxu0 %v455
    %736 = vmatpush1.msra.mxu0 %v454
    %737 = vmatprep.subr.mxu0 %v458
    %738 = vmatpush1.msra.mxu0 %v457
    %739 = vmatprep.subr.mxu0 %v461
    %740 = vmatpush1.msra.mxu0 %v460
    %741 = vmatprep.subr.mxu0 %v464
    %742 = vmatpush1.msra.mxu0 %v463
    %743 = vmatprep.subr.mxu0 0.0
    %744 = vmatpush1.msra.mxu0 0.0
    %745 = vmatprep.subr.mxu0 0.0
    %746 = vmatpush1.msra.mxu0 0.0
    %747 = vmatprep.subr.mxu0 0.0
    %748 = vmatpush1.msra.mxu0 0.0
    %749 = vmatprep.subr.mxu0 0.0
    %750 = vmatpush1.msra.mxu0 0.0
    %751 = vmatprep.subr.mxu0 0.0
    %752 = vmatpush1.msra.mxu0 0.0
    %753 = vmatprep.subr.mxu0 0.0
    %754 = vmatpush1.msra.mxu0 0.0
    %755 = vmatprep.subr.mxu0 0.0
    %756 = vmatpush1.msra.mxu0 0.0
    %757 = vmatprep.subr.mxu0 0.0
    %758 = vmatpush1.msra.mxu0 0.0
    %759 = vmatprep.subr.mxu0 0.0
    %760 = vmatpush1.msra.mxu0 0.0
    %761 = vmatprep.subr.mxu0 0.0
    %762 = vmatpush1.msra.mxu0 0.0
    %763 = vmatprep.subr.mxu0 0.0
    %764 = vmatpush1.msra.mxu0 0.0
    %765 = vmatprep.subr.mxu0 0.0
    %766 = vmatpush1.msra.mxu0 0.0
    %767 = vmatprep.subr.mxu0 0.0
    %768 = vmatpush1.msra.mxu0 0.0
    %769 = vmatprep.subr.mxu0 0.0
    %770 = vmatpush1.msra.mxu0 0.0
    %771 = vmatprep.subr.mxu0 0.0
    %772 = vmatpush1.msra.mxu0 0.0
    %773 = vmatprep.subr.mxu0 0.0
    %774 = vmatpush1.msra.mxu0 0.0
    %775 = vmatprep.mubr.f32.mxu0 0.0
    %776 = vmatmul.mubr.f32.gmra.mrb[0].mxu0 %v710
    %v777 = vpop.f32.mrb[0].mxu0
    %v778 = vadd.f32 %v519, %v777
    %v779 = vpop.f32.mrb[0].mxu0
    %v780 = vadd.f32 %v523, %v779
    %781 = vdwg.mxu0
    %782 = vmatprep.subr.mxu0 0.0
    %783 = vmatpush1.msra.mxu0 %v420
    %784 = vmatprep.subr.mxu0 0.0
    %785 = vmatpush1.msra.mxu0 %v423
    %786 = vmatprep.subr.mxu0 0.0
    %787 = vmatpush1.msra.mxu0 %v426
    %788 = vmatprep.subr.mxu0 0.0
    %789 = vmatpush1.msra.mxu0 %v429
    %790 = vmatprep.subr.mxu0 0.0
    %791 = vmatpush1.msra.mxu0 %v432
    %792 = vmatprep.subr.mxu0 0.0
    %793 = vmatpush1.msra.mxu0 %v435
    %794 = vmatprep.subr.mxu0 0.0
    %795 = vmatpush1.msra.mxu0 %v438
    %796 = vmatprep.subr.mxu0 0.0
    %797 = vmatpush1.msra.mxu0 %v441
    %798 = vmatprep.subr.mxu0 0.0
    %799 = vmatpush1.msra.mxu0 %v444
    %800 = vmatprep.subr.mxu0 0.0
    %801 = vmatpush1.msra.mxu0 %v447
    %802 = vmatprep.subr.mxu0 0.0
    %803 = vmatpush1.msra.mxu0 %v450
    %804 = vmatprep.subr.mxu0 0.0
    %805 = vmatpush1.msra.mxu0 %v453
    %806 = vmatprep.subr.mxu0 0.0
    %807 = vmatpush1.msra.mxu0 %v456
    %808 = vmatprep.subr.mxu0 0.0
    %809 = vmatpush1.msra.mxu0 %v459
    %810 = vmatprep.subr.mxu0 0.0
    %811 = vmatpush1.msra.mxu0 %v462
    %812 = vmatprep.subr.mxu0 0.0
    %813 = vmatpush1.msra.mxu0 %v465
    %814 = vmatprep.subr.mxu0 0.0
    %815 = vmatpush1.msra.mxu0 0.0
    %816 = vmatprep.subr.mxu0 0.0
    %817 = vmatpush1.msra.mxu0 0.0
    %818 = vmatprep.subr.mxu0 0.0
    %819 = vmatpush1.msra.mxu0 0.0
    %820 = vmatprep.subr.mxu0 0.0
    %821 = vmatpush1.msra.mxu0 0.0
    %822 = vmatprep.subr.mxu0 0.0
    %823 = vmatpush1.msra.mxu0 0.0
    %824 = vmatprep.subr.mxu0 0.0
    %825 = vmatpush1.msra.mxu0 0.0
    %826 = vmatprep.subr.mxu0 0.0
    %827 = vmatpush1.msra.mxu0 0.0
    %828 = vmatprep.subr.mxu0 0.0
    %829 = vmatpush1.msra.mxu0 0.0
    %830 = vmatprep.subr.mxu0 0.0
    %831 = vmatpush1.msra.mxu0 0.0
    %832 = vmatprep.subr.mxu0 0.0
    %833 = vmatpush1.msra.mxu0 0.0
    %834 = vmatprep.subr.mxu0 0.0
    %835 = vmatpush1.msra.mxu0 0.0
    %836 = vmatprep.subr.mxu0 0.0
    %837 = vmatpush1.msra.mxu0 0.0
    %838 = vmatprep.subr.mxu0 0.0
    %839 = vmatpush1.msra.mxu0 0.0
    %840 = vmatprep.subr.mxu0 0.0
    %841 = vmatpush1.msra.mxu0 0.0
    %842 = vmatprep.subr.mxu0 0.0
    %843 = vmatpush1.msra.mxu0 0.0
    %844 = vmatprep.subr.mxu0 0.0
    %845 = vmatpush1.msra.mxu0 0.0
    %846 = vmatprep.mubr.f32.mxu0 0.0
    %847 = vmatmul.mubr.f32.gmra.mrb[0].mxu0 %v710
    %v848 = vpop.f32.mrb[0].mxu0
    %v849 = vadd.f32 %v527, %v848
    %v850 = vpop.f32.mrb[0].mxu0
    %851 = vdwg.mxu0
    %852 = vmatprep.subr.mxu0 %v467
    %853 = vmatpush1.msra.mxu0 %v466
    %854 = vmatprep.subr.mxu0 %v470
    %855 = vmatpush1.msra.mxu0 %v469
    %856 = vmatprep.subr.mxu0 %v473
    %857 = vmatpush1.msra.mxu0 %v472
    %858 = vmatprep.subr.mxu0 %v476
    %859 = vmatpush1.msra.mxu0 %v475
    %860 = vmatprep.subr.mxu0 %v479
    %861 = vmatpush1.msra.mxu0 %v478
    %862 = vmatprep.subr.mxu0 %v482
    %863 = vmatpush1.msra.mxu0 %v481
    %864 = vmatprep.subr.mxu0 %v485
    %865 = vmatpush1.msra.mxu0 %v484
    %866 = vmatprep.subr.mxu0 %v488
    %867 = vmatpush1.msra.mxu0 %v487
    %868 = vmatprep.subr.mxu0 %v491
    %869 = vmatpush1.msra.mxu0 %v490
    %870 = vmatprep.subr.mxu0 %v494
    %871 = vmatpush1.msra.mxu0 %v493
    %872 = vmatprep.subr.mxu0 %v497
    %873 = vmatpush1.msra.mxu0 %v496
    %874 = vmatprep.subr.mxu0 %v500
    %875 = vmatpush1.msra.mxu0 %v499
    %876 = vmatprep.subr.mxu0 %v503
    %877 = vmatpush1.msra.mxu0 %v502
    %878 = vmatprep.subr.mxu0 %v506
    %879 = vmatpush1.msra.mxu0 %v505
    %880 = vmatprep.subr.mxu0 %v509
    %881 = vmatpush1.msra.mxu0 %v508
    %882 = vmatprep.subr.mxu0 %v512
    %883 = vmatpush1.msra.mxu0 %v511
    %884 = vmatprep.subr.mxu0 0.0
    %885 = vmatpush1.msra.mxu0 0.0
    %886 = vmatprep.subr.mxu0 0.0
    %887 = vmatpush1.msra.mxu0 0.0
    %888 = vmatprep.subr.mxu0 0.0
    %889 = vmatpush1.msra.mxu0 0.0
    %890 = vmatprep.subr.mxu0 0.0
    %891 = vmatpush1.msra.mxu0 0.0
    %892 = vmatprep.subr.mxu0 0.0
    %893 = vmatpush1.msra.mxu0 0.0
    %894 = vmatprep.subr.mxu0 0.0
    %895 = vmatpush1.msra.mxu0 0.0
    %896 = vmatprep.subr.mxu0 0.0
    %897 = vmatpush1.msra.mxu0 0.0
    %898 = vmatprep.subr.mxu0 0.0
    %899 = vmatpush1.msra.mxu0 0.0
    %900 = vmatprep.subr.mxu0 0.0
    %901 = vmatpush1.msra.mxu0 0.0
    %902 = vmatprep.subr.mxu0 0.0
    %903 = vmatpush1.msra.mxu0 0.0
    %904 = vmatprep.subr.mxu0 0.0
    %905 = vmatpush1.msra.mxu0 0.0
    %906 = vmatprep.subr.mxu0 0.0
    %907 = vmatpush1.msra.mxu0 0.0
    %908 = vmatprep.subr.mxu0 0.0
    %909 = vmatpush1.msra.mxu0 0.0
    %910 = vmatprep.subr.mxu0 0.0
    %911 = vmatpush1.msra.mxu0 0.0
    %912 = vmatprep.subr.mxu0 0.0
    %913 = vmatpush1.msra.mxu0 0.0
    %914 = vmatprep.subr.mxu0 0.0
    %915 = vmatpush1.msra.mxu0 0.0
    %916 = vmatprep.mubr.f32.mxu0 0.0
    %917 = vmatmul.mubr.f32.gmra.mrb[0].mxu0 %v547
    %v918 = vpop.f32.mrb[0].mxu0
    %v919 = vadd.f32 0.0, %v918
    %v920 = vpop.f32.mrb[0].mxu0
    %v921 = vadd.f32 0.0, %v920
    %922 = vdwg.mxu0
    %923 = vmatprep.subr.mxu0 0.0
    %924 = vmatpush1.msra.mxu0 %v468
    %925 = vmatprep.subr.mxu0 0.0
    %926 = vmatpush1.msra.mxu0 %v471
    %927 = vmatprep.subr.mxu0 0.0
    %928 = vmatpush1.msra.mxu0 %v474
    %929 = vmatprep.subr.mxu0 0.0
    %930 = vmatpush1.msra.mxu0 %v477
    %931 = vmatprep.subr.mxu0 0.0
    %932 = vmatpush1.msra.mxu0 %v480
    %933 = vmatprep.subr.mxu0 0.0
    %934 = vmatpush1.msra.mxu0 %v483
    %935 = vmatprep.subr.mxu0 0.0
    %936 = vmatpush1.msra.mxu0 %v486
    %937 = vmatprep.subr.mxu0 0.0
    %938 = vmatpush1.msra.mxu0 %v489
    %939 = vmatprep.subr.mxu0 0.0
    %940 = vmatpush1.msra.mxu0 %v492
    %941 = vmatprep.subr.mxu0 0.0
    %942 = vmatpush1.msra.mxu0 %v495
    %943 = vmatprep.subr.mxu0 0.0
    %944 = vmatpush1.msra.mxu0 %v498
    %945 = vmatprep.subr.mxu0 0.0
    %946 = vmatpush1.msra.mxu0 %v501
    %947 = vmatprep.subr.mxu0 0.0
    %948 = vmatpush1.msra.mxu0 %v504
    %949 = vmatprep.subr.mxu0 0.0
    %950 = vmatpush1.msra.mxu0 %v507
    %951 = vmatprep.subr.mxu0 0.0
    %952 = vmatpush1.msra.mxu0 %v510
    %953 = vmatprep.subr.mxu0 0.0
    %954 = vmatpush1.msra.mxu0 %v513
    %955 = vmatprep.subr.mxu0 0.0
    %956 = vmatpush1.msra.mxu0 0.0
    %957 = vmatprep.subr.mxu0 0.0
    %958 = vmatpush1.msra.mxu0 0.0
    %959 = vmatprep.subr.mxu0 0.0
    %960 = vmatpush1.msra.mxu0 0.0
    %961 = vmatprep.subr.mxu0 0.0
    %962 = vmatpush1.msra.mxu0 0.0
    %963 = vmatprep.subr.mxu0 0.0
    %964 = vmatpush1.msra.mxu0 0.0
    %965 = vmatprep.subr.mxu0 0.0
    %966 = vmatpush1.msra.mxu0 0.0
    %967 = vmatprep.subr.mxu0 0.0
    %968 = vmatpush1.msra.mxu0 0.0
    %969 = vmatprep.subr.mxu0 0.0
    %970 = vmatpush1.msra.mxu0 0.0
    %971 = vmatprep.subr.mxu0 0.0
    %972 = vmatpush1.msra.mxu0 0.0
    %973 = vmatprep.subr.mxu0 0.0
    %974 = vmatpush1.msra.mxu0 0.0
    %975 = vmatprep.subr.mxu0 0.0
    %976 = vmatpush1.msra.mxu0 0.0
    %977 = vmatprep.subr.mxu0 0.0
    %978 = vmatpush1.msra.mxu0 0.0
    %979 = vmatprep.subr.mxu0 0.0
    %980 = vmatpush1.msra.mxu0 0.0
    %981 = vmatprep.subr.mxu0 0.0
    %982 = vmatpush1.msra.mxu0 0.0
    %983 = vmatprep.subr.mxu0 0.0
    %984 = vmatpush1.msra.mxu0 0.0
    %985 = vmatprep.subr.mxu0 0.0
    %986 = vmatpush1.msra.mxu0 0.0
    %987 = vmatprep.mubr.f32.mxu0 0.0
    %988 = vmatmul.mubr.f32.gmra.mrb[0].mxu0 %v547
    %v989 = vpop.f32.mrb[0].mxu0
    %v990 = vadd.f32 0.0, %v989
    %v991 = vpop.f32.mrb[0].mxu0
    %992 = vdwg.mxu0
    %v993 = vadd.f32 %v778, %v919
    %v994 = vxor.u32 %v993, 2147483648
    %v995 = vmul.f32 %v994, 1.442695
    %v996 = vpow.pop %v995
    %v997 = vadd.f32 %v996, 1.0
    %v998 = vrcp.pop %v997
    %v999 = vmul.f32 1.0, %v998
    %v1000 = vadd.f32 %v780, %v921
    %v1001 = vxor.u32 %v1000, 2147483648
    %v1002 = vmul.f32 %v1001, 1.442695
    %v1003 = vpow.pop %v1002
    %v1004 = vadd.f32 %v1003, 1.0
    %v1005 = vrcp.pop %v1004
    %v1006 = vmul.f32 1.0, %v1005
    %v1007 = vadd.f32 %v990, %v543
    %v1008 = vmul.f32 %v999, %v1007
    %v1009 = vadd.f32 %v849, %v1008
    %v1010 = vtanh.pop %v1009
    %v1011 = vsub.f32 1.0, %v1006
    %v1012 = vmul.f32 %v1011, %v1010
    %v1013 = vmul.f32 %v1006, %v547
    %v1014 = vadd.f32 %v1012, %v1013
    %1015 = vmatprep.subr.mxu0 %v371
    %1016 = vmatpush1.msra.mxu0 %v370
    %1017 = vmatprep.subr.mxu0 %v374
    %1018 = vmatpush1.msra.mxu0 %v373
    %1019 = vmatprep.subr.mxu0 %v377
    %1020 = vmatpush1.msra.mxu0 %v376
    %1021 = vmatprep.subr.mxu0 %v380
    %1022 = vmatpush1.msra.mxu0 %v379
    %1023 = vmatprep.subr.mxu0 %v383
    %1024 = vmatpush1.msra.mxu0 %v382
    %1025 = vmatprep.subr.mxu0 %v386
    %1026 = vmatpush1.msra.mxu0 %v385
    %1027 = vmatprep.subr.mxu0 %v389
    %1028 = vmatpush1.msra.mxu0 %v388
    %1029 = vmatprep.subr.mxu0 %v392
    %1030 = vmatpush1.msra.mxu0 %v391
    %1031 = vmatprep.subr.mxu0 %v395
    %1032 = vmatpush1.msra.mxu0 %v394
    %1033 = vmatprep.subr.mxu0 %v398
    %1034 = vmatpush1.msra.mxu0 %v397
    %1035 = vmatprep.subr.mxu0 %v401
    %1036 = vmatpush1.msra.mxu0 %v400
    %1037 = vmatprep.subr.mxu0 %v404
    %1038 = vmatpush1.msra.mxu0 %v403
    %1039 = vmatprep.subr.mxu0 %v407
    %1040 = vmatpush1.msra.mxu0 %v406
    %1041 = vmatprep.subr.mxu0 %v410
    %1042 = vmatpush1.msra.mxu0 %v409
    %1043 = vmatprep.subr.mxu0 %v413
    %1044 = vmatpush1.msra.mxu0 %v412
    %1045 = vmatprep.subr.mxu0 %v416
    %1046 = vmatpush1.msra.mxu0 %v415
    %1047 = vmatprep.subr.mxu0 0.0
    %1048 = vmatpush1.msra.mxu0 0.0
    %1049 = vmatprep.subr.mxu0 0.0
    %1050 = vmatpush1.msra.mxu0 0.0
    %1051 = vmatprep.subr.mxu0 0.0
    %1052 = vmatpush1.msra.mxu0 0.0
    %1053 = vmatprep.subr.mxu0 0.0
    %1054 = vmatpush1.msra.mxu0 0.0
    %1055 = vmatprep.subr.mxu0 0.0
    %1056 = vmatpush1.msra.mxu0 0.0
    %1057 = vmatprep.subr.mxu0 0.0
    %1058 = vmatpush1.msra.mxu0 0.0
    %1059 = vmatprep.subr.mxu0 0.0
    %1060 = vmatpush1.msra.mxu0 0.0
    %1061 = vmatprep.subr.mxu0 0.0
    %1062 = vmatpush1.msra.mxu0 0.0
    %1063 = vmatprep.subr.mxu0 0.0
    %1064 = vmatpush1.msra.mxu0 0.0
    %1065 = vmatprep.subr.mxu0 0.0
    %1066 = vmatpush1.msra.mxu0 0.0
    %1067 = vmatprep.subr.mxu0 0.0
    %1068 = vmatpush1.msra.mxu0 0.0
    %1069 = vmatprep.subr.mxu0 0.0
    %1070 = vmatpush1.msra.mxu0 0.0
    %1071 = vmatprep.subr.mxu0 0.0
    %1072 = vmatpush1.msra.mxu0 0.0
    %1073 = vmatprep.subr.mxu0 0.0
    %1074 = vmatpush1.msra.mxu0 0.0
    %1075 = vmatprep.subr.mxu0 0.0
    %1076 = vmatpush1.msra.mxu0 0.0
    %1077 = vmatprep.subr.mxu0 0.0
    %1078 = vmatpush1.msra.mxu0 0.0
    %1079 = vmatprep.mubr.f32.mxu0 0.0
    %1080 = vmatmul.mubr.f32.gmra.mrb[0].mxu0 %v710
    %v1081 = vpop.f32.mrb[0].mxu0
    %v1082 = vadd.f32 0.0, %v1081
    %v1083 = vpop.f32.mrb[0].mxu0
    %v1084 = vadd.f32 0.0, %v1083
    %1085 = vdwg.mxu0
    %1086 = vmatprep.subr.mxu0 0.0
    %1087 = vmatpush1.msra.mxu0 %v372
    %1088 = vmatprep.subr.mxu0 0.0
    %1089 = vmatpush1.msra.mxu0 %v375
    %1090 = vmatprep.subr.mxu0 0.0
    %1091 = vmatpush1.msra.mxu0 %v378
    %1092 = vmatprep.subr.mxu0 0.0
    %1093 = vmatpush1.msra.mxu0 %v381
    %1094 = vmatprep.subr.mxu0 0.0
    %1095 = vmatpush1.msra.mxu0 %v384
    %1096 = vmatprep.subr.mxu0 0.0
    %1097 = vmatpush1.msra.mxu0 %v387
    %1098 = vmatprep.subr.mxu0 0.0
    %1099 = vmatpush1.msra.mxu0 %v390
    %1100 = vmatprep.subr.mxu0 0.0
    %1101 = vmatpush1.msra.mxu0 %v393
    %1102 = vmatprep.subr.mxu0 0.0
    %1103 = vmatpush1.msra.mxu0 %v396
    %1104 = vmatprep.subr.mxu0 0.0
    %1105 = vmatpush1.msra.mxu0 %v399
    %1106 = vmatprep.subr.mxu0 0.0
    %1107 = vmatpush1.msra.mxu0 %v402
    %1108 = vmatprep.subr.mxu0 0.0
    %1109 = vmatpush1.msra.mxu0 %v405
    %1110 = vmatprep.subr.mxu0 0.0
    %1111 = vmatpush1.msra.mxu0 %v408
    %1112 = vmatprep.subr.mxu0 0.0
    %1113 = vmatpush1.msra.mxu0 %v411
    %1114 = vmatprep.subr.mxu0 0.0
    %1115 = vmatpush1.msra.mxu0 %v414
    %1116 = vmatprep.subr.mxu0 0.0
    %1117 = vmatpush1.msra.mxu0 %v417
    %1118 = vmatprep.subr.mxu0 0.0
    %1119 = vmatpush1.msra.mxu0 0.0
    %1120 = vmatprep.subr.mxu0 0.0
    %1121 = vmatpush1.msra.mxu0 0.0
    %1122 = vmatprep.subr.mxu0 0.0
    %1123 = vmatpush1.msra.mxu0 0.0
    %1124 = vmatprep.subr.mxu0 0.0
    %1125 = vmatpush1.msra.mxu0 0.0
    %1126 = vmatprep.subr.mxu0 0.0
    %1127 = vmatpush1.msra.mxu0 0.0
    %1128 = vmatprep.subr.mxu0 0.0
    %1129 = vmatpush1.msra.mxu0 0.0
    %1130 = vmatprep.subr.mxu0 0.0
    %1131 = vmatpush1.msra.mxu0 0.0
    %1132 = vmatprep.subr.mxu0 0.0
    %1133 = vmatpush1.msra.mxu0 0.0
    %1134 = vmatprep.subr.mxu0 0.0
    %1135 = vmatpush1.msra.mxu0 0.0
    %1136 = vmatprep.subr.mxu0 0.0
    %1137 = vmatpush1.msra.mxu0 0.0
    %1138 = vmatprep.subr.mxu0 0.0
    %1139 = vmatpush1.msra.mxu0 0.0
    %1140 = vmatprep.subr.mxu0 0.0
    %1141 = vmatpush1.msra.mxu0 0.0
    %1142 = vmatprep.subr.mxu0 0.0
    %1143 = vmatpush1.msra.mxu0 0.0
    %1144 = vmatprep.subr.mxu0 0.0
    %1145 = vmatpush1.msra.mxu0 0.0
    %1146 = vmatprep.subr.mxu0 0.0
    %1147 = vmatpush1.msra.mxu0 0.0
    %1148 = vmatprep.subr.mxu0 0.0
    %1149 = vmatpush1.msra.mxu0 0.0
    %1150 = vmatprep.mubr.f32.mxu0 0.0
    %1151 = vmatmul.mubr.f32.gmra.mrb[0].mxu0 %v710
    %v1152 = vpop.f32.mrb[0].mxu0
    %v1153 = vadd.f32 0.0, %v1152
    %v1154 = vpop.f32.mrb[0].mxu0
    %1155 = vdwg.mxu0
    %v1156 = vadd.f32 %v225, %v1082
    %v1157 = vxor.u32 %v1156, 2147483648
    %v1158 = vmul.f32 %v1157, 1.442695
    %v1159 = vpow.pop %v1158
    %v1160 = vadd.f32 %v1159, 1.0
    %v1161 = vrcp.pop %v1160
    %v1162 = vmul.f32 1.0, %v1161
    %v1163 = vadd.f32 %v227, %v1084
    %v1164 = vxor.u32 %v1163, 2147483648
    %v1165 = vmul.f32 %v1164, 1.442695
    %v1166 = vpow.pop %v1165
    %v1167 = vadd.f32 %v1166, 1.0
    %v1168 = vrcp.pop %v1167
    %v1169 = vmul.f32 1.0, %v1168
    %v1170 = vadd.f32 %v1153, %v536
    %v1171 = vmul.f32 %v1162, %v1170
    %v1172 = vadd.f32 %v337, %v1171
    %v1173 = vtanh.pop %v1172
    %v1174 = vsub.f32 1.0, %v1169
    %v1175 = vmul.f32 %v1174, %v1173
    %v1176 = vmul.f32 %v1169, %v710
    %v1177 = vadd.f32 %v1175, %v1176
    %1178 = vmatprep.subr.mxu0 %v419
    %1179 = vmatpush1.msra.mxu0 %v418
    %1180 = vmatprep.subr.mxu0 %v422
    %1181 = vmatpush1.msra.mxu0 %v421
    %1182 = vmatprep.subr.mxu0 %v425
    %1183 = vmatpush1.msra.mxu0 %v424
    %1184 = vmatprep.subr.mxu0 %v428
    %1185 = vmatpush1.msra.mxu0 %v427
    %1186 = vmatprep.subr.mxu0 %v431
    %1187 = vmatpush1.msra.mxu0 %v430
    %1188 = vmatprep.subr.mxu0 %v434
    %1189 = vmatpush1.msra.mxu0 %v433
    %1190 = vmatprep.subr.mxu0 %v437
    %1191 = vmatpush1.msra.mxu0 %v436
    %1192 = vmatprep.subr.mxu0 %v440
    %1193 = vmatpush1.msra.mxu0 %v439
    %1194 = vmatprep.subr.mxu0 %v443
    %1195 = vmatpush1.msra.mxu0 %v442
    %1196 = vmatprep.subr.mxu0 %v446
    %1197 = vmatpush1.msra.mxu0 %v445
    %1198 = vmatprep.subr.mxu0 %v449
    %1199 = vmatpush1.msra.mxu0 %v448
    %1200 = vmatprep.subr.mxu0 %v452
    %1201 = vmatpush1.msra.mxu0 %v451
    %1202 = vmatprep.subr.mxu0 %v455
    %1203 = vmatpush1.msra.mxu0 %v454
    %1204 = vmatprep.subr.mxu0 %v458
    %1205 = vmatpush1.msra.mxu0 %v457
    %1206 = vmatprep.subr.mxu0 %v461
    %1207 = vmatpush1.msra.mxu0 %v460
    %1208 = vmatprep.subr.mxu0 %v464
    %1209 = vmatpush1.msra.mxu0 %v463
    %1210 = vmatprep.subr.mxu0 0.0
    %1211 = vmatpush1.msra.mxu0 0.0
    %1212 = vmatprep.subr.mxu0 0.0
    %1213 = vmatpush1.msra.mxu0 0.0
    %1214 = vmatprep.subr.mxu0 0.0
    %1215 = vmatpush1.msra.mxu0 0.0
    %1216 = vmatprep.subr.mxu0 0.0
    %1217 = vmatpush1.msra.mxu0 0.0
    %1218 = vmatprep.subr.mxu0 0.0
    %1219 = vmatpush1.msra.mxu0 0.0
    %1220 = vmatprep.subr.mxu0 0.0
    %1221 = vmatpush1.msra.mxu0 0.0
    %1222 = vmatprep.subr.mxu0 0.0
    %1223 = vmatpush1.msra.mxu0 0.0
    %1224 = vmatprep.subr.mxu0 0.0
    %1225 = vmatpush1.msra.mxu0 0.0
    %1226 = vmatprep.subr.mxu0 0.0
    %1227 = vmatpush1.msra.mxu0 0.0
    %1228 = vmatprep.subr.mxu0 0.0
    %1229 = vmatpush1.msra.mxu0 0.0
    %1230 = vmatprep.subr.mxu0 0.0
    %1231 = vmatpush1.msra.mxu0 0.0
    %1232 = vmatprep.subr.mxu0 0.0
    %1233 = vmatpush1.msra.mxu0 0.0
    %1234 = vmatprep.subr.mxu0 0.0
    %1235 = vmatpush1.msra.mxu0 0.0
    %1236 = vmatprep.subr.mxu0 0.0
    %1237 = vmatpush1.msra.mxu0 0.0
    %1238 = vmatprep.subr.mxu0 0.0
    %1239 = vmatpush1.msra.mxu0 0.0
    %1240 = vmatprep.subr.mxu0 0.0
    %1241 = vmatpush1.msra.mxu0 0.0
    %1242 = vmatprep.mubr.f32.mxu0 0.0
    %1243 = vmatmul.mubr.f32.gmra.mrb[0].mxu0 %v1177
    %v1244 = vpop.f32.mrb[0].mxu0
    %v1245 = vadd.f32 %v519, %v1244
    %v1246 = vpop.f32.mrb[0].mxu0
    %v1247 = vadd.f32 %v523, %v1246
    %1248 = vdwg.mxu0
    %1249 = vmatprep.subr.mxu0 0.0
    %1250 = vmatpush1.msra.mxu0 %v420
    %1251 = vmatprep.subr.mxu0 0.0
    %1252 = vmatpush1.msra.mxu0 %v423
    %1253 = vmatprep.subr.mxu0 0.0
    %1254 = vmatpush1.msra.mxu0 %v426
    %1255 = vmatprep.subr.mxu0 0.0
    %1256 = vmatpush1.msra.mxu0 %v429
    %1257 = vmatprep.subr.mxu0 0.0
    %1258 = vmatpush1.msra.mxu0 %v432
    %1259 = vmatprep.subr.mxu0 0.0
    %1260 = vmatpush1.msra.mxu0 %v435
    %1261 = vmatprep.subr.mxu0 0.0
    %1262 = vmatpush1.msra.mxu0 %v438
    %1263 = vmatprep.subr.mxu0 0.0
    %1264 = vmatpush1.msra.mxu0 %v441
    %1265 = vmatprep.subr.mxu0 0.0
    %1266 = vmatpush1.msra.mxu0 %v444
    %1267 = vmatprep.subr.mxu0 0.0
    %1268 = vmatpush1.msra.mxu0 %v447
    %1269 = vmatprep.subr.mxu0 0.0
    %1270 = vmatpush1.msra.mxu0 %v450
    %1271 = vmatprep.subr.mxu0 0.0
    %1272 = vmatpush1.msra.mxu0 %v453
    %1273 = vmatprep.subr.mxu0 0.0
    %1274 = vmatpush1.msra.mxu0 %v456
    %1275 = vmatprep.subr.mxu0 0.0
    %1276 = vmatpush1.msra.mxu0 %v459
    %1277 = vmatprep.subr.mxu0 0.0
    %1278 = vmatpush1.msra.mxu0 %v462
    %1279 = vmatprep.subr.mxu0 0.0
    %1280 = vmatpush1.msra.mxu0 %v465
    %1281 = vmatprep.subr.mxu0 0.0
    %1282 = vmatpush1.msra.mxu0 0.0
    %1283 = vmatprep.subr.mxu0 0.0
    %1284 = vmatpush1.msra.mxu0 0.0
    %1285 = vmatprep.subr.mxu0 0.0
    %1286 = vmatpush1.msra.mxu0 0.0
    %1287 = vmatprep.subr.mxu0 0.0
    %1288 = vmatpush1.msra.mxu0 0.0
    %1289 = vmatprep.subr.mxu0 0.0
    %1290 = vmatpush1.msra.mxu0 0.0
    %1291 = vmatprep.subr.mxu0 0.0
    %1292 = vmatpush1.msra.mxu0 0.0
    %1293 = vmatprep.subr.mxu0 0.0
    %1294 = vmatpush1.msra.mxu0 0.0
    %1295 = vmatprep.subr.mxu0 0.0
    %1296 = vmatpush1.msra.mxu0 0.0
    %1297 = vmatprep.subr.mxu0 0.0
    %1298 = vmatpush1.msra.mxu0 0.0
    %1299 = vmatprep.subr.mxu0 0.0
    %1300 = vmatpush1.msra.mxu0 0.0
    %1301 = vmatprep.subr.mxu0 0.0
    %1302 = vmatpush1.msra.mxu0 0.0
    %1303 = vmatprep.subr.mxu0 0.0
    %1304 = vmatpush1.msra.mxu0 0.0
    %1305 = vmatprep.subr.mxu0 0.0
    %1306 = vmatpush1.msra.mxu0 0.0
    %1307 = vmatprep.subr.mxu0 0.0
    %1308 = vmatpush1.msra.mxu0 0.0
    %1309 = vmatprep.subr.mxu0 0.0
    %1310 = vmatpush1.msra.mxu0 0.0
    %1311 = vmatprep.subr.mxu0 0.0
    %1312 = vmatpush1.msra.mxu0 0.0
    %1313 = vmatprep.mubr.f32.mxu0 0.0
    %1314 = vmatmul.mubr.f32.gmra.mrb[0].mxu0 %v1177
    %v1315 = vpop.f32.mrb[0].mxu0
    %v1316 = vadd.f32 %v527, %v1315
    %v1317 = vpop.f32.mrb[0].mxu0
    %1318 = vdwg.mxu0
    %1319 = vmatprep.subr.mxu0 %v467
    %1320 = vmatpush1.msra.mxu0 %v466
    %1321 = vmatprep.subr.mxu0 %v470
    %1322 = vmatpush1.msra.mxu0 %v469
    %1323 = vmatprep.subr.mxu0 %v473
    %1324 = vmatpush1.msra.mxu0 %v472
    %1325 = vmatprep.subr.mxu0 %v476
    %1326 = vmatpush1.msra.mxu0 %v475
    %1327 = vmatprep.subr.mxu0 %v479
    %1328 = vmatpush1.msra.mxu0 %v478
    %1329 = vmatprep.subr.mxu0 %v482
    %1330 = vmatpush1.msra.mxu0 %v481
    %1331 = vmatprep.subr.mxu0 %v485
    %1332 = vmatpush1.msra.mxu0 %v484
    %1333 = vmatprep.subr.mxu0 %v488
    %1334 = vmatpush1.msra.mxu0 %v487
    %1335 = vmatprep.subr.mxu0 %v491
    %1336 = vmatpush1.msra.mxu0 %v490
    %1337 = vmatprep.subr.mxu0 %v494
    %1338 = vmatpush1.msra.mxu0 %v493
    %1339 = vmatprep.subr.mxu0 %v497
    %1340 = vmatpush1.msra.mxu0 %v496
    %1341 = vmatprep.subr.mxu0 %v500
    %1342 = vmatpush1.msra.mxu0 %v499
    %1343 = vmatprep.subr.mxu0 %v503
    %1344 = vmatpush1.msra.mxu0 %v502
    %1345 = vmatprep.subr.mxu0 %v506
    %1346 = vmatpush1.msra.mxu0 %v505
    %1347 = vmatprep.subr.mxu0 %v509
    %1348 = vmatpush1.msra.mxu0 %v508
    %1349 = vmatprep.subr.mxu0 %v512
    %1350 = vmatpush1.msra.mxu0 %v511
    %1351 = vmatprep.subr.mxu0 0.0
    %1352 = vmatpush1.msra.mxu0 0.0
    %1353 = vmatprep.subr.mxu0 0.0
    %1354 = vmatpush1.msra.mxu0 0.0
    %1355 = vmatprep.subr.mxu0 0.0
    %1356 = vmatpush1.msra.mxu0 0.0
    %1357 = vmatprep.subr.mxu0 0.0
    %1358 = vmatpush1.msra.mxu0 0.0
    %1359 = vmatprep.subr.mxu0 0.0
    %1360 = vmatpush1.msra.mxu0 0.0
    %1361 = vmatprep.subr.mxu0 0.0
    %1362 = vmatpush1.msra.mxu0 0.0
    %1363 = vmatprep.subr.mxu0 0.0
    %1364 = vmatpush1.msra.mxu0 0.0
    %1365 = vmatprep.subr.mxu0 0.0
    %1366 = vmatpush1.msra.mxu0 0.0
    %1367 = vmatprep.subr.mxu0 0.0
    %1368 = vmatpush1.msra.mxu0 0.0
    %1369 = vmatprep.subr.mxu0 0.0
    %1370 = vmatpush1.msra.mxu0 0.0
    %1371 = vmatprep.subr.mxu0 0.0
    %1372 = vmatpush1.msra.mxu0 0.0
    %1373 = vmatprep.subr.mxu0 0.0
    %1374 = vmatpush1.msra.mxu0 0.0
    %1375 = vmatprep.subr.mxu0 0.0
    %1376 = vmatpush1.msra.mxu0 0.0
    %1377 = vmatprep.subr.mxu0 0.0
    %1378 = vmatpush1.msra.mxu0 0.0
    %1379 = vmatprep.subr.mxu0 0.0
    %1380 = vmatpush1.msra.mxu0 0.0
    %1381 = vmatprep.subr.mxu0 0.0
    %1382 = vmatpush1.msra.mxu0 0.0
    %1383 = vmatprep.mubr.f32.mxu0 0.0
    %1384 = vmatmul.mubr.f32.gmra.mrb[0].mxu0 %v1014
    %v1385 = vpop.f32.mrb[0].mxu0
    %v1386 = vadd.f32 0.0, %v1385
    %v1387 = vpop.f32.mrb[0].mxu0
    %v1388 = vadd.f32 0.0, %v1387
    %1389 = vdwg.mxu0
    %1390 = vmatprep.subr.mxu0 0.0
    %1391 = vmatpush1.msra.mxu0 %v468
    %1392 = vmatprep.subr.mxu0 0.0
    %1393 = vmatpush1.msra.mxu0 %v471
    %1394 = vmatprep.subr.mxu0 0.0
    %1395 = vmatpush1.msra.mxu0 %v474
    %1396 = vmatprep.subr.mxu0 0.0
    %1397 = vmatpush1.msra.mxu0 %v477
    %1398 = vmatprep.subr.mxu0 0.0
    %1399 = vmatpush1.msra.mxu0 %v480
    %1400 = vmatprep.subr.mxu0 0.0
    %1401 = vmatpush1.msra.mxu0 %v483
    %1402 = vmatprep.subr.mxu0 0.0
    %1403 = vmatpush1.msra.mxu0 %v486
    %1404 = vmatprep.subr.mxu0 0.0
    %1405 = vmatpush1.msra.mxu0 %v489
    %1406 = vmatprep.subr.mxu0 0.0
    %1407 = vmatpush1.msra.mxu0 %v492
    %1408 = vmatprep.subr.mxu0 0.0
    %1409 = vmatpush1.msra.mxu0 %v495
    %1410 = vmatprep.subr.mxu0 0.0
    %1411 = vmatpush1.msra.mxu0 %v498
    %1412 = vmatprep.subr.mxu0 0.0
    %1413 = vmatpush1.msra.mxu0 %v501
    %1414 = vmatprep.subr.mxu0 0.0
    %1415 = vmatpush1.msra.mxu0 %v504
    %1416 = vmatprep.subr.mxu0 0.0
    %1417 = vmatpush1.msra.mxu0 %v507
    %1418 = vmatprep.subr.mxu0 0.0
    %1419 = vmatpush1.msra.mxu0 %v510
    %1420 = vmatprep.subr.mxu0 0.0
    %1421 = vmatpush1.msra.mxu0 %v513
    %1422 = vmatprep.subr.mxu0 0.0
    %1423 = vmatpush1.msra.mxu0 0.0
    %1424 = vmatprep.subr.mxu0 0.0
    %1425 = vmatpush1.msra.mxu0 0.0
    %1426 = vmatprep.subr.mxu0 0.0
    %1427 = vmatpush1.msra.mxu0 0.0
    %1428 = vmatprep.subr.mxu0 0.0
    %1429 = vmatpush1.msra.mxu0 0.0
    %1430 = vmatprep.subr.mxu0 0.0
    %1431 = vmatpush1.msra.mxu0 0.0
    %1432 = vmatprep.subr.mxu0 0.0
    %1433 = vmatpush1.msra.mxu0 0.0
    %1434 = vmatprep.subr.mxu0 0.0
    %1435 = vmatpush1.msra.mxu0 0.0
    %1436 = vmatprep.subr.mxu0 0.0
    %1437 = vmatpush1.msra.mxu0 0.0
    %1438 = vmatprep.subr.mxu0 0.0
    %1439 = vmatpush1.msra.mxu0 0.0
    %1440 = vmatprep.subr.mxu0 0.0
    %1441 = vmatpush1.msra.mxu0 0.0
    %1442 = vmatprep.subr.mxu0 0.0
    %1443 = vmatpush1.msra.mxu0 0.0
    %1444 = vmatprep.subr.mxu0 0.0
    %1445 = vmatpush1.msra.mxu0 0.0
    %1446 = vmatprep.subr.mxu0 0.0
    %1447 = vmatpush1.msra.mxu0 0.0
    %1448 = vmatprep.subr.mxu0 0.0
    %1449 = vmatpush1.msra.mxu0 0.0
    %1450 = vmatprep.subr.mxu0 0.0
    %1451 = vmatpush1.msra.mxu0 0.0
    %1452 = vmatprep.subr.mxu0 0.0
    %1453 = vmatpush1.msra.mxu0 0.0
    %1454 = vmatprep.mubr.f32.mxu0 0.0
    %1455 = vmatmul.mubr.f32.gmra.mrb[0].mxu0 %v1014
    %v1456 = vpop.f32.mrb[0].mxu0
    %v1457 = vadd.f32 0.0, %v1456
    %v1458 = vpop.f32.mrb[0].mxu0
    %1459 = vdwg.mxu0
    %v1460 = vadd.f32 %v1245, %v1386
    %v1461 = vxor.u32 %v1460, 2147483648
    %v1462 = vmul.f32 %v1461, 1.442695
    %v1463 = vpow.pop %v1462
    %v1464 = vadd.f32 %v1463, 1.0
    %v1465 = vrcp.pop %v1464
    %v1466 = vmul.f32 1.0, %v1465
    %v1467 = vadd.f32 %v1247, %v1388
    %v1468 = vxor.u32 %v1467, 2147483648
    %v1469 = vmul.f32 %v1468, 1.442695
    %v1470 = vpow.pop %v1469
    %v1471 = vadd.f32 %v1470, 1.0
    %v1472 = vrcp.pop %v1471
    %v1473 = vmul.f32 1.0, %v1472
    %v1474 = vadd.f32 %v1457, %v543
    %v1475 = vmul.f32 %v1466, %v1474
    %v1476 = vadd.f32 %v1316, %v1475
    %v1477 = vtanh.pop %v1476
    %v1478 = vsub.f32 1.0, %v1473
    %v1479 = vmul.f32 %v1478, %v1477
    %v1480 = vmul.f32 %v1473, %v1014
    %v1481 = vadd.f32 %v1479, %v1480
    %1482 = vmatprep.subr.mxu0 %v371
    %1483 = vmatpush1.msra.mxu0 %v370
    %1484 = vmatprep.subr.mxu0 %v374
    %1485 = vmatpush1.msra.mxu0 %v373
    %1486 = vmatprep.subr.mxu0 %v377
    %1487 = vmatpush1.msra.mxu0 %v376
    %1488 = vmatprep.subr.mxu0 %v380
    %1489 = vmatpush1.msra.mxu0 %v379
    %1490 = vmatprep.subr.mxu0 %v383
    %1491 = vmatpush1.msra.mxu0 %v382
    %1492 = vmatprep.subr.mxu0 %v386
    %1493 = vmatpush1.msra.mxu0 %v385
    %1494 = vmatprep.subr.mxu0 %v389
    %1495 = vmatpush1.msra.mxu0 %v388
    %1496 = vmatprep.subr.mxu0 %v392
    %1497 = vmatpush1.msra.mxu0 %v391
    %1498 = vmatprep.subr.mxu0 %v395
    %1499 = vmatpush1.msra.mxu0 %v394
    %1500 = vmatprep.subr.mxu0 %v398
    %1501 = vmatpush1.msra.mxu0 %v397
    %1502 = vmatprep.subr.mxu0 %v401
    %1503 = vmatpush1.msra.mxu0 %v400
    %1504 = vmatprep.subr.mxu0 %v404
    %1505 = vmatpush1.msra.mxu0 %v403
    %1506 = vmatprep.subr.mxu0 %v407
    %1507 = vmatpush1.msra.mxu0 %v406
    %1508 = vmatprep.subr.mxu0 %v410
    %1509 = vmatpush1.msra.mxu0 %v409
    %1510 = vmatprep.subr.mxu0 %v413
    %1511 = vmatpush1.msra.mxu0 %v412
    %1512 = vmatprep.subr.mxu0 %v416
    %1513 = vmatpush1.msra.mxu0 %v415
    %1514 = vmatprep.subr.mxu0 0.0
    %1515 = vmatpush1.msra.mxu0 0.0
    %1516 = vmatprep.subr.mxu0 0.0
    %1517 = vmatpush1.msra.mxu0 0.0
    %1518 = vmatprep.subr.mxu0 0.0
    %1519 = vmatpush1.msra.mxu0 0.0
    %1520 = vmatprep.subr.mxu0 0.0
    %1521 = vmatpush1.msra.mxu0 0.0
    %1522 = vmatprep.subr.mxu0 0.0
    %1523 = vmatpush1.msra.mxu0 0.0
    %1524 = vmatprep.subr.mxu0 0.0
    %1525 = vmatpush1.msra.mxu0 0.0
    %1526 = vmatprep.subr.mxu0 0.0
    %1527 = vmatpush1.msra.mxu0 0.0
    %1528 = vmatprep.subr.mxu0 0.0
    %1529 = vmatpush1.msra.mxu0 0.0
    %1530 = vmatprep.subr.mxu0 0.0
    %1531 = vmatpush1.msra.mxu0 0.0
    %1532 = vmatprep.subr.mxu0 0.0
    %1533 = vmatpush1.msra.mxu0 0.0
    %1534 = vmatprep.subr.mxu0 0.0
    %1535 = vmatpush1.msra.mxu0 0.0
    %1536 = vmatprep.subr.mxu0 0.0
    %1537 = vmatpush1.msra.mxu0 0.0
    %1538 = vmatprep.subr.mxu0 0.0
    %1539 = vmatpush1.msra.mxu0 0.0
    %1540 = vmatprep.subr.mxu0 0.0
    %1541 = vmatpush1.msra.mxu0 0.0
    %1542 = vmatprep.subr.mxu0 0.0
    %1543 = vmatpush1.msra.mxu0 0.0
    %1544 = vmatprep.subr.mxu0 0.0
    %1545 = vmatpush1.msra.mxu0 0.0
    %1546 = vmatprep.mubr.f32.mxu0 0.0
    %1547 = vmatmul.mubr.f32.gmra.mrb[0].mxu0 %v1177
    %v1548 = vpop.f32.mrb[0].mxu0
    %v1549 = vadd.f32 0.0, %v1548
    %v1550 = vpop.f32.mrb[0].mxu0
    %v1551 = vadd.f32 0.0, %v1550
    %1552 = vdwg.mxu0
    %1553 = vmatprep.subr.mxu0 0.0
    %1554 = vmatpush1.msra.mxu0 %v372
    %1555 = vmatprep.subr.mxu0 0.0
    %1556 = vmatpush1.msra.mxu0 %v375
    %1557 = vmatprep.subr.mxu0 0.0
    %1558 = vmatpush1.msra.mxu0 %v378
    %1559 = vmatprep.subr.mxu0 0.0
    %1560 = vmatpush1.msra.mxu0 %v381
    %1561 = vmatprep.subr.mxu0 0.0
    %1562 = vmatpush1.msra.mxu0 %v384
    %1563 = vmatprep.subr.mxu0 0.0
    %1564 = vmatpush1.msra.mxu0 %v387
    %1565 = vmatprep.subr.mxu0 0.0
    %1566 = vmatpush1.msra.mxu0 %v390
    %1567 = vmatprep.subr.mxu0 0.0
    %1568 = vmatpush1.msra.mxu0 %v393
    %1569 = vmatprep.subr.mxu0 0.0
    %1570 = vmatpush1.msra.mxu0 %v396
    %1571 = vmatprep.subr.mxu0 0.0
    %1572 = vmatpush1.msra.mxu0 %v399
    %1573 = vmatprep.subr.mxu0 0.0
    %1574 = vmatpush1.msra.mxu0 %v402
    %1575 = vmatprep.subr.mxu0 0.0
    %1576 = vmatpush1.msra.mxu0 %v405
    %1577 = vmatprep.subr.mxu0 0.0
    %1578 = vmatpush1.msra.mxu0 %v408
    %1579 = vmatprep.subr.mxu0 0.0
    %1580 = vmatpush1.msra.mxu0 %v411
    %1581 = vmatprep.subr.mxu0 0.0
    %1582 = vmatpush1.msra.mxu0 %v414
    %1583 = vmatprep.subr.mxu0 0.0
    %1584 = vmatpush1.msra.mxu0 %v417
    %1585 = vmatprep.subr.mxu0 0.0
    %1586 = vmatpush1.msra.mxu0 0.0
    %1587 = vmatprep.subr.mxu0 0.0
    %1588 = vmatpush1.msra.mxu0 0.0
    %1589 = vmatprep.subr.mxu0 0.0
    %1590 = vmatpush1.msra.mxu0 0.0
    %1591 = vmatprep.subr.mxu0 0.0
    %1592 = vmatpush1.msra.mxu0 0.0
    %1593 = vmatprep.subr.mxu0 0.0
    %1594 = vmatpush1.msra.mxu0 0.0
    %1595 = vmatprep.subr.mxu0 0.0
    %1596 = vmatpush1.msra.mxu0 0.0
    %1597 = vmatprep.subr.mxu0 0.0
    %1598 = vmatpush1.msra.mxu0 0.0
    %1599 = vmatprep.subr.mxu0 0.0
    %1600 = vmatpush1.msra.mxu0 0.0
    %1601 = vmatprep.subr.mxu0 0.0
    %1602 = vmatpush1.msra.mxu0 0.0
    %1603 = vmatprep.subr.mxu0 0.0
    %1604 = vmatpush1.msra.mxu0 0.0
    %1605 = vmatprep.subr.mxu0 0.0
    %1606 = vmatpush1.msra.mxu0 0.0
    %1607 = vmatprep.subr.mxu0 0.0
    %1608 = vmatpush1.msra.mxu0 0.0
    %1609 = vmatprep.subr.mxu0 0.0
    %1610 = vmatpush1.msra.mxu0 0.0
    %1611 = vmatprep.subr.mxu0 0.0
    %1612 = vmatpush1.msra.mxu0 0.0
    %1613 = vmatprep.subr.mxu0 0.0
    %1614 = vmatpush1.msra.mxu0 0.0
    %1615 = vmatprep.subr.mxu0 0.0
    %1616 = vmatpush1.msra.mxu0 0.0
    %1617 = vmatprep.mubr.f32.mxu0 0.0
    %1618 = vmatmul.mubr.f32.gmra.mrb[0].mxu0 %v1177
    %v1619 = vpop.f32.mrb[0].mxu0
    %v1620 = vadd.f32 0.0, %v1619
    %v1621 = vpop.f32.mrb[0].mxu0
    %1622 = vdwg.mxu0
    %v1623 = vadd.f32 %v231, %v1549
    %v1624 = vxor.u32 %v1623, 2147483648
    %v1625 = vmul.f32 %v1624, 1.442695
    %v1626 = vpow.pop %v1625
    %v1627 = vadd.f32 %v1626, 1.0
    %v1628 = vrcp.pop %v1627
    %v1629 = vmul.f32 1.0, %v1628
    %v1630 = vadd.f32 %v233, %v1551
    %v1631 = vxor.u32 %v1630, 2147483648
    %v1632 = vmul.f32 %v1631, 1.442695
    %v1633 = vpow.pop %v1632
    %v1634 = vadd.f32 %v1633, 1.0
    %v1635 = vrcp.pop %v1634
    %v1636 = vmul.f32 1.0, %v1635
    %v1637 = vadd.f32 %v1620, %v536
    %v1638 = vmul.f32 %v1629, %v1637
    %v1639 = vadd.f32 %v342, %v1638
    %v1640 = vtanh.pop %v1639
    %v1641 = vsub.f32 1.0, %v1636
    %v1642 = vmul.f32 %v1641, %v1640
    %v1643 = vmul.f32 %v1636, %v1177
    %v1644 = vadd.f32 %v1642, %v1643
    %1645 = vmatprep.subr.mxu0 %v419
    %1646 = vmatpush1.msra.mxu0 %v418
    %1647 = vmatprep.subr.mxu0 %v422
    %1648 = vmatpush1.msra.mxu0 %v421
    %1649 = vmatprep.subr.mxu0 %v425
    %1650 = vmatpush1.msra.mxu0 %v424
    %1651 = vmatprep.subr.mxu0 %v428
    %1652 = vmatpush1.msra.mxu0 %v427
    %1653 = vmatprep.subr.mxu0 %v431
    %1654 = vmatpush1.msra.mxu0 %v430
    %1655 = vmatprep.subr.mxu0 %v434
    %1656 = vmatpush1.msra.mxu0 %v433
    %1657 = vmatprep.subr.mxu0 %v437
    %1658 = vmatpush1.msra.mxu0 %v436
    %1659 = vmatprep.subr.mxu0 %v440
    %1660 = vmatpush1.msra.mxu0 %v439
    %1661 = vmatprep.subr.mxu0 %v443
    %1662 = vmatpush1.msra.mxu0 %v442
    %1663 = vmatprep.subr.mxu0 %v446
    %1664 = vmatpush1.msra.mxu0 %v445
    %1665 = vmatprep.subr.mxu0 %v449
    %1666 = vmatpush1.msra.mxu0 %v448
    %1667 = vmatprep.subr.mxu0 %v452
    %1668 = vmatpush1.msra.mxu0 %v451
    %1669 = vmatprep.subr.mxu0 %v455
    %1670 = vmatpush1.msra.mxu0 %v454
    %1671 = vmatprep.subr.mxu0 %v458
    %1672 = vmatpush1.msra.mxu0 %v457
    %1673 = vmatprep.subr.mxu0 %v461
    %1674 = vmatpush1.msra.mxu0 %v460
    %1675 = vmatprep.subr.mxu0 %v464
    %1676 = vmatpush1.msra.mxu0 %v463
    %1677 = vmatprep.subr.mxu0 0.0
    %1678 = vmatpush1.msra.mxu0 0.0
    %1679 = vmatprep.subr.mxu0 0.0
    %1680 = vmatpush1.msra.mxu0 0.0
    %1681 = vmatprep.subr.mxu0 0.0
    %1682 = vmatpush1.msra.mxu0 0.0
    %1683 = vmatprep.subr.mxu0 0.0
    %1684 = vmatpush1.msra.mxu0 0.0
    %1685 = vmatprep.subr.mxu0 0.0
    %1686 = vmatpush1.msra.mxu0 0.0
    %1687 = vmatprep.subr.mxu0 0.0
    %1688 = vmatpush1.msra.mxu0 0.0
    %1689 = vmatprep.subr.mxu0 0.0
    %1690 = vmatpush1.msra.mxu0 0.0
    %1691 = vmatprep.subr.mxu0 0.0
    %1692 = vmatpush1.msra.mxu0 0.0
    %1693 = vmatprep.subr.mxu0 0.0
    %1694 = vmatpush1.msra.mxu0 0.0
    %1695 = vmatprep.subr.mxu0 0.0
    %1696 = vmatpush1.msra.mxu0 0.0
    %1697 = vmatprep.subr.mxu0 0.0
    %1698 = vmatpush1.msra.mxu0 0.0
    %1699 = vmatprep.subr.mxu0 0.0
    %1700 = vmatpush1.msra.mxu0 0.0
    %1701 = vmatprep.subr.mxu0 0.0
    %1702 = vmatpush1.msra.mxu0 0.0
    %1703 = vmatprep.subr.mxu0 0.0
    %1704 = vmatpush1.msra.mxu0 0.0
    %1705 = vmatprep.subr.mxu0 0.0
    %1706 = vmatpush1.msra.mxu0 0.0
    %1707 = vmatprep.subr.mxu0 0.0
    %1708 = vmatpush1.msra.mxu0 0.0
    %1709 = vmatprep.mubr.f32.mxu0 0.0
    %1710 = vmatmul.mubr.f32.gmra.mrb[0].mxu0 %v1644
    %v1711 = vpop.f32.mrb[0].mxu0
    %v1712 = vadd.f32 %v519, %v1711
    %v1713 = vpop.f32.mrb[0].mxu0
    %v1714 = vadd.f32 %v523, %v1713
    %1715 = vdwg.mxu0
    %1716 = vmatprep.subr.mxu0 0.0
    %1717 = vmatpush1.msra.mxu0 %v420
    %1718 = vmatprep.subr.mxu0 0.0
    %1719 = vmatpush1.msra.mxu0 %v423
    %1720 = vmatprep.subr.mxu0 0.0
    %1721 = vmatpush1.msra.mxu0 %v426
    %1722 = vmatprep.subr.mxu0 0.0
    %1723 = vmatpush1.msra.mxu0 %v429
    %1724 = vmatprep.subr.mxu0 0.0
    %1725 = vmatpush1.msra.mxu0 %v432
    %1726 = vmatprep.subr.mxu0 0.0
    %1727 = vmatpush1.msra.mxu0 %v435
    %1728 = vmatprep.subr.mxu0 0.0
    %1729 = vmatpush1.msra.mxu0 %v438
    %1730 = vmatprep.subr.mxu0 0.0
    %1731 = vmatpush1.msra.mxu0 %v441
    %1732 = vmatprep.subr.mxu0 0.0
    %1733 = vmatpush1.msra.mxu0 %v444
    %1734 = vmatprep.subr.mxu0 0.0
    %1735 = vmatpush1.msra.mxu0 %v447
    %1736 = vmatprep.subr.mxu0 0.0
    %1737 = vmatpush1.msra.mxu0 %v450
    %1738 = vmatprep.subr.mxu0 0.0
    %1739 = vmatpush1.msra.mxu0 %v453
    %1740 = vmatprep.subr.mxu0 0.0
    %1741 = vmatpush1.msra.mxu0 %v456
    %1742 = vmatprep.subr.mxu0 0.0
    %1743 = vmatpush1.msra.mxu0 %v459
    %1744 = vmatprep.subr.mxu0 0.0
    %1745 = vmatpush1.msra.mxu0 %v462
    %1746 = vmatprep.subr.mxu0 0.0
    %1747 = vmatpush1.msra.mxu0 %v465
    %1748 = vmatprep.subr.mxu0 0.0
    %1749 = vmatpush1.msra.mxu0 0.0
    %1750 = vmatprep.subr.mxu0 0.0
    %1751 = vmatpush1.msra.mxu0 0.0
    %1752 = vmatprep.subr.mxu0 0.0
    %1753 = vmatpush1.msra.mxu0 0.0
    %1754 = vmatprep.subr.mxu0 0.0
    %1755 = vmatpush1.msra.mxu0 0.0
    %1756 = vmatprep.subr.mxu0 0.0
    %1757 = vmatpush1.msra.mxu0 0.0
    %1758 = vmatprep.subr.mxu0 0.0
    %1759 = vmatpush1.msra.mxu0 0.0
    %1760 = vmatprep.subr.mxu0 0.0
    %1761 = vmatpush1.msra.mxu0 0.0
    %1762 = vmatprep.subr.mxu0 0.0
    %1763 = vmatpush1.msra.mxu0 0.0
    %1764 = vmatprep.subr.mxu0 0.0
    %1765 = vmatpush1.msra.mxu0 0.0
    %1766 = vmatprep.subr.mxu0 0.0
    %1767 = vmatpush1.msra.mxu0 0.0
    %1768 = vmatprep.subr.mxu0 0.0
    %1769 = vmatpush1.msra.mxu0 0.0
    %1770 = vmatprep.subr.mxu0 0.0
    %1771 = vmatpush1.msra.mxu0 0.0
    %1772 = vmatprep.subr.mxu0 0.0
    %1773 = vmatpush1.msra.mxu0 0.0
    %1774 = vmatprep.subr.mxu0 0.0
    %1775 = vmatpush1.msra.mxu0 0.0
    %1776 = vmatprep.subr.mxu0 0.0
    %1777 = vmatpush1.msra.mxu0 0.0
    %1778 = vmatprep.subr.mxu0 0.0
    %1779 = vmatpush1.msra.mxu0 0.0
    %1780 = vmatprep.mubr.f32.mxu0 0.0
    %1781 = vmatmul.mubr.f32.gmra.mrb[0].mxu0 %v1644
    %v1782 = vpop.f32.mrb[0].mxu0
    %v1783 = vadd.f32 %v527, %v1782
    %v1784 = vpop.f32.mrb[0].mxu0
    %1785 = vdwg.mxu0
    %1786 = vmatprep.subr.mxu0 %v467
    %1787 = vmatpush1.msra.mxu0 %v466
    %1788 = vmatprep.subr.mxu0 %v470
    %1789 = vmatpush1.msra.mxu0 %v469
    %1790 = vmatprep.subr.mxu0 %v473
    %1791 = vmatpush1.msra.mxu0 %v472
    %1792 = vmatprep.subr.mxu0 %v476
    %1793 = vmatpush1.msra.mxu0 %v475
    %1794 = vmatprep.subr.mxu0 %v479
    %1795 = vmatpush1.msra.mxu0 %v478
    %1796 = vmatprep.subr.mxu0 %v482
    %1797 = vmatpush1.msra.mxu0 %v481
    %1798 = vmatprep.subr.mxu0 %v485
    %1799 = vmatpush1.msra.mxu0 %v484
    %1800 = vmatprep.subr.mxu0 %v488
    %1801 = vmatpush1.msra.mxu0 %v487
    %1802 = vmatprep.subr.mxu0 %v491
    %1803 = vmatpush1.msra.mxu0 %v490
    %1804 = vmatprep.subr.mxu0 %v494
    %1805 = vmatpush1.msra.mxu0 %v493
    %1806 = vmatprep.subr.mxu0 %v497
    %1807 = vmatpush1.msra.mxu0 %v496
    %1808 = vmatprep.subr.mxu0 %v500
    %1809 = vmatpush1.msra.mxu0 %v499
    %1810 = vmatprep.subr.mxu0 %v503
    %1811 = vmatpush1.msra.mxu0 %v502
    %1812 = vmatprep.subr.mxu0 %v506
    %1813 = vmatpush1.msra.mxu0 %v505
    %1814 = vmatprep.subr.mxu0 %v509
    %1815 = vmatpush1.msra.mxu0 %v508
    %1816 = vmatprep.subr.mxu0 %v512
    %1817 = vmatpush1.msra.mxu0 %v511
    %1818 = vmatprep.subr.mxu0 0.0
    %1819 = vmatpush1.msra.mxu0 0.0
    %1820 = vmatprep.subr.mxu0 0.0
    %1821 = vmatpush1.msra.mxu0 0.0
    %1822 = vmatprep.subr.mxu0 0.0
    %1823 = vmatpush1.msra.mxu0 0.0
    %1824 = vmatprep.subr.mxu0 0.0
    %1825 = vmatpush1.msra.mxu0 0.0
    %1826 = vmatprep.subr.mxu0 0.0
    %1827 = vmatpush1.msra.mxu0 0.0
    %1828 = vmatprep.subr.mxu0 0.0
    %1829 = vmatpush1.msra.mxu0 0.0
    %1830 = vmatprep.subr.mxu0 0.0
    %1831 = vmatpush1.msra.mxu0 0.0
    %1832 = vmatprep.subr.mxu0 0.0
    %1833 = vmatpush1.msra.mxu0 0.0
    %1834 = vmatprep.subr.mxu0 0.0
    %1835 = vmatpush1.msra.mxu0 0.0
    %1836 = vmatprep.subr.mxu0 0.0
    %1837 = vmatpush1.msra.mxu0 0.0
    %1838 = vmatprep.subr.mxu0 0.0
    %1839 = vmatpush1.msra.mxu0 0.0
    %1840 = vmatprep.subr.mxu0 0.0
    %1841 = vmatpush1.msra.mxu0 0.0
    %1842 = vmatprep.subr.mxu0 0.0
    %1843 = vmatpush1.msra.mxu0 0.0
    %1844 = vmatprep.subr.mxu0 0.0
    %1845 = vmatpush1.msra.mxu0 0.0
    %1846 = vmatprep.subr.mxu0 0.0
    %1847 = vmatpush1.msra.mxu0 0.0
    %1848 = vmatprep.subr.mxu0 0.0
    %1849 = vmatpush1.msra.mxu0 0.0
    %1850 = vmatprep.mubr.f32.mxu0 0.0
    %1851 = vmatmul.mubr.f32.gmra.mrb[0].mxu0 %v1481
    %v1852 = vpop.f32.mrb[0].mxu0
    %v1853 = vadd.f32 0.0, %v1852
    %v1854 = vpop.f32.mrb[0].mxu0
    %v1855 = vadd.f32 0.0, %v1854
    %1856 = vdwg.mxu0
    %1857 = vmatprep.subr.mxu0 0.0
    %1858 = vmatpush1.msra.mxu0 %v468
    %1859 = vmatprep.subr.mxu0 0.0
    %1860 = vmatpush1.msra.mxu0 %v471
    %1861 = vmatprep.subr.mxu0 0.0
    %1862 = vmatpush1.msra.mxu0 %v474
    %1863 = vmatprep.subr.mxu0 0.0
    %1864 = vmatpush1.msra.mxu0 %v477
    %1865 = vmatprep.subr.mxu0 0.0
    %1866 = vmatpush1.msra.mxu0 %v480
    %1867 = vmatprep.subr.mxu0 0.0
    %1868 = vmatpush1.msra.mxu0 %v483
    %1869 = vmatprep.subr.mxu0 0.0
    %1870 = vmatpush1.msra.mxu0 %v486
    %1871 = vmatprep.subr.mxu0 0.0
    %1872 = vmatpush1.msra.mxu0 %v489
    %1873 = vmatprep.subr.mxu0 0.0
    %1874 = vmatpush1.msra.mxu0 %v492
    %1875 = vmatprep.subr.mxu0 0.0
    %1876 = vmatpush1.msra.mxu0 %v495
    %1877 = vmatprep.subr.mxu0 0.0
    %1878 = vmatpush1.msra.mxu0 %v498
    %1879 = vmatprep.subr.mxu0 0.0
    %1880 = vmatpush1.msra.mxu0 %v501
    %1881 = vmatprep.subr.mxu0 0.0
    %1882 = vmatpush1.msra.mxu0 %v504
    %1883 = vmatprep.subr.mxu0 0.0
    %1884 = vmatpush1.msra.mxu0 %v507
    %1885 = vmatprep.subr.mxu0 0.0
    %1886 = vmatpush1.msra.mxu0 %v510
    %1887 = vmatprep.subr.mxu0 0.0
    %1888 = vmatpush1.msra.mxu0 %v513
    %1889 = vmatprep.subr.mxu0 0.0
    %1890 = vmatpush1.msra.mxu0 0.0
    %1891 = vmatprep.subr.mxu0 0.0
    %1892 = vmatpush1.msra.mxu0 0.0
    %1893 = vmatprep.subr.mxu0 0.0
    %1894 = vmatpush1.msra.mxu0 0.0
    %1895 = vmatprep.subr.mxu0 0.0
    %1896 = vmatpush1.msra.mxu0 0.0
    %1897 = vmatprep.subr.mxu0 0.0
    %1898 = vmatpush1.msra.mxu0 0.0
    %1899 = vmatprep.subr.mxu0 0.0
    %1900 = vmatpush1.msra.mxu0 0.0
    %1901 = vmatprep.subr.mxu0 0.0
    %1902 = vmatpush1.msra.mxu0 0.0
    %1903 = vmatprep.subr.mxu0 0.0
    %1904 = vmatpush1.msra.mxu0 0.0
    %1905 = vmatprep.subr.mxu0 0.0
    %1906 = vmatpush1.msra.mxu0 0.0
    %1907 = vmatprep.subr.mxu0 0.0
    %1908 = vmatpush1.msra.mxu0 0.0
    %1909 = vmatprep.subr.mxu0 0.0
    %1910 = vmatpush1.msra.mxu0 0.0
    %1911 = vmatprep.subr.mxu0 0.0
    %1912 = vmatpush1.msra.mxu0 0.0
    %1913 = vmatprep.subr.mxu0 0.0
    %1914 = vmatpush1.msra.mxu0 0.0
    %1915 = vmatprep.subr.mxu0 0.0
    %1916 = vmatpush1.msra.mxu0 0.0
    %1917 = vmatprep.subr.mxu0 0.0
    %1918 = vmatpush1.msra.mxu0 0.0
    %1919 = vmatprep.subr.mxu0 0.0
    %1920 = vmatpush1.msra.mxu0 0.0
    %1921 = vmatprep.mubr.f32.mxu0 0.0
    %1922 = vmatmul.mubr.f32.gmra.mrb[0].mxu0 %v1481
    %v1923 = vpop.f32.mrb[0].mxu0
    %v1924 = vadd.f32 0.0, %v1923
    %v1925 = vpop.f32.mrb[0].mxu0
    %1926 = vdwg.mxu0
    %v1927 = vadd.f32 %v1712, %v1853
    %v1928 = vxor.u32 %v1927, 2147483648
    %v1929 = vmul.f32 %v1928, 1.442695
    %v1930 = vpow.pop %v1929
    %v1931 = vadd.f32 %v1930, 1.0
    %v1932 = vrcp.pop %v1931
    %v1933 = vmul.f32 1.0, %v1932
    %v1934 = vadd.f32 %v1714, %v1855
    %v1935 = vxor.u32 %v1934, 2147483648
    %v1936 = vmul.f32 %v1935, 1.442695
    %v1937 = vpow.pop %v1936
    %v1938 = vadd.f32 %v1937, 1.0
    %v1939 = vrcp.pop %v1938
    %v1940 = vmul.f32 1.0, %v1939
    %v1941 = vadd.f32 %v1924, %v543
    %v1942 = vmul.f32 %v1933, %v1941
    %v1943 = vadd.f32 %v1783, %v1942
    %v1944 = vtanh.pop %v1943
    %v1945 = vsub.f32 1.0, %v1940
    %v1946 = vmul.f32 %v1945, %v1944
    %v1947 = vmul.f32 %v1940, %v1481
    %v1948 = vadd.f32 %v1946, %v1947
    %1949 = vmatprep.subr.mxu0 %v371
    %1950 = vmatpush1.msra.mxu0 %v370
    %1951 = vmatprep.subr.mxu0 %v374
    %1952 = vmatpush1.msra.mxu0 %v373
    %1953 = vmatprep.subr.mxu0 %v377
    %1954 = vmatpush1.msra.mxu0 %v376
    %1955 = vmatprep.subr.mxu0 %v380
    %1956 = vmatpush1.msra.mxu0 %v379
    %1957 = vmatprep.subr.mxu0 %v383
    %1958 = vmatpush1.msra.mxu0 %v382
    %1959 = vmatprep.subr.mxu0 %v386
    %1960 = vmatpush1.msra.mxu0 %v385
    %1961 = vmatprep.subr.mxu0 %v389
    %1962 = vmatpush1.msra.mxu0 %v388
    %1963 = vmatprep.subr.mxu0 %v392
    %1964 = vmatpush1.msra.mxu0 %v391
    %1965 = vmatprep.subr.mxu0 %v395
    %1966 = vmatpush1.msra.mxu0 %v394
    %1967 = vmatprep.subr.mxu0 %v398
    %1968 = vmatpush1.msra.mxu0 %v397
    %1969 = vmatprep.subr.mxu0 %v401
    %1970 = vmatpush1.msra.mxu0 %v400
    %1971 = vmatprep.subr.mxu0 %v404
    %1972 = vmatpush1.msra.mxu0 %v403
    %1973 = vmatprep.subr.mxu0 %v407
    %1974 = vmatpush1.msra.mxu0 %v406
    %1975 = vmatprep.subr.mxu0 %v410
    %1976 = vmatpush1.msra.mxu0 %v409
    %1977 = vmatprep.subr.mxu0 %v413
    %1978 = vmatpush1.msra.mxu0 %v412
    %1979 = vmatprep.subr.mxu0 %v416
    %1980 = vmatpush1.msra.mxu0 %v415
    %1981 = vmatprep.subr.mxu0 0.0
    %1982 = vmatpush1.msra.mxu0 0.0
    %1983 = vmatprep.subr.mxu0 0.0
    %1984 = vmatpush1.msra.mxu0 0.0
    %1985 = vmatprep.subr.mxu0 0.0
    %1986 = vmatpush1.msra.mxu0 0.0
    %1987 = vmatprep.subr.mxu0 0.0
    %1988 = vmatpush1.msra.mxu0 0.0
    %1989 = vmatprep.subr.mxu0 0.0
    %1990 = vmatpush1.msra.mxu0 0.0
    %1991 = vmatprep.subr.mxu0 0.0
    %1992 = vmatpush1.msra.mxu0 0.0
    %1993 = vmatprep.subr.mxu0 0.0
    %1994 = vmatpush1.msra.mxu0 0.0
    %1995 = vmatprep.subr.mxu0 0.0
    %1996 = vmatpush1.msra.mxu0 0.0
    %1997 = vmatprep.subr.mxu0 0.0
    %1998 = vmatpush1.msra.mxu0 0.0
    %1999 = vmatprep.subr.mxu0 0.0
    %2000 = vmatpush1.msra.mxu0 0.0
    %2001 = vmatprep.subr.mxu0 0.0
    %2002 = vmatpush1.msra.mxu0 0.0
    %2003 = vmatprep.subr.mxu0 0.0
    %2004 = vmatpush1.msra.mxu0 0.0
    %2005 = vmatprep.subr.mxu0 0.0
    %2006 = vmatpush1.msra.mxu0 0.0
    %2007 = vmatprep.subr.mxu0 0.0
    %2008 = vmatpush1.msra.mxu0 0.0
    %2009 = vmatprep.subr.mxu0 0.0
    %2010 = vmatpush1.msra.mxu0 0.0
    %2011 = vmatprep.subr.mxu0 0.0
    %2012 = vmatpush1.msra.mxu0 0.0
    %2013 = vmatprep.mubr.f32.mxu0 0.0
    %2014 = vmatmul.mubr.f32.gmra.mrb[0].mxu0 %v1644
    %v2015 = vpop.f32.mrb[0].mxu0
    %v2016 = vadd.f32 0.0, %v2015
    %v2017 = vpop.f32.mrb[0].mxu0
    %v2018 = vadd.f32 0.0, %v2017
    %2019 = vdwg.mxu0
    %2020 = vmatprep.subr.mxu0 0.0
    %2021 = vmatpush1.msra.mxu0 %v372
    %2022 = vmatprep.subr.mxu0 0.0
    %2023 = vmatpush1.msra.mxu0 %v375
    %2024 = vmatprep.subr.mxu0 0.0
    %2025 = vmatpush1.msra.mxu0 %v378
    %2026 = vmatprep.subr.mxu0 0.0
    %2027 = vmatpush1.msra.mxu0 %v381
    %2028 = vmatprep.subr.mxu0 0.0
    %2029 = vmatpush1.msra.mxu0 %v384
    %2030 = vmatprep.subr.mxu0 0.0
    %2031 = vmatpush1.msra.mxu0 %v387
    %2032 = vmatprep.subr.mxu0 0.0
    %2033 = vmatpush1.msra.mxu0 %v390
    %2034 = vmatprep.subr.mxu0 0.0
    %2035 = vmatpush1.msra.mxu0 %v393
    %2036 = vmatprep.subr.mxu0 0.0
    %2037 = vmatpush1.msra.mxu0 %v396
    %2038 = vmatprep.subr.mxu0 0.0
    %2039 = vmatpush1.msra.mxu0 %v399
    %2040 = vmatprep.subr.mxu0 0.0
    %2041 = vmatpush1.msra.mxu0 %v402
    %2042 = vmatprep.subr.mxu0 0.0
    %2043 = vmatpush1.msra.mxu0 %v405
    %2044 = vmatprep.subr.mxu0 0.0
    %2045 = vmatpush1.msra.mxu0 %v408
    %2046 = vmatprep.subr.mxu0 0.0
    %2047 = vmatpush1.msra.mxu0 %v411
    %2048 = vmatprep.subr.mxu0 0.0
    %2049 = vmatpush1.msra.mxu0 %v414
    %2050 = vmatprep.subr.mxu0 0.0
    %2051 = vmatpush1.msra.mxu0 %v417
    %2052 = vmatprep.subr.mxu0 0.0
    %2053 = vmatpush1.msra.mxu0 0.0
    %2054 = vmatprep.subr.mxu0 0.0
    %2055 = vmatpush1.msra.mxu0 0.0
    %2056 = vmatprep.subr.mxu0 0.0
    %2057 = vmatpush1.msra.mxu0 0.0
    %2058 = vmatprep.subr.mxu0 0.0
    %2059 = vmatpush1.msra.mxu0 0.0
    %2060 = vmatprep.subr.mxu0 0.0
    %2061 = vmatpush1.msra.mxu0 0.0
    %2062 = vmatprep.subr.mxu0 0.0
    %2063 = vmatpush1.msra.mxu0 0.0
    %2064 = vmatprep.subr.mxu0 0.0
    %2065 = vmatpush1.msra.mxu0 0.0
    %2066 = vmatprep.subr.mxu0 0.0
    %2067 = vmatpush1.msra.mxu0 0.0
    %2068 = vmatprep.subr.mxu0 0.0
    %2069 = vmatpush1.msra.mxu0 0.0
    %2070 = vmatprep.subr.mxu0 0.0
    %2071 = vmatpush1.msra.mxu0 0.0
    %2072 = vmatprep.subr.mxu0 0.0
    %2073 = vmatpush1.msra.mxu0 0.0
    %2074 = vmatprep.subr.mxu0 0.0
    %2075 = vmatpush1.msra.mxu0 0.0
    %2076 = vmatprep.subr.mxu0 0.0
    %2077 = vmatpush1.msra.mxu0 0.0
    %2078 = vmatprep.subr.mxu0 0.0
    %2079 = vmatpush1.msra.mxu0 0.0
    %2080 = vmatprep.subr.mxu0 0.0
    %2081 = vmatpush1.msra.mxu0 0.0
    %2082 = vmatprep.subr.mxu0 0.0
    %2083 = vmatpush1.msra.mxu0 0.0
    %2084 = vmatprep.mubr.f32.mxu0 0.0
    %2085 = vmatmul.mubr.f32.gmra.mrb[0].mxu0 %v1644
    %v2086 = vpop.f32.mrb[0].mxu0
    %v2087 = vadd.f32 0.0, %v2086
    %v2088 = vpop.f32.mrb[0].mxu0
    %2089 = vdwg.mxu0
    %v2090 = vadd.f32 %v237, %v2016
    %v2091 = vxor.u32 %v2090, 2147483648
    %v2092 = vmul.f32 %v2091, 1.442695
    %v2093 = vpow.pop %v2092
    %v2094 = vadd.f32 %v2093, 1.0
    %v2095 = vrcp.pop %v2094
    %v2096 = vmul.f32 1.0, %v2095
    %v2097 = vadd.f32 %v239, %v2018
    %v2098 = vxor.u32 %v2097, 2147483648
    %v2099 = vmul.f32 %v2098, 1.442695
    %v2100 = vpow.pop %v2099
    %v2101 = vadd.f32 %v2100, 1.0
    %v2102 = vrcp.pop %v2101
    %v2103 = vmul.f32 1.0, %v2102
    %v2104 = vadd.f32 %v2087, %v536
    %v2105 = vmul.f32 %v2096, %v2104
    %v2106 = vadd.f32 %v347, %v2105
    %v2107 = vtanh.pop %v2106
    %v2108 = vsub.f32 1.0, %v2103
    %v2109 = vmul.f32 %v2108, %v2107
    %v2110 = vmul.f32 %v2103, %v1644
    %v2111 = vadd.f32 %v2109, %v2110
    %2112 = vmatprep.subr.mxu0 %v419
    %2113 = vmatpush1.msra.mxu0 %v418
    %2114 = vmatprep.subr.mxu0 %v422
    %2115 = vmatpush1.msra.mxu0 %v421
    %2116 = vmatprep.subr.mxu0 %v425
    %2117 = vmatpush1.msra.mxu0 %v424
    %2118 = vmatprep.subr.mxu0 %v428
    %2119 = vmatpush1.msra.mxu0 %v427
    %2120 = vmatprep.subr.mxu0 %v431
    %2121 = vmatpush1.msra.mxu0 %v430
    %2122 = vmatprep.subr.mxu0 %v434
    %2123 = vmatpush1.msra.mxu0 %v433
    %2124 = vmatprep.subr.mxu0 %v437
    %2125 = vmatpush1.msra.mxu0 %v436
    %2126 = vmatprep.subr.mxu0 %v440
    %2127 = vmatpush1.msra.mxu0 %v439
    %2128 = vmatprep.subr.mxu0 %v443
    %2129 = vmatpush1.msra.mxu0 %v442
    %2130 = vmatprep.subr.mxu0 %v446
    %2131 = vmatpush1.msra.mxu0 %v445
    %2132 = vmatprep.subr.mxu0 %v449
    %2133 = vmatpush1.msra.mxu0 %v448
    %2134 = vmatprep.subr.mxu0 %v452
    %2135 = vmatpush1.msra.mxu0 %v451
    %2136 = vmatprep.subr.mxu0 %v455
    %2137 = vmatpush1.msra.mxu0 %v454
    %2138 = vmatprep.subr.mxu0 %v458
    %2139 = vmatpush1.msra.mxu0 %v457
    %2140 = vmatprep.subr.mxu0 %v461
    %2141 = vmatpush1.msra.mxu0 %v460
    %2142 = vmatprep.subr.mxu0 %v464
    %2143 = vmatpush1.msra.mxu0 %v463
    %2144 = vmatprep.subr.mxu0 0.0
    %2145 = vmatpush1.msra.mxu0 0.0
    %2146 = vmatprep.subr.mxu0 0.0
    %2147 = vmatpush1.msra.mxu0 0.0
    %2148 = vmatprep.subr.mxu0 0.0
    %2149 = vmatpush1.msra.mxu0 0.0
    %2150 = vmatprep.subr.mxu0 0.0
    %2151 = vmatpush1.msra.mxu0 0.0
    %2152 = vmatprep.subr.mxu0 0.0
    %2153 = vmatpush1.msra.mxu0 0.0
    %2154 = vmatprep.subr.mxu0 0.0
    %2155 = vmatpush1.msra.mxu0 0.0
    %2156 = vmatprep.subr.mxu0 0.0
    %2157 = vmatpush1.msra.mxu0 0.0
    %2158 = vmatprep.subr.mxu0 0.0
    %2159 = vmatpush1.msra.mxu0 0.0
    %2160 = vmatprep.subr.mxu0 0.0
    %2161 = vmatpush1.msra.mxu0 0.0
    %2162 = vmatprep.subr.mxu0 0.0
    %2163 = vmatpush1.msra.mxu0 0.0
    %2164 = vmatprep.subr.mxu0 0.0
    %2165 = vmatpush1.msra.mxu0 0.0
    %2166 = vmatprep.subr.mxu0 0.0
    %2167 = vmatpush1.msra.mxu0 0.0
    %2168 = vmatprep.subr.mxu0 0.0
    %2169 = vmatpush1.msra.mxu0 0.0
    %2170 = vmatprep.subr.mxu0 0.0
    %2171 = vmatpush1.msra.mxu0 0.0
    %2172 = vmatprep.subr.mxu0 0.0
    %2173 = vmatpush1.msra.mxu0 0.0
    %2174 = vmatprep.subr.mxu0 0.0
    %2175 = vmatpush1.msra.mxu0 0.0
    %2176 = vmatprep.mubr.f32.mxu0 0.0
    %2177 = vmatmul.mubr.f32.gmra.mrb[0].mxu0 %v2111
    %v2178 = vpop.f32.mrb[0].mxu0
    %v2179 = vadd.f32 %v519, %v2178
    %v2180 = vpop.f32.mrb[0].mxu0
    %v2181 = vadd.f32 %v523, %v2180
    %2182 = vdwg.mxu0
    %2183 = vmatprep.subr.mxu0 0.0
    %2184 = vmatpush1.msra.mxu0 %v420
    %2185 = vmatprep.subr.mxu0 0.0
    %2186 = vmatpush1.msra.mxu0 %v423
    %2187 = vmatprep.subr.mxu0 0.0
    %2188 = vmatpush1.msra.mxu0 %v426
    %2189 = vmatprep.subr.mxu0 0.0
    %2190 = vmatpush1.msra.mxu0 %v429
    %2191 = vmatprep.subr.mxu0 0.0
    %2192 = vmatpush1.msra.mxu0 %v432
    %2193 = vmatprep.subr.mxu0 0.0
    %2194 = vmatpush1.msra.mxu0 %v435
    %2195 = vmatprep.subr.mxu0 0.0
    %2196 = vmatpush1.msra.mxu0 %v438
    %2197 = vmatprep.subr.mxu0 0.0
    %2198 = vmatpush1.msra.mxu0 %v441
    %2199 = vmatprep.subr.mxu0 0.0
    %2200 = vmatpush1.msra.mxu0 %v444
    %2201 = vmatprep.subr.mxu0 0.0
    %2202 = vmatpush1.msra.mxu0 %v447
    %2203 = vmatprep.subr.mxu0 0.0
    %2204 = vmatpush1.msra.mxu0 %v450
    %2205 = vmatprep.subr.mxu0 0.0
    %2206 = vmatpush1.msra.mxu0 %v453
    %2207 = vmatprep.subr.mxu0 0.0
    %2208 = vmatpush1.msra.mxu0 %v456
    %2209 = vmatprep.subr.mxu0 0.0
    %2210 = vmatpush1.msra.mxu0 %v459
    %2211 = vmatprep.subr.mxu0 0.0
    %2212 = vmatpush1.msra.mxu0 %v462
    %2213 = vmatprep.subr.mxu0 0.0
    %2214 = vmatpush1.msra.mxu0 %v465
    %2215 = vmatprep.subr.mxu0 0.0
    %2216 = vmatpush1.msra.mxu0 0.0
    %2217 = vmatprep.subr.mxu0 0.0
    %2218 = vmatpush1.msra.mxu0 0.0
    %2219 = vmatprep.subr.mxu0 0.0
    %2220 = vmatpush1.msra.mxu0 0.0
    %2221 = vmatprep.subr.mxu0 0.0
    %2222 = vmatpush1.msra.mxu0 0.0
    %2223 = vmatprep.subr.mxu0 0.0
    %2224 = vmatpush1.msra.mxu0 0.0
    %2225 = vmatprep.subr.mxu0 0.0
    %2226 = vmatpush1.msra.mxu0 0.0
    %2227 = vmatprep.subr.mxu0 0.0
    %2228 = vmatpush1.msra.mxu0 0.0
    %2229 = vmatprep.subr.mxu0 0.0
    %2230 = vmatpush1.msra.mxu0 0.0
    %2231 = vmatprep.subr.mxu0 0.0
    %2232 = vmatpush1.msra.mxu0 0.0
    %2233 = vmatprep.subr.mxu0 0.0
    %2234 = vmatpush1.msra.mxu0 0.0
    %2235 = vmatprep.subr.mxu0 0.0
    %2236 = vmatpush1.msra.mxu0 0.0
    %2237 = vmatprep.subr.mxu0 0.0
    %2238 = vmatpush1.msra.mxu0 0.0
    %2239 = vmatprep.subr.mxu0 0.0
    %2240 = vmatpush1.msra.mxu0 0.0
    %2241 = vmatprep.subr.mxu0 0.0
    %2242 = vmatpush1.msra.mxu0 0.0
    %2243 = vmatprep.subr.mxu0 0.0
    %2244 = vmatpush1.msra.mxu0 0.0
    %2245 = vmatprep.subr.mxu0 0.0
    %2246 = vmatpush1.msra.mxu0 0.0
    %2247 = vmatprep.mubr.f32.mxu0 0.0
    %2248 = vmatmul.mubr.f32.gmra.mrb[0].mxu0 %v2111
    %v2249 = vpop.f32.mrb[0].mxu0
    %v2250 = vadd.f32 %v527, %v2249
    %v2251 = vpop.f32.mrb[0].mxu0
    %2252 = vdwg.mxu0
    %2253 = vmatprep.subr.mxu0 %v467
    %2254 = vmatpush1.msra.mxu0 %v466
    %2255 = vmatprep.subr.mxu0 %v470
    %2256 = vmatpush1.msra.mxu0 %v469
    %2257 = vmatprep.subr.mxu0 %v473
    %2258 = vmatpush1.msra.mxu0 %v472
    %2259 = vmatprep.subr.mxu0 %v476
    %2260 = vmatpush1.msra.mxu0 %v475
    %2261 = vmatprep.subr.mxu0 %v479
    %2262 = vmatpush1.msra.mxu0 %v478
    %2263 = vmatprep.subr.mxu0 %v482
    %2264 = vmatpush1.msra.mxu0 %v481
    %2265 = vmatprep.subr.mxu0 %v485
    %2266 = vmatpush1.msra.mxu0 %v484
    %2267 = vmatprep.subr.mxu0 %v488
    %2268 = vmatpush1.msra.mxu0 %v487
    %2269 = vmatprep.subr.mxu0 %v491
    %2270 = vmatpush1.msra.mxu0 %v490
    %2271 = vmatprep.subr.mxu0 %v494
    %2272 = vmatpush1.msra.mxu0 %v493
    %2273 = vmatprep.subr.mxu0 %v497
    %2274 = vmatpush1.msra.mxu0 %v496
    %2275 = vmatprep.subr.mxu0 %v500
    %2276 = vmatpush1.msra.mxu0 %v499
    %2277 = vmatprep.subr.mxu0 %v503
    %2278 = vmatpush1.msra.mxu0 %v502
    %2279 = vmatprep.subr.mxu0 %v506
    %2280 = vmatpush1.msra.mxu0 %v505
    %2281 = vmatprep.subr.mxu0 %v509
    %2282 = vmatpush1.msra.mxu0 %v508
    %2283 = vmatprep.subr.mxu0 %v512
    %2284 = vmatpush1.msra.mxu0 %v511
    %2285 = vmatprep.subr.mxu0 0.0
    %2286 = vmatpush1.msra.mxu0 0.0
    %2287 = vmatprep.subr.mxu0 0.0
    %2288 = vmatpush1.msra.mxu0 0.0
    %2289 = vmatprep.subr.mxu0 0.0
    %2290 = vmatpush1.msra.mxu0 0.0
    %2291 = vmatprep.subr.mxu0 0.0
    %2292 = vmatpush1.msra.mxu0 0.0
    %2293 = vmatprep.subr.mxu0 0.0
    %2294 = vmatpush1.msra.mxu0 0.0
    %2295 = vmatprep.subr.mxu0 0.0
    %2296 = vmatpush1.msra.mxu0 0.0
    %2297 = vmatprep.subr.mxu0 0.0
    %2298 = vmatpush1.msra.mxu0 0.0
    %2299 = vmatprep.subr.mxu0 0.0
    %2300 = vmatpush1.msra.mxu0 0.0
    %2301 = vmatprep.subr.mxu0 0.0
    %2302 = vmatpush1.msra.mxu0 0.0
    %2303 = vmatprep.subr.mxu0 0.0
    %2304 = vmatpush1.msra.mxu0 0.0
    %2305 = vmatprep.subr.mxu0 0.0
    %2306 = vmatpush1.msra.mxu0 0.0
    %2307 = vmatprep.subr.mxu0 0.0
    %2308 = vmatpush1.msra.mxu0 0.0
    %2309 = vmatprep.subr.mxu0 0.0
    %2310 = vmatpush1.msra.mxu0 0.0
    %2311 = vmatprep.subr.mxu0 0.0
    %2312 = vmatpush1.msra.mxu0 0.0
    %2313 = vmatprep.subr.mxu0 0.0
    %2314 = vmatpush1.msra.mxu0 0.0
    %2315 = vmatprep.subr.mxu0 0.0
    %2316 = vmatpush1.msra.mxu0 0.0
    %2317 = vmatprep.mubr.f32.mxu0 0.0
    %2318 = vmatmul.mubr.f32.gmra.mrb[0].mxu0 %v1948
    %v2319 = vpop.f32.mrb[0].mxu0
    %v2320 = vadd.f32 0.0, %v2319
    %v2321 = vpop.f32.mrb[0].mxu0
    %v2322 = vadd.f32 0.0, %v2321
    %2323 = vdwg.mxu0
    %2324 = vmatprep.subr.mxu0 0.0
    %2325 = vmatpush1.msra.mxu0 %v468
    %2326 = vmatprep.subr.mxu0 0.0
    %2327 = vmatpush1.msra.mxu0 %v471
    %2328 = vmatprep.subr.mxu0 0.0
    %2329 = vmatpush1.msra.mxu0 %v474
    %2330 = vmatprep.subr.mxu0 0.0
    %2331 = vmatpush1.msra.mxu0 %v477
    %2332 = vmatprep.subr.mxu0 0.0
    %2333 = vmatpush1.msra.mxu0 %v480
    %2334 = vmatprep.subr.mxu0 0.0
    %2335 = vmatpush1.msra.mxu0 %v483
    %2336 = vmatprep.subr.mxu0 0.0
    %2337 = vmatpush1.msra.mxu0 %v486
    %2338 = vmatprep.subr.mxu0 0.0
    %2339 = vmatpush1.msra.mxu0 %v489
    %2340 = vmatprep.subr.mxu0 0.0
    %2341 = vmatpush1.msra.mxu0 %v492
    %2342 = vmatprep.subr.mxu0 0.0
    %2343 = vmatpush1.msra.mxu0 %v495
    %2344 = vmatprep.subr.mxu0 0.0
    %2345 = vmatpush1.msra.mxu0 %v498
    %2346 = vmatprep.subr.mxu0 0.0
    %2347 = vmatpush1.msra.mxu0 %v501
    %2348 = vmatprep.subr.mxu0 0.0
    %2349 = vmatpush1.msra.mxu0 %v504
    %2350 = vmatprep.subr.mxu0 0.0
    %2351 = vmatpush1.msra.mxu0 %v507
    %2352 = vmatprep.subr.mxu0 0.0
    %2353 = vmatpush1.msra.mxu0 %v510
    %2354 = vmatprep.subr.mxu0 0.0
    %2355 = vmatpush1.msra.mxu0 %v513
    %2356 = vmatprep.subr.mxu0 0.0
    %2357 = vmatpush1.msra.mxu0 0.0
    %2358 = vmatprep.subr.mxu0 0.0
    %2359 = vmatpush1.msra.mxu0 0.0
    %2360 = vmatprep.subr.mxu0 0.0
    %2361 = vmatpush1.msra.mxu0 0.0
    %2362 = vmatprep.subr.mxu0 0.0
    %2363 = vmatpush1.msra.mxu0 0.0
    %2364 = vmatprep.subr.mxu0 0.0
    %2365 = vmatpush1.msra.mxu0 0.0
    %2366 = vmatprep.subr.mxu0 0.0
    %2367 = vmatpush1.msra.mxu0 0.0
    %2368 = vmatprep.subr.mxu0 0.0
    %2369 = vmatpush1.msra.mxu0 0.0
    %2370 = vmatprep.subr.mxu0 0.0
    %2371 = vmatpush1.msra.mxu0 0.0
    %2372 = vmatprep.subr.mxu0 0.0
    %2373 = vmatpush1.msra.mxu0 0.0
    %2374 = vmatprep.subr.mxu0 0.0
    %2375 = vmatpush1.msra.mxu0 0.0
    %2376 = vmatprep.subr.mxu0 0.0
    %2377 = vmatpush1.msra.mxu0 0.0
    %2378 = vmatprep.subr.mxu0 0.0
    %2379 = vmatpush1.msra.mxu0 0.0
    %2380 = vmatprep.subr.mxu0 0.0
    %2381 = vmatpush1.msra.mxu0 0.0
    %2382 = vmatprep.subr.mxu0 0.0
    %2383 = vmatpush1.msra.mxu0 0.0
    %2384 = vmatprep.subr.mxu0 0.0
    %2385 = vmatpush1.msra.mxu0 0.0
    %2386 = vmatprep.subr.mxu0 0.0
    %2387 = vmatpush1.msra.mxu0 0.0
    %2388 = vmatprep.mubr.f32.mxu0 0.0
    %2389 = vmatmul.mubr.f32.gmra.mrb[0].mxu0 %v1948
    %v2390 = vpop.f32.mrb[0].mxu0
    %v2391 = vadd.f32 0.0, %v2390
    %v2392 = vpop.f32.mrb[0].mxu0
    %2393 = vdwg.mxu0
    %v2394 = vadd.f32 %v2179, %v2320
    %v2395 = vxor.u32 %v2394, 2147483648
    %v2396 = vmul.f32 %v2395, 1.442695
    %v2397 = vpow.pop %v2396
    %v2398 = vadd.f32 %v2397, 1.0
    %v2399 = vrcp.pop %v2398
    %v2400 = vmul.f32 1.0, %v2399
    %v2401 = vadd.f32 %v2181, %v2322
    %v2402 = vxor.u32 %v2401, 2147483648
    %v2403 = vmul.f32 %v2402, 1.442695
    %v2404 = vpow.pop %v2403
    %v2405 = vadd.f32 %v2404, 1.0
    %v2406 = vrcp.pop %v2405
    %v2407 = vmul.f32 1.0, %v2406
    %v2408 = vadd.f32 %v2391, %v543
    %v2409 = vmul.f32 %v2400, %v2408
    %v2410 = vadd.f32 %v2250, %v2409
    %v2411 = vtanh.pop %v2410
    %v2412 = vsub.f32 1.0, %v2407
    %v2413 = vmul.f32 %v2412, %v2411
    %v2414 = vmul.f32 %v2407, %v1948
    %v2415 = vadd.f32 %v2413, %v2414
    %2416 = vmatprep.subr.mxu0 %v371
    %2417 = vmatpush1.msra.mxu0 %v370
    %2418 = vmatprep.subr.mxu0 %v374
    %2419 = vmatpush1.msra.mxu0 %v373
    %2420 = vmatprep.subr.mxu0 %v377
    %2421 = vmatpush1.msra.mxu0 %v376
    %2422 = vmatprep.subr.mxu0 %v380
    %2423 = vmatpush1.msra.mxu0 %v379
    %2424 = vmatprep.subr.mxu0 %v383
    %2425 = vmatpush1.msra.mxu0 %v382
    %2426 = vmatprep.subr.mxu0 %v386
    %2427 = vmatpush1.msra.mxu0 %v385
    %2428 = vmatprep.subr.mxu0 %v389
    %2429 = vmatpush1.msra.mxu0 %v388
    %2430 = vmatprep.subr.mxu0 %v392
    %2431 = vmatpush1.msra.mxu0 %v391
    %2432 = vmatprep.subr.mxu0 %v395
    %2433 = vmatpush1.msra.mxu0 %v394
    %2434 = vmatprep.subr.mxu0 %v398
    %2435 = vmatpush1.msra.mxu0 %v397
    %2436 = vmatprep.subr.mxu0 %v401
    %2437 = vmatpush1.msra.mxu0 %v400
    %2438 = vmatprep.subr.mxu0 %v404
    %2439 = vmatpush1.msra.mxu0 %v403
    %2440 = vmatprep.subr.mxu0 %v407
    %2441 = vmatpush1.msra.mxu0 %v406
    %2442 = vmatprep.subr.mxu0 %v410
    %2443 = vmatpush1.msra.mxu0 %v409
    %2444 = vmatprep.subr.mxu0 %v413
    %2445 = vmatpush1.msra.mxu0 %v412
    %2446 = vmatprep.subr.mxu0 %v416
    %2447 = vmatpush1.msra.mxu0 %v415
    %2448 = vmatprep.subr.mxu0 0.0
    %2449 = vmatpush1.msra.mxu0 0.0
    %2450 = vmatprep.subr.mxu0 0.0
    %2451 = vmatpush1.msra.mxu0 0.0
    %2452 = vmatprep.subr.mxu0 0.0
    %2453 = vmatpush1.msra.mxu0 0.0
    %2454 = vmatprep.subr.mxu0 0.0
    %2455 = vmatpush1.msra.mxu0 0.0
    %2456 = vmatprep.subr.mxu0 0.0
    %2457 = vmatpush1.msra.mxu0 0.0
    %2458 = vmatprep.subr.mxu0 0.0
    %2459 = vmatpush1.msra.mxu0 0.0
    %2460 = vmatprep.subr.mxu0 0.0
    %2461 = vmatpush1.msra.mxu0 0.0
    %2462 = vmatprep.subr.mxu0 0.0
    %2463 = vmatpush1.msra.mxu0 0.0
    %2464 = vmatprep.subr.mxu0 0.0
    %2465 = vmatpush1.msra.mxu0 0.0
    %2466 = vmatprep.subr.mxu0 0.0
    %2467 = vmatpush1.msra.mxu0 0.0
    %2468 = vmatprep.subr.mxu0 0.0
    %2469 = vmatpush1.msra.mxu0 0.0
    %2470 = vmatprep.subr.mxu0 0.0
    %2471 = vmatpush1.msra.mxu0 0.0
    %2472 = vmatprep.subr.mxu0 0.0
    %2473 = vmatpush1.msra.mxu0 0.0
    %2474 = vmatprep.subr.mxu0 0.0
    %2475 = vmatpush1.msra.mxu0 0.0
    %2476 = vmatprep.subr.mxu0 0.0
    %2477 = vmatpush1.msra.mxu0 0.0
    %2478 = vmatprep.subr.mxu0 0.0
    %2479 = vmatpush1.msra.mxu0 0.0
    %2480 = vmatprep.mubr.f32.mxu0 0.0
    %2481 = vmatmul.mubr.f32.gmra.mrb[0].mxu0 %v2111
    %v2482 = vpop.f32.mrb[0].mxu0
    %v2483 = vadd.f32 0.0, %v2482
    %v2484 = vpop.f32.mrb[0].mxu0
    %v2485 = vadd.f32 0.0, %v2484
    %2486 = vdwg.mxu0
    %2487 = vmatprep.subr.mxu0 0.0
    %2488 = vmatpush1.msra.mxu0 %v372
    %2489 = vmatprep.subr.mxu0 0.0
    %2490 = vmatpush1.msra.mxu0 %v375
    %2491 = vmatprep.subr.mxu0 0.0
    %2492 = vmatpush1.msra.mxu0 %v378
    %2493 = vmatprep.subr.mxu0 0.0
    %2494 = vmatpush1.msra.mxu0 %v381
    %2495 = vmatprep.subr.mxu0 0.0
    %2496 = vmatpush1.msra.mxu0 %v384
    %2497 = vmatprep.subr.mxu0 0.0
    %2498 = vmatpush1.msra.mxu0 %v387
    %2499 = vmatprep.subr.mxu0 0.0
    %2500 = vmatpush1.msra.mxu0 %v390
    %2501 = vmatprep.subr.mxu0 0.0
    %2502 = vmatpush1.msra.mxu0 %v393
    %2503 = vmatprep.subr.mxu0 0.0
    %2504 = vmatpush1.msra.mxu0 %v396
    %2505 = vmatprep.subr.mxu0 0.0
    %2506 = vmatpush1.msra.mxu0 %v399
    %2507 = vmatprep.subr.mxu0 0.0
    %2508 = vmatpush1.msra.mxu0 %v402
    %2509 = vmatprep.subr.mxu0 0.0
    %2510 = vmatpush1.msra.mxu0 %v405
    %2511 = vmatprep.subr.mxu0 0.0
    %2512 = vmatpush1.msra.mxu0 %v408
    %2513 = vmatprep.subr.mxu0 0.0
    %2514 = vmatpush1.msra.mxu0 %v411
    %2515 = vmatprep.subr.mxu0 0.0
    %2516 = vmatpush1.msra.mxu0 %v414
    %2517 = vmatprep.subr.mxu0 0.0
    %2518 = vmatpush1.msra.mxu0 %v417
    %2519 = vmatprep.subr.mxu0 0.0
    %2520 = vmatpush1.msra.mxu0 0.0
    %2521 = vmatprep.subr.mxu0 0.0
    %2522 = vmatpush1.msra.mxu0 0.0
    %2523 = vmatprep.subr.mxu0 0.0
    %2524 = vmatpush1.msra.mxu0 0.0
    %2525 = vmatprep.subr.mxu0 0.0
    %2526 = vmatpush1.msra.mxu0 0.0
    %2527 = vmatprep.subr.mxu0 0.0
    %2528 = vmatpush1.msra.mxu0 0.0
    %2529 = vmatprep.subr.mxu0 0.0
    %2530 = vmatpush1.msra.mxu0 0.0
    %2531 = vmatprep.subr.mxu0 0.0
    %2532 = vmatpush1.msra.mxu0 0.0
    %2533 = vmatprep.subr.mxu0 0.0
    %2534 = vmatpush1.msra.mxu0 0.0
    %2535 = vmatprep.subr.mxu0 0.0
    %2536 = vmatpush1.msra.mxu0 0.0
    %2537 = vmatprep.subr.mxu0 0.0
    %2538 = vmatpush1.msra.mxu0 0.0
    %2539 = vmatprep.subr.mxu0 0.0
    %2540 = vmatpush1.msra.mxu0 0.0
    %2541 = vmatprep.subr.mxu0 0.0
    %2542 = vmatpush1.msra.mxu0 0.0
    %2543 = vmatprep.subr.mxu0 0.0
    %2544 = vmatpush1.msra.mxu0 0.0
    %2545 = vmatprep.subr.mxu0 0.0
    %2546 = vmatpush1.msra.mxu0 0.0
    %2547 = vmatprep.subr.mxu0 0.0
    %2548 = vmatpush1.msra.mxu0 0.0
    %2549 = vmatprep.subr.mxu0 0.0
    %2550 = vmatpush1.msra.mxu0 0.0
    %2551 = vmatprep.mubr.f32.mxu0 0.0
    %2552 = vmatmul.mubr.f32.gmra.mrb[0].mxu0 %v2111
    %v2553 = vpop.f32.mrb[0].mxu0
    %v2554 = vadd.f32 0.0, %v2553
    %v2555 = vpop.f32.mrb[0].mxu0
    %2556 = vdwg.mxu0
    %v2557 = vadd.f32 %v243, %v2483
    %v2558 = vxor.u32 %v2557, 2147483648
    %v2559 = vmul.f32 %v2558, 1.442695
    %v2560 = vpow.pop %v2559
    %v2561 = vadd.f32 %v2560, 1.0
    %v2562 = vrcp.pop %v2561
    %v2563 = vmul.f32 1.0, %v2562
    %v2564 = vadd.f32 %v245, %v2485
    %v2565 = vxor.u32 %v2564, 2147483648
    %v2566 = vmul.f32 %v2565, 1.442695
    %v2567 = vpow.pop %v2566
    %v2568 = vadd.f32 %v2567, 1.0
    %v2569 = vrcp.pop %v2568
    %v2570 = vmul.f32 1.0, %v2569
    %v2571 = vadd.f32 %v2554, %v536
    %v2572 = vmul.f32 %v2563, %v2571
    %v2573 = vadd.f32 %v352, %v2572
    %v2574 = vtanh.pop %v2573
    %v2575 = vsub.f32 1.0, %v2570
    %v2576 = vmul.f32 %v2575, %v2574
    %v2577 = vmul.f32 %v2570, %v2111
    %v2578 = vadd.f32 %v2576, %v2577
    %2579 = vmatprep.subr.mxu0 %v419
    %2580 = vmatpush1.msra.mxu0 %v418
    %2581 = vmatprep.subr.mxu0 %v422
    %2582 = vmatpush1.msra.mxu0 %v421
    %2583 = vmatprep.subr.mxu0 %v425
    %2584 = vmatpush1.msra.mxu0 %v424
    %2585 = vmatprep.subr.mxu0 %v428
    %2586 = vmatpush1.msra.mxu0 %v427
    %2587 = vmatprep.subr.mxu0 %v431
    %2588 = vmatpush1.msra.mxu0 %v430
    %2589 = vmatprep.subr.mxu0 %v434
    %2590 = vmatpush1.msra.mxu0 %v433
    %2591 = vmatprep.subr.mxu0 %v437
    %2592 = vmatpush1.msra.mxu0 %v436
    %2593 = vmatprep.subr.mxu0 %v440
    %2594 = vmatpush1.msra.mxu0 %v439
    %2595 = vmatprep.subr.mxu0 %v443
    %2596 = vmatpush1.msra.mxu0 %v442
    %2597 = vmatprep.subr.mxu0 %v446
    %2598 = vmatpush1.msra.mxu0 %v445
    %2599 = vmatprep.subr.mxu0 %v449
    %2600 = vmatpush1.msra.mxu0 %v448
    %2601 = vmatprep.subr.mxu0 %v452
    %2602 = vmatpush1.msra.mxu0 %v451
    %2603 = vmatprep.subr.mxu0 %v455
    %2604 = vmatpush1.msra.mxu0 %v454
    %2605 = vmatprep.subr.mxu0 %v458
    %2606 = vmatpush1.msra.mxu0 %v457
    %2607 = vmatprep.subr.mxu0 %v461
    %2608 = vmatpush1.msra.mxu0 %v460
    %2609 = vmatprep.subr.mxu0 %v464
    %2610 = vmatpush1.msra.mxu0 %v463
    %2611 = vmatprep.subr.mxu0 0.0
    %2612 = vmatpush1.msra.mxu0 0.0
    %2613 = vmatprep.subr.mxu0 0.0
    %2614 = vmatpush1.msra.mxu0 0.0
    %2615 = vmatprep.subr.mxu0 0.0
    %2616 = vmatpush1.msra.mxu0 0.0
    %2617 = vmatprep.subr.mxu0 0.0
    %2618 = vmatpush1.msra.mxu0 0.0
    %2619 = vmatprep.subr.mxu0 0.0
    %2620 = vmatpush1.msra.mxu0 0.0
    %2621 = vmatprep.subr.mxu0 0.0
    %2622 = vmatpush1.msra.mxu0 0.0
    %2623 = vmatprep.subr.mxu0 0.0
    %2624 = vmatpush1.msra.mxu0 0.0
    %2625 = vmatprep.subr.mxu0 0.0
    %2626 = vmatpush1.msra.mxu0 0.0
    %2627 = vmatprep.subr.mxu0 0.0
    %2628 = vmatpush1.msra.mxu0 0.0
    %2629 = vmatprep.subr.mxu0 0.0
    %2630 = vmatpush1.msra.mxu0 0.0
    %2631 = vmatprep.subr.mxu0 0.0
    %2632 = vmatpush1.msra.mxu0 0.0
    %2633 = vmatprep.subr.mxu0 0.0
    %2634 = vmatpush1.msra.mxu0 0.0
    %2635 = vmatprep.subr.mxu0 0.0
    %2636 = vmatpush1.msra.mxu0 0.0
    %2637 = vmatprep.subr.mxu0 0.0
    %2638 = vmatpush1.msra.mxu0 0.0
    %2639 = vmatprep.subr.mxu0 0.0
    %2640 = vmatpush1.msra.mxu0 0.0
    %2641 = vmatprep.subr.mxu0 0.0
    %2642 = vmatpush1.msra.mxu0 0.0
    %2643 = vmatprep.mubr.f32.mxu0 0.0
    %2644 = vmatmul.mubr.f32.gmra.mrb[0].mxu0 %v2578
    %v2645 = vpop.f32.mrb[0].mxu0
    %v2646 = vadd.f32 %v519, %v2645
    %v2647 = vpop.f32.mrb[0].mxu0
    %v2648 = vadd.f32 %v523, %v2647
    %2649 = vdwg.mxu0
    %2650 = vmatprep.subr.mxu0 0.0
    %2651 = vmatpush1.msra.mxu0 %v420
    %2652 = vmatprep.subr.mxu0 0.0
    %2653 = vmatpush1.msra.mxu0 %v423
    %2654 = vmatprep.subr.mxu0 0.0
    %2655 = vmatpush1.msra.mxu0 %v426
    %2656 = vmatprep.subr.mxu0 0.0
    %2657 = vmatpush1.msra.mxu0 %v429
    %2658 = vmatprep.subr.mxu0 0.0
    %2659 = vmatpush1.msra.mxu0 %v432
    %2660 = vmatprep.subr.mxu0 0.0
    %2661 = vmatpush1.msra.mxu0 %v435
    %2662 = vmatprep.subr.mxu0 0.0
    %2663 = vmatpush1.msra.mxu0 %v438
    %2664 = vmatprep.subr.mxu0 0.0
    %2665 = vmatpush1.msra.mxu0 %v441
    %2666 = vmatprep.subr.mxu0 0.0
    %2667 = vmatpush1.msra.mxu0 %v444
    %2668 = vmatprep.subr.mxu0 0.0
    %2669 = vmatpush1.msra.mxu0 %v447
    %2670 = vmatprep.subr.mxu0 0.0
    %2671 = vmatpush1.msra.mxu0 %v450
    %2672 = vmatprep.subr.mxu0 0.0
    %2673 = vmatpush1.msra.mxu0 %v453
    %2674 = vmatprep.subr.mxu0 0.0
    %2675 = vmatpush1.msra.mxu0 %v456
    %2676 = vmatprep.subr.mxu0 0.0
    %2677 = vmatpush1.msra.mxu0 %v459
    %2678 = vmatprep.subr.mxu0 0.0
    %2679 = vmatpush1.msra.mxu0 %v462
    %2680 = vmatprep.subr.mxu0 0.0
    %2681 = vmatpush1.msra.mxu0 %v465
    %2682 = vmatprep.subr.mxu0 0.0
    %2683 = vmatpush1.msra.mxu0 0.0
    %2684 = vmatprep.subr.mxu0 0.0
    %2685 = vmatpush1.msra.mxu0 0.0
    %2686 = vmatprep.subr.mxu0 0.0
    %2687 = vmatpush1.msra.mxu0 0.0
    %2688 = vmatprep.subr.mxu0 0.0
    %2689 = vmatpush1.msra.mxu0 0.0
    %2690 = vmatprep.subr.mxu0 0.0
    %2691 = vmatpush1.msra.mxu0 0.0
    %2692 = vmatprep.subr.mxu0 0.0
    %2693 = vmatpush1.msra.mxu0 0.0
    %2694 = vmatprep.subr.mxu0 0.0
    %2695 = vmatpush1.msra.mxu0 0.0
    %2696 = vmatprep.subr.mxu0 0.0
    %2697 = vmatpush1.msra.mxu0 0.0
    %2698 = vmatprep.subr.mxu0 0.0
    %2699 = vmatpush1.msra.mxu0 0.0
    %2700 = vmatprep.subr.mxu0 0.0
    %2701 = vmatpush1.msra.mxu0 0.0
    %2702 = vmatprep.subr.mxu0 0.0
    %2703 = vmatpush1.msra.mxu0 0.0
    %2704 = vmatprep.subr.mxu0 0.0
    %2705 = vmatpush1.msra.mxu0 0.0
    %2706 = vmatprep.subr.mxu0 0.0
    %2707 = vmatpush1.msra.mxu0 0.0
    %2708 = vmatprep.subr.mxu0 0.0
    %2709 = vmatpush1.msra.mxu0 0.0
    %2710 = vmatprep.subr.mxu0 0.0
    %2711 = vmatpush1.msra.mxu0 0.0
    %2712 = vmatprep.subr.mxu0 0.0
    %2713 = vmatpush1.msra.mxu0 0.0
    %2714 = vmatprep.mubr.f32.mxu0 0.0
    %2715 = vmatmul.mubr.f32.gmra.mrb[0].mxu0 %v2578
    %v2716 = vpop.f32.mrb[0].mxu0
    %v2717 = vadd.f32 %v527, %v2716
    %v2718 = vpop.f32.mrb[0].mxu0
    %2719 = vdwg.mxu0
    %2720 = vmatprep.subr.mxu0 %v467
    %2721 = vmatpush1.msra.mxu0 %v466
    %2722 = vmatprep.subr.mxu0 %v470
    %2723 = vmatpush1.msra.mxu0 %v469
    %2724 = vmatprep.subr.mxu0 %v473
    %2725 = vmatpush1.msra.mxu0 %v472
    %2726 = vmatprep.subr.mxu0 %v476
    %2727 = vmatpush1.msra.mxu0 %v475
    %2728 = vmatprep.subr.mxu0 %v479
    %2729 = vmatpush1.msra.mxu0 %v478
    %2730 = vmatprep.subr.mxu0 %v482
    %2731 = vmatpush1.msra.mxu0 %v481
    %2732 = vmatprep.subr.mxu0 %v485
    %2733 = vmatpush1.msra.mxu0 %v484
    %2734 = vmatprep.subr.mxu0 %v488
    %2735 = vmatpush1.msra.mxu0 %v487
    %2736 = vmatprep.subr.mxu0 %v491
    %2737 = vmatpush1.msra.mxu0 %v490
    %2738 = vmatprep.subr.mxu0 %v494
    %2739 = vmatpush1.msra.mxu0 %v493
    %2740 = vmatprep.subr.mxu0 %v497
    %2741 = vmatpush1.msra.mxu0 %v496
    %2742 = vmatprep.subr.mxu0 %v500
    %2743 = vmatpush1.msra.mxu0 %v499
    %2744 = vmatprep.subr.mxu0 %v503
    %2745 = vmatpush1.msra.mxu0 %v502
    %2746 = vmatprep.subr.mxu0 %v506
    %2747 = vmatpush1.msra.mxu0 %v505
    %2748 = vmatprep.subr.mxu0 %v509
    %2749 = vmatpush1.msra.mxu0 %v508
    %2750 = vmatprep.subr.mxu0 %v512
    %2751 = vmatpush1.msra.mxu0 %v511
    %2752 = vmatprep.subr.mxu0 0.0
    %2753 = vmatpush1.msra.mxu0 0.0
    %2754 = vmatprep.subr.mxu0 0.0
    %2755 = vmatpush1.msra.mxu0 0.0
    %2756 = vmatprep.subr.mxu0 0.0
    %2757 = vmatpush1.msra.mxu0 0.0
    %2758 = vmatprep.subr.mxu0 0.0
    %2759 = vmatpush1.msra.mxu0 0.0
    %2760 = vmatprep.subr.mxu0 0.0
    %2761 = vmatpush1.msra.mxu0 0.0
    %2762 = vmatprep.subr.mxu0 0.0
    %2763 = vmatpush1.msra.mxu0 0.0
    %2764 = vmatprep.subr.mxu0 0.0
    %2765 = vmatpush1.msra.mxu0 0.0
    %2766 = vmatprep.subr.mxu0 0.0
    %2767 = vmatpush1.msra.mxu0 0.0
    %2768 = vmatprep.subr.mxu0 0.0
    %2769 = vmatpush1.msra.mxu0 0.0
    %2770 = vmatprep.subr.mxu0 0.0
    %2771 = vmatpush1.msra.mxu0 0.0
    %2772 = vmatprep.subr.mxu0 0.0
    %2773 = vmatpush1.msra.mxu0 0.0
    %2774 = vmatprep.subr.mxu0 0.0
    %2775 = vmatpush1.msra.mxu0 0.0
    %2776 = vmatprep.subr.mxu0 0.0
    %2777 = vmatpush1.msra.mxu0 0.0
    %2778 = vmatprep.subr.mxu0 0.0
    %2779 = vmatpush1.msra.mxu0 0.0
    %2780 = vmatprep.subr.mxu0 0.0
    %2781 = vmatpush1.msra.mxu0 0.0
    %2782 = vmatprep.subr.mxu0 0.0
    %2783 = vmatpush1.msra.mxu0 0.0
    %2784 = vmatprep.mubr.f32.mxu0 0.0
    %2785 = vmatmul.mubr.f32.gmra.mrb[0].mxu0 %v2415
    %v2786 = vpop.f32.mrb[0].mxu0
    %v2787 = vadd.f32 0.0, %v2786
    %v2788 = vpop.f32.mrb[0].mxu0
    %v2789 = vadd.f32 0.0, %v2788
    %2790 = vdwg.mxu0
    %2791 = vmatprep.subr.mxu0 0.0
    %2792 = vmatpush1.msra.mxu0 %v468
    %2793 = vmatprep.subr.mxu0 0.0
    %2794 = vmatpush1.msra.mxu0 %v471
    %2795 = vmatprep.subr.mxu0 0.0
    %2796 = vmatpush1.msra.mxu0 %v474
    %2797 = vmatprep.subr.mxu0 0.0
    %2798 = vmatpush1.msra.mxu0 %v477
    %2799 = vmatprep.subr.mxu0 0.0
    %2800 = vmatpush1.msra.mxu0 %v480
    %2801 = vmatprep.subr.mxu0 0.0
    %2802 = vmatpush1.msra.mxu0 %v483
    %2803 = vmatprep.subr.mxu0 0.0
    %2804 = vmatpush1.msra.mxu0 %v486
    %2805 = vmatprep.subr.mxu0 0.0
    %2806 = vmatpush1.msra.mxu0 %v489
    %2807 = vmatprep.subr.mxu0 0.0
    %2808 = vmatpush1.msra.mxu0 %v492
    %2809 = vmatprep.subr.mxu0 0.0
    %2810 = vmatpush1.msra.mxu0 %v495
    %2811 = vmatprep.subr.mxu0 0.0
    %2812 = vmatpush1.msra.mxu0 %v498
    %2813 = vmatprep.subr.mxu0 0.0
    %2814 = vmatpush1.msra.mxu0 %v501
    %2815 = vmatprep.subr.mxu0 0.0
    %2816 = vmatpush1.msra.mxu0 %v504
    %2817 = vmatprep.subr.mxu0 0.0
    %2818 = vmatpush1.msra.mxu0 %v507
    %2819 = vmatprep.subr.mxu0 0.0
    %2820 = vmatpush1.msra.mxu0 %v510
    %2821 = vmatprep.subr.mxu0 0.0
    %2822 = vmatpush1.msra.mxu0 %v513
    %2823 = vmatprep.subr.mxu0 0.0
    %2824 = vmatpush1.msra.mxu0 0.0
    %2825 = vmatprep.subr.mxu0 0.0
    %2826 = vmatpush1.msra.mxu0 0.0
    %2827 = vmatprep.subr.mxu0 0.0
    %2828 = vmatpush1.msra.mxu0 0.0
    %2829 = vmatprep.subr.mxu0 0.0
    %2830 = vmatpush1.msra.mxu0 0.0
    %2831 = vmatprep.subr.mxu0 0.0
    %2832 = vmatpush1.msra.mxu0 0.0
    %2833 = vmatprep.subr.mxu0 0.0
    %2834 = vmatpush1.msra.mxu0 0.0
    %2835 = vmatprep.subr.mxu0 0.0
    %2836 = vmatpush1.msra.mxu0 0.0
    %2837 = vmatprep.subr.mxu0 0.0
    %2838 = vmatpush1.msra.mxu0 0.0
    %2839 = vmatprep.subr.mxu0 0.0
    %2840 = vmatpush1.msra.mxu0 0.0
    %2841 = vmatprep.subr.mxu0 0.0
    %2842 = vmatpush1.msra.mxu0 0.0
    %2843 = vmatprep.subr.mxu0 0.0
    %2844 = vmatpush1.msra.mxu0 0.0
    %2845 = vmatprep.subr.mxu0 0.0
    %2846 = vmatpush1.msra.mxu0 0.0
    %2847 = vmatprep.subr.mxu0 0.0
    %2848 = vmatpush1.msra.mxu0 0.0
    %2849 = vmatprep.subr.mxu0 0.0
    %2850 = vmatpush1.msra.mxu0 0.0
    %2851 = vmatprep.subr.mxu0 0.0
    %2852 = vmatpush1.msra.mxu0 0.0
    %2853 = vmatprep.subr.mxu0 0.0
    %2854 = vmatpush1.msra.mxu0 0.0
    %2855 = vmatprep.mubr.f32.mxu0 0.0
    %2856 = vmatmul.mubr.f32.gmra.mrb[0].mxu0 %v2415
    %v2857 = vpop.f32.mrb[0].mxu0
    %v2858 = vadd.f32 0.0, %v2857
    %v2859 = vpop.f32.mrb[0].mxu0
    %2860 = vdwg.mxu0
    %v2861 = vadd.f32 %v2646, %v2787
    %v2862 = vxor.u32 %v2861, 2147483648
    %v2863 = vmul.f32 %v2862, 1.442695
    %v2864 = vpow.pop %v2863
    %v2865 = vadd.f32 %v2864, 1.0
    %v2866 = vrcp.pop %v2865
    %v2867 = vmul.f32 1.0, %v2866
    %v2868 = vadd.f32 %v2648, %v2789
    %v2869 = vxor.u32 %v2868, 2147483648
    %v2870 = vmul.f32 %v2869, 1.442695
    %v2871 = vpow.pop %v2870
    %v2872 = vadd.f32 %v2871, 1.0
    %v2873 = vrcp.pop %v2872
    %v2874 = vmul.f32 1.0, %v2873
    %v2875 = vadd.f32 %v2858, %v543
    %v2876 = vmul.f32 %v2867, %v2875
    %v2877 = vadd.f32 %v2717, %v2876
    %v2878 = vtanh.pop %v2877
    %v2879 = vsub.f32 1.0, %v2874
    %v2880 = vmul.f32 %v2879, %v2878
    %v2881 = vmul.f32 %v2874, %v2415
    %v2882 = vadd.f32 %v2880, %v2881
    %2883 = vmatprep.subr.mxu0 %v371
    %2884 = vmatpush1.msra.mxu0 %v370
    %2885 = vmatprep.subr.mxu0 %v374
    %2886 = vmatpush1.msra.mxu0 %v373
    %2887 = vmatprep.subr.mxu0 %v377
    %2888 = vmatpush1.msra.mxu0 %v376
    %2889 = vmatprep.subr.mxu0 %v380
    %2890 = vmatpush1.msra.mxu0 %v379
    %2891 = vmatprep.subr.mxu0 %v383
    %2892 = vmatpush1.msra.mxu0 %v382
    %2893 = vmatprep.subr.mxu0 %v386
    %2894 = vmatpush1.msra.mxu0 %v385
    %2895 = vmatprep.subr.mxu0 %v389
    %2896 = vmatpush1.msra.mxu0 %v388
    %2897 = vmatprep.subr.mxu0 %v392
    %2898 = vmatpush1.msra.mxu0 %v391
    %2899 = vmatprep.subr.mxu0 %v395
    %2900 = vmatpush1.msra.mxu0 %v394
    %2901 = vmatprep.subr.mxu0 %v398
    %2902 = vmatpush1.msra.mxu0 %v397
    %2903 = vmatprep.subr.mxu0 %v401
    %2904 = vmatpush1.msra.mxu0 %v400
    %2905 = vmatprep.subr.mxu0 %v404
    %2906 = vmatpush1.msra.mxu0 %v403
    %2907 = vmatprep.subr.mxu0 %v407
    %2908 = vmatpush1.msra.mxu0 %v406
    %2909 = vmatprep.subr.mxu0 %v410
    %2910 = vmatpush1.msra.mxu0 %v409
    %2911 = vmatprep.subr.mxu0 %v413
    %2912 = vmatpush1.msra.mxu0 %v412
    %2913 = vmatprep.subr.mxu0 %v416
    %2914 = vmatpush1.msra.mxu0 %v415
    %2915 = vmatprep.subr.mxu0 0.0
    %2916 = vmatpush1.msra.mxu0 0.0
    %2917 = vmatprep.subr.mxu0 0.0
    %2918 = vmatpush1.msra.mxu0 0.0
    %2919 = vmatprep.subr.mxu0 0.0
    %2920 = vmatpush1.msra.mxu0 0.0
    %2921 = vmatprep.subr.mxu0 0.0
    %2922 = vmatpush1.msra.mxu0 0.0
    %2923 = vmatprep.subr.mxu0 0.0
    %2924 = vmatpush1.msra.mxu0 0.0
    %2925 = vmatprep.subr.mxu0 0.0
    %2926 = vmatpush1.msra.mxu0 0.0
    %2927 = vmatprep.subr.mxu0 0.0
    %2928 = vmatpush1.msra.mxu0 0.0
    %2929 = vmatprep.subr.mxu0 0.0
    %2930 = vmatpush1.msra.mxu0 0.0
    %2931 = vmatprep.subr.mxu0 0.0
    %2932 = vmatpush1.msra.mxu0 0.0
    %2933 = vmatprep.subr.mxu0 0.0
    %2934 = vmatpush1.msra.mxu0 0.0
    %2935 = vmatprep.subr.mxu0 0.0
    %2936 = vmatpush1.msra.mxu0 0.0
    %2937 = vmatprep.subr.mxu0 0.0
    %2938 = vmatpush1.msra.mxu0 0.0
    %2939 = vmatprep.subr.mxu0 0.0
    %2940 = vmatpush1.msra.mxu0 0.0
    %2941 = vmatprep.subr.mxu0 0.0
    %2942 = vmatpush1.msra.mxu0 0.0
    %2943 = vmatprep.subr.mxu0 0.0
    %2944 = vmatpush1.msra.mxu0 0.0
    %2945 = vmatprep.subr.mxu0 0.0
    %2946 = vmatpush1.msra.mxu0 0.0
    %2947 = vmatprep.mubr.f32.mxu0 0.0
    %2948 = vmatmul.mubr.f32.gmra.mrb[0].mxu0 %v2578
    %v2949 = vpop.f32.mrb[0].mxu0
    %v2950 = vadd.f32 0.0, %v2949
    %v2951 = vpop.f32.mrb[0].mxu0
    %v2952 = vadd.f32 0.0, %v2951
    %2953 = vdwg.mxu0
    %2954 = vmatprep.subr.mxu0 0.0
    %2955 = vmatpush1.msra.mxu0 %v372
    %2956 = vmatprep.subr.mxu0 0.0
    %2957 = vmatpush1.msra.mxu0 %v375
    %2958 = vmatprep.subr.mxu0 0.0
    %2959 = vmatpush1.msra.mxu0 %v378
    %2960 = vmatprep.subr.mxu0 0.0
    %2961 = vmatpush1.msra.mxu0 %v381
    %2962 = vmatprep.subr.mxu0 0.0
    %2963 = vmatpush1.msra.mxu0 %v384
    %2964 = vmatprep.subr.mxu0 0.0
    %2965 = vmatpush1.msra.mxu0 %v387
    %2966 = vmatprep.subr.mxu0 0.0
    %2967 = vmatpush1.msra.mxu0 %v390
    %2968 = vmatprep.subr.mxu0 0.0
    %2969 = vmatpush1.msra.mxu0 %v393
    %2970 = vmatprep.subr.mxu0 0.0
    %2971 = vmatpush1.msra.mxu0 %v396
    %2972 = vmatprep.subr.mxu0 0.0
    %2973 = vmatpush1.msra.mxu0 %v399
    %2974 = vmatprep.subr.mxu0 0.0
    %2975 = vmatpush1.msra.mxu0 %v402
    %2976 = vmatprep.subr.mxu0 0.0
    %2977 = vmatpush1.msra.mxu0 %v405
    %2978 = vmatprep.subr.mxu0 0.0
    %2979 = vmatpush1.msra.mxu0 %v408
    %2980 = vmatprep.subr.mxu0 0.0
    %2981 = vmatpush1.msra.mxu0 %v411
    %2982 = vmatprep.subr.mxu0 0.0
    %2983 = vmatpush1.msra.mxu0 %v414
    %2984 = vmatprep.subr.mxu0 0.0
    %2985 = vmatpush1.msra.mxu0 %v417
    %2986 = vmatprep.subr.mxu0 0.0
    %2987 = vmatpush1.msra.mxu0 0.0
    %2988 = vmatprep.subr.mxu0 0.0
    %2989 = vmatpush1.msra.mxu0 0.0
    %2990 = vmatprep.subr.mxu0 0.0
    %2991 = vmatpush1.msra.mxu0 0.0
    %2992 = vmatprep.subr.mxu0 0.0
    %2993 = vmatpush1.msra.mxu0 0.0
    %2994 = vmatprep.subr.mxu0 0.0
    %2995 = vmatpush1.msra.mxu0 0.0
    %2996 = vmatprep.subr.mxu0 0.0
    %2997 = vmatpush1.msra.mxu0 0.0
    %2998 = vmatprep.subr.mxu0 0.0
    %2999 = vmatpush1.msra.mxu0 0.0
    %3000 = vmatprep.subr.mxu0 0.0
    %3001 = vmatpush1.msra.mxu0 0.0
    %3002 = vmatprep.subr.mxu0 0.0
    %3003 = vmatpush1.msra.mxu0 0.0
    %3004 = vmatprep.subr.mxu0 0.0
    %3005 = vmatpush1.msra.mxu0 0.0
    %3006 = vmatprep.subr.mxu0 0.0
    %3007 = vmatpush1.msra.mxu0 0.0
    %3008 = vmatprep.subr.mxu0 0.0
    %3009 = vmatpush1.msra.mxu0 0.0
    %3010 = vmatprep.subr.mxu0 0.0
    %3011 = vmatpush1.msra.mxu0 0.0
    %3012 = vmatprep.subr.mxu0 0.0
    %3013 = vmatpush1.msra.mxu0 0.0
    %3014 = vmatprep.subr.mxu0 0.0
    %3015 = vmatpush1.msra.mxu0 0.0
    %3016 = vmatprep.subr.mxu0 0.0
    %3017 = vmatpush1.msra.mxu0 0.0
    %3018 = vmatprep.mubr.f32.mxu0 0.0
    %3019 = vmatmul.mubr.f32.gmra.mrb[0].mxu0 %v2578
    %v3020 = vpop.f32.mrb[0].mxu0
    %v3021 = vadd.f32 0.0, %v3020
    %v3022 = vpop.f32.mrb[0].mxu0
    %3023 = vdwg.mxu0
    %v3024 = vadd.f32 %v249, %v2950
    %v3025 = vxor.u32 %v3024, 2147483648
    %v3026 = vmul.f32 %v3025, 1.442695
    %v3027 = vpow.pop %v3026
    %v3028 = vadd.f32 %v3027, 1.0
    %v3029 = vrcp.pop %v3028
    %v3030 = vmul.f32 1.0, %v3029
    %v3031 = vadd.f32 %v251, %v2952
    %v3032 = vxor.u32 %v3031, 2147483648
    %v3033 = vmul.f32 %v3032, 1.442695
    %v3034 = vpow.pop %v3033
    %v3035 = vadd.f32 %v3034, 1.0
    %v3036 = vrcp.pop %v3035
    %v3037 = vmul.f32 1.0, %v3036
    %v3038 = vadd.f32 %v3021, %v536
    %v3039 = vmul.f32 %v3030, %v3038
    %v3040 = vadd.f32 %v357, %v3039
    %v3041 = vtanh.pop %v3040
    %v3042 = vsub.f32 1.0, %v3037
    %v3043 = vmul.f32 %v3042, %v3041
    %v3044 = vmul.f32 %v3037, %v2578
    %v3045 = vadd.f32 %v3043, %v3044
    %3046 = vmatprep.subr.mxu0 %v419
    %3047 = vmatpush1.msra.mxu0 %v418
    %3048 = vmatprep.subr.mxu0 %v422
    %3049 = vmatpush1.msra.mxu0 %v421
    %3050 = vmatprep.subr.mxu0 %v425
    %3051 = vmatpush1.msra.mxu0 %v424
    %3052 = vmatprep.subr.mxu0 %v428
    %3053 = vmatpush1.msra.mxu0 %v427
    %3054 = vmatprep.subr.mxu0 %v431
    %3055 = vmatpush1.msra.mxu0 %v430
    %3056 = vmatprep.subr.mxu0 %v434
    %3057 = vmatpush1.msra.mxu0 %v433
    %3058 = vmatprep.subr.mxu0 %v437
    %3059 = vmatpush1.msra.mxu0 %v436
    %3060 = vmatprep.subr.mxu0 %v440
    %3061 = vmatpush1.msra.mxu0 %v439
    %3062 = vmatprep.subr.mxu0 %v443
    %3063 = vmatpush1.msra.mxu0 %v442
    %3064 = vmatprep.subr.mxu0 %v446
    %3065 = vmatpush1.msra.mxu0 %v445
    %3066 = vmatprep.subr.mxu0 %v449
    %3067 = vmatpush1.msra.mxu0 %v448
    %3068 = vmatprep.subr.mxu0 %v452
    %3069 = vmatpush1.msra.mxu0 %v451
    %3070 = vmatprep.subr.mxu0 %v455
    %3071 = vmatpush1.msra.mxu0 %v454
    %3072 = vmatprep.subr.mxu0 %v458
    %3073 = vmatpush1.msra.mxu0 %v457
    %3074 = vmatprep.subr.mxu0 %v461
    %3075 = vmatpush1.msra.mxu0 %v460
    %3076 = vmatprep.subr.mxu0 %v464
    %3077 = vmatpush1.msra.mxu0 %v463
    %3078 = vmatprep.subr.mxu0 0.0
    %3079 = vmatpush1.msra.mxu0 0.0
    %3080 = vmatprep.subr.mxu0 0.0
    %3081 = vmatpush1.msra.mxu0 0.0
    %3082 = vmatprep.subr.mxu0 0.0
    %3083 = vmatpush1.msra.mxu0 0.0
    %3084 = vmatprep.subr.mxu0 0.0
    %3085 = vmatpush1.msra.mxu0 0.0
    %3086 = vmatprep.subr.mxu0 0.0
    %3087 = vmatpush1.msra.mxu0 0.0
    %3088 = vmatprep.subr.mxu0 0.0
    %3089 = vmatpush1.msra.mxu0 0.0
    %3090 = vmatprep.subr.mxu0 0.0
    %3091 = vmatpush1.msra.mxu0 0.0
    %3092 = vmatprep.subr.mxu0 0.0
    %3093 = vmatpush1.msra.mxu0 0.0
    %3094 = vmatprep.subr.mxu0 0.0
    %3095 = vmatpush1.msra.mxu0 0.0
    %3096 = vmatprep.subr.mxu0 0.0
    %3097 = vmatpush1.msra.mxu0 0.0
    %3098 = vmatprep.subr.mxu0 0.0
    %3099 = vmatpush1.msra.mxu0 0.0
    %3100 = vmatprep.subr.mxu0 0.0
    %3101 = vmatpush1.msra.mxu0 0.0
    %3102 = vmatprep.subr.mxu0 0.0
    %3103 = vmatpush1.msra.mxu0 0.0
    %3104 = vmatprep.subr.mxu0 0.0
    %3105 = vmatpush1.msra.mxu0 0.0
    %3106 = vmatprep.subr.mxu0 0.0
    %3107 = vmatpush1.msra.mxu0 0.0
    %3108 = vmatprep.subr.mxu0 0.0
    %3109 = vmatpush1.msra.mxu0 0.0
    %3110 = vmatprep.mubr.f32.mxu0 0.0
    %3111 = vmatmul.mubr.f32.gmra.mrb[0].mxu0 %v3045
    %v3112 = vpop.f32.mrb[0].mxu0
    %v3113 = vadd.f32 %v519, %v3112
    %v3114 = vpop.f32.mrb[0].mxu0
    %v3115 = vadd.f32 %v523, %v3114
    %3116 = vdwg.mxu0
    %3117 = vmatprep.subr.mxu0 0.0
    %3118 = vmatpush1.msra.mxu0 %v420
    %3119 = vmatprep.subr.mxu0 0.0
    %3120 = vmatpush1.msra.mxu0 %v423
    %3121 = vmatprep.subr.mxu0 0.0
    %3122 = vmatpush1.msra.mxu0 %v426
    %3123 = vmatprep.subr.mxu0 0.0
    %3124 = vmatpush1.msra.mxu0 %v429
    %3125 = vmatprep.subr.mxu0 0.0
    %3126 = vmatpush1.msra.mxu0 %v432
    %3127 = vmatprep.subr.mxu0 0.0
    %3128 = vmatpush1.msra.mxu0 %v435
    %3129 = vmatprep.subr.mxu0 0.0
    %3130 = vmatpush1.msra.mxu0 %v438
    %3131 = vmatprep.subr.mxu0 0.0
    %3132 = vmatpush1.msra.mxu0 %v441
    %3133 = vmatprep.subr.mxu0 0.0
    %3134 = vmatpush1.msra.mxu0 %v444
    %3135 = vmatprep.subr.mxu0 0.0
    %3136 = vmatpush1.msra.mxu0 %v447
    %3137 = vmatprep.subr.mxu0 0.0
    %3138 = vmatpush1.msra.mxu0 %v450
    %3139 = vmatprep.subr.mxu0 0.0
    %3140 = vmatpush1.msra.mxu0 %v453
    %3141 = vmatprep.subr.mxu0 0.0
    %3142 = vmatpush1.msra.mxu0 %v456
    %3143 = vmatprep.subr.mxu0 0.0
    %3144 = vmatpush1.msra.mxu0 %v459
    %3145 = vmatprep.subr.mxu0 0.0
    %3146 = vmatpush1.msra.mxu0 %v462
    %3147 = vmatprep.subr.mxu0 0.0
    %3148 = vmatpush1.msra.mxu0 %v465
    %3149 = vmatprep.subr.mxu0 0.0
    %3150 = vmatpush1.msra.mxu0 0.0
    %3151 = vmatprep.subr.mxu0 0.0
    %3152 = vmatpush1.msra.mxu0 0.0
    %3153 = vmatprep.subr.mxu0 0.0
    %3154 = vmatpush1.msra.mxu0 0.0
    %3155 = vmatprep.subr.mxu0 0.0
    %3156 = vmatpush1.msra.mxu0 0.0
    %3157 = vmatprep.subr.mxu0 0.0
    %3158 = vmatpush1.msra.mxu0 0.0
    %3159 = vmatprep.subr.mxu0 0.0
    %3160 = vmatpush1.msra.mxu0 0.0
    %3161 = vmatprep.subr.mxu0 0.0
    %3162 = vmatpush1.msra.mxu0 0.0
    %3163 = vmatprep.subr.mxu0 0.0
    %3164 = vmatpush1.msra.mxu0 0.0
    %3165 = vmatprep.subr.mxu0 0.0
    %3166 = vmatpush1.msra.mxu0 0.0
    %3167 = vmatprep.subr.mxu0 0.0
    %3168 = vmatpush1.msra.mxu0 0.0
    %3169 = vmatprep.subr.mxu0 0.0
    %3170 = vmatpush1.msra.mxu0 0.0
    %3171 = vmatprep.subr.mxu0 0.0
    %3172 = vmatpush1.msra.mxu0 0.0
    %3173 = vmatprep.subr.mxu0 0.0
    %3174 = vmatpush1.msra.mxu0 0.0
    %3175 = vmatprep.subr.mxu0 0.0
    %3176 = vmatpush1.msra.mxu0 0.0
    %3177 = vmatprep.subr.mxu0 0.0
    %3178 = vmatpush1.msra.mxu0 0.0
    %3179 = vmatprep.subr.mxu0 0.0
    %3180 = vmatpush1.msra.mxu0 0.0
    %3181 = vmatprep.mubr.f32.mxu0 0.0
    %3182 = vmatmul.mubr.f32.gmra.mrb[0].mxu0 %v3045
    %v3183 = vpop.f32.mrb[0].mxu0
    %v3184 = vadd.f32 %v527, %v3183
    %v3185 = vpop.f32.mrb[0].mxu0
    %3186 = vdwg.mxu0
    %3187 = vmatprep.subr.mxu0 %v467
    %3188 = vmatpush1.msra.mxu0 %v466
    %3189 = vmatprep.subr.mxu0 %v470
    %3190 = vmatpush1.msra.mxu0 %v469
    %3191 = vmatprep.subr.mxu0 %v473
    %3192 = vmatpush1.msra.mxu0 %v472
    %3193 = vmatprep.subr.mxu0 %v476
    %3194 = vmatpush1.msra.mxu0 %v475
    %3195 = vmatprep.subr.mxu0 %v479
    %3196 = vmatpush1.msra.mxu0 %v478
    %3197 = vmatprep.subr.mxu0 %v482
    %3198 = vmatpush1.msra.mxu0 %v481
    %3199 = vmatprep.subr.mxu0 %v485
    %3200 = vmatpush1.msra.mxu0 %v484
    %3201 = vmatprep.subr.mxu0 %v488
    %3202 = vmatpush1.msra.mxu0 %v487
    %3203 = vmatprep.subr.mxu0 %v491
    %3204 = vmatpush1.msra.mxu0 %v490
    %3205 = vmatprep.subr.mxu0 %v494
    %3206 = vmatpush1.msra.mxu0 %v493
    %3207 = vmatprep.subr.mxu0 %v497
    %3208 = vmatpush1.msra.mxu0 %v496
    %3209 = vmatprep.subr.mxu0 %v500
    %3210 = vmatpush1.msra.mxu0 %v499
    %3211 = vmatprep.subr.mxu0 %v503
    %3212 = vmatpush1.msra.mxu0 %v502
    %3213 = vmatprep.subr.mxu0 %v506
    %3214 = vmatpush1.msra.mxu0 %v505
    %3215 = vmatprep.subr.mxu0 %v509
    %3216 = vmatpush1.msra.mxu0 %v508
    %3217 = vmatprep.subr.mxu0 %v512
    %3218 = vmatpush1.msra.mxu0 %v511
    %3219 = vmatprep.subr.mxu0 0.0
    %3220 = vmatpush1.msra.mxu0 0.0
    %3221 = vmatprep.subr.mxu0 0.0
    %3222 = vmatpush1.msra.mxu0 0.0
    %3223 = vmatprep.subr.mxu0 0.0
    %3224 = vmatpush1.msra.mxu0 0.0
    %3225 = vmatprep.subr.mxu0 0.0
    %3226 = vmatpush1.msra.mxu0 0.0
    %3227 = vmatprep.subr.mxu0 0.0
    %3228 = vmatpush1.msra.mxu0 0.0
    %3229 = vmatprep.subr.mxu0 0.0
    %3230 = vmatpush1.msra.mxu0 0.0
    %3231 = vmatprep.subr.mxu0 0.0
    %3232 = vmatpush1.msra.mxu0 0.0
    %3233 = vmatprep.subr.mxu0 0.0
    %3234 = vmatpush1.msra.mxu0 0.0
    %3235 = vmatprep.subr.mxu0 0.0
    %3236 = vmatpush1.msra.mxu0 0.0
    %3237 = vmatprep.subr.mxu0 0.0
    %3238 = vmatpush1.msra.mxu0 0.0
    %3239 = vmatprep.subr.mxu0 0.0
    %3240 = vmatpush1.msra.mxu0 0.0
    %3241 = vmatprep.subr.mxu0 0.0
    %3242 = vmatpush1.msra.mxu0 0.0
    %3243 = vmatprep.subr.mxu0 0.0
    %3244 = vmatpush1.msra.mxu0 0.0
    %3245 = vmatprep.subr.mxu0 0.0
    %3246 = vmatpush1.msra.mxu0 0.0
    %3247 = vmatprep.subr.mxu0 0.0
    %3248 = vmatpush1.msra.mxu0 0.0
    %3249 = vmatprep.subr.mxu0 0.0
    %3250 = vmatpush1.msra.mxu0 0.0
    %3251 = vmatprep.mubr.f32.mxu0 0.0
    %3252 = vmatmul.mubr.f32.gmra.mrb[0].mxu0 %v2882
    %v3253 = vpop.f32.mrb[0].mxu0
    %v3254 = vadd.f32 0.0, %v3253
    %v3255 = vpop.f32.mrb[0].mxu0
    %v3256 = vadd.f32 0.0, %v3255
    %3257 = vdwg.mxu0
    %3258 = vmatprep.subr.mxu0 0.0
    %3259 = vmatpush1.msra.mxu0 %v468
    %3260 = vmatprep.subr.mxu0 0.0
    %3261 = vmatpush1.msra.mxu0 %v471
    %3262 = vmatprep.subr.mxu0 0.0
    %3263 = vmatpush1.msra.mxu0 %v474
    %3264 = vmatprep.subr.mxu0 0.0
    %3265 = vmatpush1.msra.mxu0 %v477
    %3266 = vmatprep.subr.mxu0 0.0
    %3267 = vmatpush1.msra.mxu0 %v480
    %3268 = vmatprep.subr.mxu0 0.0
    %3269 = vmatpush1.msra.mxu0 %v483
    %3270 = vmatprep.subr.mxu0 0.0
    %3271 = vmatpush1.msra.mxu0 %v486
    %3272 = vmatprep.subr.mxu0 0.0
    %3273 = vmatpush1.msra.mxu0 %v489
    %3274 = vmatprep.subr.mxu0 0.0
    %3275 = vmatpush1.msra.mxu0 %v492
    %3276 = vmatprep.subr.mxu0 0.0
    %3277 = vmatpush1.msra.mxu0 %v495
    %3278 = vmatprep.subr.mxu0 0.0
    %3279 = vmatpush1.msra.mxu0 %v498
    %3280 = vmatprep.subr.mxu0 0.0
    %3281 = vmatpush1.msra.mxu0 %v501
    %3282 = vmatprep.subr.mxu0 0.0
    %3283 = vmatpush1.msra.mxu0 %v504
    %3284 = vmatprep.subr.mxu0 0.0
    %3285 = vmatpush1.msra.mxu0 %v507
    %3286 = vmatprep.subr.mxu0 0.0
    %3287 = vmatpush1.msra.mxu0 %v510
    %3288 = vmatprep.subr.mxu0 0.0
    %3289 = vmatpush1.msra.mxu0 %v513
    %3290 = vmatprep.subr.mxu0 0.0
    %3291 = vmatpush1.msra.mxu0 0.0
    %3292 = vmatprep.subr.mxu0 0.0
    %3293 = vmatpush1.msra.mxu0 0.0
    %3294 = vmatprep.subr.mxu0 0.0
    %3295 = vmatpush1.msra.mxu0 0.0
    %3296 = vmatprep.subr.mxu0 0.0
    %3297 = vmatpush1.msra.mxu0 0.0
    %3298 = vmatprep.subr.mxu0 0.0
    %3299 = vmatpush1.msra.mxu0 0.0
    %3300 = vmatprep.subr.mxu0 0.0
    %3301 = vmatpush1.msra.mxu0 0.0
    %3302 = vmatprep.subr.mxu0 0.0
    %3303 = vmatpush1.msra.mxu0 0.0
    %3304 = vmatprep.subr.mxu0 0.0
    %3305 = vmatpush1.msra.mxu0 0.0
    %3306 = vmatprep.subr.mxu0 0.0
    %3307 = vmatpush1.msra.mxu0 0.0
    %3308 = vmatprep.subr.mxu0 0.0
    %3309 = vmatpush1.msra.mxu0 0.0
    %3310 = vmatprep.subr.mxu0 0.0
    %3311 = vmatpush1.msra.mxu0 0.0
    %3312 = vmatprep.subr.mxu0 0.0
    %3313 = vmatpush1.msra.mxu0 0.0
    %3314 = vmatprep.subr.mxu0 0.0
    %3315 = vmatpush1.msra.mxu0 0.0
    %3316 = vmatprep.subr.mxu0 0.0
    %3317 = vmatpush1.msra.mxu0 0.0
    %3318 = vmatprep.subr.mxu0 0.0
    %3319 = vmatpush1.msra.mxu0 0.0
    %3320 = vmatprep.subr.mxu0 0.0
    %3321 = vmatpush1.msra.mxu0 0.0
    %3322 = vmatprep.mubr.f32.mxu0 0.0
    %3323 = vmatmul.mubr.f32.gmra.mrb[0].mxu0 %v2882
    %v3324 = vpop.f32.mrb[0].mxu0
    %v3325 = vadd.f32 0.0, %v3324
    %v3326 = vpop.f32.mrb[0].mxu0
    %3327 = vdwg.mxu0
    %v3328 = vadd.f32 %v3113, %v3254
    %v3329 = vxor.u32 %v3328, 2147483648
    %v3330 = vmul.f32 %v3329, 1.442695
    %v3331 = vpow.pop %v3330
    %v3332 = vadd.f32 %v3331, 1.0
    %v3333 = vrcp.pop %v3332
    %v3334 = vmul.f32 1.0, %v3333
    %v3335 = vadd.f32 %v3115, %v3256
    %v3336 = vxor.u32 %v3335, 2147483648
    %v3337 = vmul.f32 %v3336, 1.442695
    %v3338 = vpow.pop %v3337
    %v3339 = vadd.f32 %v3338, 1.0
    %v3340 = vrcp.pop %v3339
    %v3341 = vmul.f32 1.0, %v3340
    %v3342 = vadd.f32 %v3325, %v543
    %v3343 = vmul.f32 %v3334, %v3342
    %v3344 = vadd.f32 %v3184, %v3343
    %v3345 = vtanh.pop %v3344
    %v3346 = vsub.f32 1.0, %v3341
    %v3347 = vmul.f32 %v3346, %v3345
    %v3348 = vmul.f32 %v3341, %v2882
    %v3349 = vadd.f32 %v3347, %v3348
    %3350 = vmatprep.subr.mxu0 %v371
    %3351 = vmatpush1.msra.mxu0 %v370
    %3352 = vmatprep.subr.mxu0 %v374
    %3353 = vmatpush1.msra.mxu0 %v373
    %3354 = vmatprep.subr.mxu0 %v377
    %3355 = vmatpush1.msra.mxu0 %v376
    %3356 = vmatprep.subr.mxu0 %v380
    %3357 = vmatpush1.msra.mxu0 %v379
    %3358 = vmatprep.subr.mxu0 %v383
    %3359 = vmatpush1.msra.mxu0 %v382
    %3360 = vmatprep.subr.mxu0 %v386
    %3361 = vmatpush1.msra.mxu0 %v385
    %3362 = vmatprep.subr.mxu0 %v389
    %3363 = vmatpush1.msra.mxu0 %v388
    %3364 = vmatprep.subr.mxu0 %v392
    %3365 = vmatpush1.msra.mxu0 %v391
    %3366 = vmatprep.subr.mxu0 %v395
    %3367 = vmatpush1.msra.mxu0 %v394
    %3368 = vmatprep.subr.mxu0 %v398
    %3369 = vmatpush1.msra.mxu0 %v397
    %3370 = vmatprep.subr.mxu0 %v401
    %3371 = vmatpush1.msra.mxu0 %v400
    %3372 = vmatprep.subr.mxu0 %v404
    %3373 = vmatpush1.msra.mxu0 %v403
    %3374 = vmatprep.subr.mxu0 %v407
    %3375 = vmatpush1.msra.mxu0 %v406
    %3376 = vmatprep.subr.mxu0 %v410
    %3377 = vmatpush1.msra.mxu0 %v409
    %3378 = vmatprep.subr.mxu0 %v413
    %3379 = vmatpush1.msra.mxu0 %v412
    %3380 = vmatprep.subr.mxu0 %v416
    %3381 = vmatpush1.msra.mxu0 %v415
    %3382 = vmatprep.subr.mxu0 0.0
    %3383 = vmatpush1.msra.mxu0 0.0
    %3384 = vmatprep.subr.mxu0 0.0
    %3385 = vmatpush1.msra.mxu0 0.0
    %3386 = vmatprep.subr.mxu0 0.0
    %3387 = vmatpush1.msra.mxu0 0.0
    %3388 = vmatprep.subr.mxu0 0.0
    %3389 = vmatpush1.msra.mxu0 0.0
    %3390 = vmatprep.subr.mxu0 0.0
    %3391 = vmatpush1.msra.mxu0 0.0
    %3392 = vmatprep.subr.mxu0 0.0
    %3393 = vmatpush1.msra.mxu0 0.0
    %3394 = vmatprep.subr.mxu0 0.0
    %3395 = vmatpush1.msra.mxu0 0.0
    %3396 = vmatprep.subr.mxu0 0.0
    %3397 = vmatpush1.msra.mxu0 0.0
    %3398 = vmatprep.subr.mxu0 0.0
    %3399 = vmatpush1.msra.mxu0 0.0
    %3400 = vmatprep.subr.mxu0 0.0
    %3401 = vmatpush1.msra.mxu0 0.0
    %3402 = vmatprep.subr.mxu0 0.0
    %3403 = vmatpush1.msra.mxu0 0.0
    %3404 = vmatprep.subr.mxu0 0.0
    %3405 = vmatpush1.msra.mxu0 0.0
    %3406 = vmatprep.subr.mxu0 0.0
    %3407 = vmatpush1.msra.mxu0 0.0
    %3408 = vmatprep.subr.mxu0 0.0
    %3409 = vmatpush1.msra.mxu0 0.0
    %3410 = vmatprep.subr.mxu0 0.0
    %3411 = vmatpush1.msra.mxu0 0.0
    %3412 = vmatprep.subr.mxu0 0.0
    %3413 = vmatpush1.msra.mxu0 0.0
    %3414 = vmatprep.mubr.f32.mxu0 0.0
    %3415 = vmatmul.mubr.f32.gmra.mrb[0].mxu0 %v3045
    %v3416 = vpop.f32.mrb[0].mxu0
    %v3417 = vadd.f32 0.0, %v3416
    %v3418 = vpop.f32.mrb[0].mxu0
    %v3419 = vadd.f32 0.0, %v3418
    %3420 = vdwg.mxu0
    %3421 = vmatprep.subr.mxu0 0.0
    %3422 = vmatpush1.msra.mxu0 %v372
    %3423 = vmatprep.subr.mxu0 0.0
    %3424 = vmatpush1.msra.mxu0 %v375
    %3425 = vmatprep.subr.mxu0 0.0
    %3426 = vmatpush1.msra.mxu0 %v378
    %3427 = vmatprep.subr.mxu0 0.0
    %3428 = vmatpush1.msra.mxu0 %v381
    %3429 = vmatprep.subr.mxu0 0.0
    %3430 = vmatpush1.msra.mxu0 %v384
    %3431 = vmatprep.subr.mxu0 0.0
    %3432 = vmatpush1.msra.mxu0 %v387
    %3433 = vmatprep.subr.mxu0 0.0
    %3434 = vmatpush1.msra.mxu0 %v390
    %3435 = vmatprep.subr.mxu0 0.0
    %3436 = vmatpush1.msra.mxu0 %v393
    %3437 = vmatprep.subr.mxu0 0.0
    %3438 = vmatpush1.msra.mxu0 %v396
    %3439 = vmatprep.subr.mxu0 0.0
    %3440 = vmatpush1.msra.mxu0 %v399
    %3441 = vmatprep.subr.mxu0 0.0
    %3442 = vmatpush1.msra.mxu0 %v402
    %3443 = vmatprep.subr.mxu0 0.0
    %3444 = vmatpush1.msra.mxu0 %v405
    %3445 = vmatprep.subr.mxu0 0.0
    %3446 = vmatpush1.msra.mxu0 %v408
    %3447 = vmatprep.subr.mxu0 0.0
    %3448 = vmatpush1.msra.mxu0 %v411
    %3449 = vmatprep.subr.mxu0 0.0
    %3450 = vmatpush1.msra.mxu0 %v414
    %3451 = vmatprep.subr.mxu0 0.0
    %3452 = vmatpush1.msra.mxu0 %v417
    %3453 = vmatprep.subr.mxu0 0.0
    %3454 = vmatpush1.msra.mxu0 0.0
    %3455 = vmatprep.subr.mxu0 0.0
    %3456 = vmatpush1.msra.mxu0 0.0
    %3457 = vmatprep.subr.mxu0 0.0
    %3458 = vmatpush1.msra.mxu0 0.0
    %3459 = vmatprep.subr.mxu0 0.0
    %3460 = vmatpush1.msra.mxu0 0.0
    %3461 = vmatprep.subr.mxu0 0.0
    %3462 = vmatpush1.msra.mxu0 0.0
    %3463 = vmatprep.subr.mxu0 0.0
    %3464 = vmatpush1.msra.mxu0 0.0
    %3465 = vmatprep.subr.mxu0 0.0
    %3466 = vmatpush1.msra.mxu0 0.0
    %3467 = vmatprep.subr.mxu0 0.0
    %3468 = vmatpush1.msra.mxu0 0.0
    %3469 = vmatprep.subr.mxu0 0.0
    %3470 = vmatpush1.msra.mxu0 0.0
    %3471 = vmatprep.subr.mxu0 0.0
    %3472 = vmatpush1.msra.mxu0 0.0
    %3473 = vmatprep.subr.mxu0 0.0
    %3474 = vmatpush1.msra.mxu0 0.0
    %3475 = vmatprep.subr.mxu0 0.0
    %3476 = vmatpush1.msra.mxu0 0.0
    %3477 = vmatprep.subr.mxu0 0.0
    %3478 = vmatpush1.msra.mxu0 0.0
    %3479 = vmatprep.subr.mxu0 0.0
    %3480 = vmatpush1.msra.mxu0 0.0
    %3481 = vmatprep.subr.mxu0 0.0
    %3482 = vmatpush1.msra.mxu0 0.0
    %3483 = vmatprep.subr.mxu0 0.0
    %3484 = vmatpush1.msra.mxu0 0.0
    %3485 = vmatprep.mubr.f32.mxu0 0.0
    %3486 = vmatmul.mubr.f32.gmra.mrb[0].mxu0 %v3045
    %v3487 = vpop.f32.mrb[0].mxu0
    %v3488 = vadd.f32 0.0, %v3487
    %v3489 = vpop.f32.mrb[0].mxu0
    %3490 = vdwg.mxu0
    %v3491 = vadd.f32 %v255, %v3417
    %v3492 = vxor.u32 %v3491, 2147483648
    %v3493 = vmul.f32 %v3492, 1.442695
    %v3494 = vpow.pop %v3493
    %v3495 = vadd.f32 %v3494, 1.0
    %v3496 = vrcp.pop %v3495
    %v3497 = vmul.f32 1.0, %v3496
    %v3498 = vadd.f32 %v257, %v3419
    %v3499 = vxor.u32 %v3498, 2147483648
    %v3500 = vmul.f32 %v3499, 1.442695
    %v3501 = vpow.pop %v3500
    %v3502 = vadd.f32 %v3501, 1.0
    %v3503 = vrcp.pop %v3502
    %v3504 = vmul.f32 1.0, %v3503
    %v3505 = vadd.f32 %v3488, %v536
    %v3506 = vmul.f32 %v3497, %v3505
    %v3507 = vadd.f32 %v362, %v3506
    %v3508 = vtanh.pop %v3507
    %v3509 = vsub.f32 1.0, %v3504
    %v3510 = vmul.f32 %v3509, %v3508
    %v3511 = vmul.f32 %v3504, %v3045
    %v3512 = vadd.f32 %v3510, %v3511
    %3513 = vmatprep.subr.mxu0 %v419
    %3514 = vmatpush1.msra.mxu0 %v418
    %3515 = vmatprep.subr.mxu0 %v422
    %3516 = vmatpush1.msra.mxu0 %v421
    %3517 = vmatprep.subr.mxu0 %v425
    %3518 = vmatpush1.msra.mxu0 %v424
    %3519 = vmatprep.subr.mxu0 %v428
    %3520 = vmatpush1.msra.mxu0 %v427
    %3521 = vmatprep.subr.mxu0 %v431
    %3522 = vmatpush1.msra.mxu0 %v430
    %3523 = vmatprep.subr.mxu0 %v434
    %3524 = vmatpush1.msra.mxu0 %v433
    %3525 = vmatprep.subr.mxu0 %v437
    %3526 = vmatpush1.msra.mxu0 %v436
    %3527 = vmatprep.subr.mxu0 %v440
    %3528 = vmatpush1.msra.mxu0 %v439
    %3529 = vmatprep.subr.mxu0 %v443
    %3530 = vmatpush1.msra.mxu0 %v442
    %3531 = vmatprep.subr.mxu0 %v446
    %3532 = vmatpush1.msra.mxu0 %v445
    %3533 = vmatprep.subr.mxu0 %v449
    %3534 = vmatpush1.msra.mxu0 %v448
    %3535 = vmatprep.subr.mxu0 %v452
    %3536 = vmatpush1.msra.mxu0 %v451
    %3537 = vmatprep.subr.mxu0 %v455
    %3538 = vmatpush1.msra.mxu0 %v454
    %3539 = vmatprep.subr.mxu0 %v458
    %3540 = vmatpush1.msra.mxu0 %v457
    %3541 = vmatprep.subr.mxu0 %v461
    %3542 = vmatpush1.msra.mxu0 %v460
    %3543 = vmatprep.subr.mxu0 %v464
    %3544 = vmatpush1.msra.mxu0 %v463
    %3545 = vmatprep.subr.mxu0 0.0
    %3546 = vmatpush1.msra.mxu0 0.0
    %3547 = vmatprep.subr.mxu0 0.0
    %3548 = vmatpush1.msra.mxu0 0.0
    %3549 = vmatprep.subr.mxu0 0.0
    %3550 = vmatpush1.msra.mxu0 0.0
    %3551 = vmatprep.subr.mxu0 0.0
    %3552 = vmatpush1.msra.mxu0 0.0
    %3553 = vmatprep.subr.mxu0 0.0
    %3554 = vmatpush1.msra.mxu0 0.0
    %3555 = vmatprep.subr.mxu0 0.0
    %3556 = vmatpush1.msra.mxu0 0.0
    %3557 = vmatprep.subr.mxu0 0.0
    %3558 = vmatpush1.msra.mxu0 0.0
    %3559 = vmatprep.subr.mxu0 0.0
    %3560 = vmatpush1.msra.mxu0 0.0
    %3561 = vmatprep.subr.mxu0 0.0
    %3562 = vmatpush1.msra.mxu0 0.0
    %3563 = vmatprep.subr.mxu0 0.0
    %3564 = vmatpush1.msra.mxu0 0.0
    %3565 = vmatprep.subr.mxu0 0.0
    %3566 = vmatpush1.msra.mxu0 0.0
    %3567 = vmatprep.subr.mxu0 0.0
    %3568 = vmatpush1.msra.mxu0 0.0
    %3569 = vmatprep.subr.mxu0 0.0
    %3570 = vmatpush1.msra.mxu0 0.0
    %3571 = vmatprep.subr.mxu0 0.0
    %3572 = vmatpush1.msra.mxu0 0.0
    %3573 = vmatprep.subr.mxu0 0.0
    %3574 = vmatpush1.msra.mxu0 0.0
    %3575 = vmatprep.subr.mxu0 0.0
    %3576 = vmatpush1.msra.mxu0 0.0
    %3577 = vmatprep.mubr.f32.mxu0 0.0
    %3578 = vmatmul.mubr.f32.gmra.mrb[0].mxu0 %v3512
    %v3579 = vpop.f32.mrb[0].mxu0
    %v3580 = vadd.f32 %v519, %v3579
    %v3581 = vpop.f32.mrb[0].mxu0
    %v3582 = vadd.f32 %v523, %v3581
    %3583 = vdwg.mxu0
    %3584 = vmatprep.subr.mxu0 0.0
    %3585 = vmatpush1.msra.mxu0 %v420
    %3586 = vmatprep.subr.mxu0 0.0
    %3587 = vmatpush1.msra.mxu0 %v423
    %3588 = vmatprep.subr.mxu0 0.0
    %3589 = vmatpush1.msra.mxu0 %v426
    %3590 = vmatprep.subr.mxu0 0.0
    %3591 = vmatpush1.msra.mxu0 %v429
    %3592 = vmatprep.subr.mxu0 0.0
    %3593 = vmatpush1.msra.mxu0 %v432
    %3594 = vmatprep.subr.mxu0 0.0
    %3595 = vmatpush1.msra.mxu0 %v435
    %3596 = vmatprep.subr.mxu0 0.0
    %3597 = vmatpush1.msra.mxu0 %v438
    %3598 = vmatprep.subr.mxu0 0.0
    %3599 = vmatpush1.msra.mxu0 %v441
    %3600 = vmatprep.subr.mxu0 0.0
    %3601 = vmatpush1.msra.mxu0 %v444
    %3602 = vmatprep.subr.mxu0 0.0
    %3603 = vmatpush1.msra.mxu0 %v447
    %3604 = vmatprep.subr.mxu0 0.0
    %3605 = vmatpush1.msra.mxu0 %v450
    %3606 = vmatprep.subr.mxu0 0.0
    %3607 = vmatpush1.msra.mxu0 %v453
    %3608 = vmatprep.subr.mxu0 0.0
    %3609 = vmatpush1.msra.mxu0 %v456
    %3610 = vmatprep.subr.mxu0 0.0
    %3611 = vmatpush1.msra.mxu0 %v459
    %3612 = vmatprep.subr.mxu0 0.0
    %3613 = vmatpush1.msra.mxu0 %v462
    %3614 = vmatprep.subr.mxu0 0.0
    %3615 = vmatpush1.msra.mxu0 %v465
    %3616 = vmatprep.subr.mxu0 0.0
    %3617 = vmatpush1.msra.mxu0 0.0
    %3618 = vmatprep.subr.mxu0 0.0
    %3619 = vmatpush1.msra.mxu0 0.0
    %3620 = vmatprep.subr.mxu0 0.0
    %3621 = vmatpush1.msra.mxu0 0.0
    %3622 = vmatprep.subr.mxu0 0.0
    %3623 = vmatpush1.msra.mxu0 0.0
    %3624 = vmatprep.subr.mxu0 0.0
    %3625 = vmatpush1.msra.mxu0 0.0
    %3626 = vmatprep.subr.mxu0 0.0
    %3627 = vmatpush1.msra.mxu0 0.0
    %3628 = vmatprep.subr.mxu0 0.0
    %3629 = vmatpush1.msra.mxu0 0.0
    %3630 = vmatprep.subr.mxu0 0.0
    %3631 = vmatpush1.msra.mxu0 0.0
    %3632 = vmatprep.subr.mxu0 0.0
    %3633 = vmatpush1.msra.mxu0 0.0
    %3634 = vmatprep.subr.mxu0 0.0
    %3635 = vmatpush1.msra.mxu0 0.0
    %3636 = vmatprep.subr.mxu0 0.0
    %3637 = vmatpush1.msra.mxu0 0.0
    %3638 = vmatprep.subr.mxu0 0.0
    %3639 = vmatpush1.msra.mxu0 0.0
    %3640 = vmatprep.subr.mxu0 0.0
    %3641 = vmatpush1.msra.mxu0 0.0
    %3642 = vmatprep.subr.mxu0 0.0
    %3643 = vmatpush1.msra.mxu0 0.0
    %3644 = vmatprep.subr.mxu0 0.0
    %3645 = vmatpush1.msra.mxu0 0.0
    %3646 = vmatprep.subr.mxu0 0.0
    %3647 = vmatpush1.msra.mxu0 0.0
    %3648 = vmatprep.mubr.f32.mxu0 0.0
    %3649 = vmatmul.mubr.f32.gmra.mrb[0].mxu0 %v3512
    %v3650 = vpop.f32.mrb[0].mxu0
    %v3651 = vadd.f32 %v527, %v3650
    %v3652 = vpop.f32.mrb[0].mxu0
    %3653 = vdwg.mxu0
    %3654 = vmatprep.subr.mxu0 %v467
    %3655 = vmatpush1.msra.mxu0 %v466
    %3656 = vmatprep.subr.mxu0 %v470
    %3657 = vmatpush1.msra.mxu0 %v469
    %3658 = vmatprep.subr.mxu0 %v473
    %3659 = vmatpush1.msra.mxu0 %v472
    %3660 = vmatprep.subr.mxu0 %v476
    %3661 = vmatpush1.msra.mxu0 %v475
    %3662 = vmatprep.subr.mxu0 %v479
    %3663 = vmatpush1.msra.mxu0 %v478
    %3664 = vmatprep.subr.mxu0 %v482
    %3665 = vmatpush1.msra.mxu0 %v481
    %3666 = vmatprep.subr.mxu0 %v485
    %3667 = vmatpush1.msra.mxu0 %v484
    %3668 = vmatprep.subr.mxu0 %v488
    %3669 = vmatpush1.msra.mxu0 %v487
    %3670 = vmatprep.subr.mxu0 %v491
    %3671 = vmatpush1.msra.mxu0 %v490
    %3672 = vmatprep.subr.mxu0 %v494
    %3673 = vmatpush1.msra.mxu0 %v493
    %3674 = vmatprep.subr.mxu0 %v497
    %3675 = vmatpush1.msra.mxu0 %v496
    %3676 = vmatprep.subr.mxu0 %v500
    %3677 = vmatpush1.msra.mxu0 %v499
    %3678 = vmatprep.subr.mxu0 %v503
    %3679 = vmatpush1.msra.mxu0 %v502
    %3680 = vmatprep.subr.mxu0 %v506
    %3681 = vmatpush1.msra.mxu0 %v505
    %3682 = vmatprep.subr.mxu0 %v509
    %3683 = vmatpush1.msra.mxu0 %v508
    %3684 = vmatprep.subr.mxu0 %v512
    %3685 = vmatpush1.msra.mxu0 %v511
    %3686 = vmatprep.subr.mxu0 0.0
    %3687 = vmatpush1.msra.mxu0 0.0
    %3688 = vmatprep.subr.mxu0 0.0
    %3689 = vmatpush1.msra.mxu0 0.0
    %3690 = vmatprep.subr.mxu0 0.0
    %3691 = vmatpush1.msra.mxu0 0.0
    %3692 = vmatprep.subr.mxu0 0.0
    %3693 = vmatpush1.msra.mxu0 0.0
    %3694 = vmatprep.subr.mxu0 0.0
    %3695 = vmatpush1.msra.mxu0 0.0
    %3696 = vmatprep.subr.mxu0 0.0
    %3697 = vmatpush1.msra.mxu0 0.0
    %3698 = vmatprep.subr.mxu0 0.0
    %3699 = vmatpush1.msra.mxu0 0.0
    %3700 = vmatprep.subr.mxu0 0.0
    %3701 = vmatpush1.msra.mxu0 0.0
    %3702 = vmatprep.subr.mxu0 0.0
    %3703 = vmatpush1.msra.mxu0 0.0
    %3704 = vmatprep.subr.mxu0 0.0
    %3705 = vmatpush1.msra.mxu0 0.0
    %3706 = vmatprep.subr.mxu0 0.0
    %3707 = vmatpush1.msra.mxu0 0.0
    %3708 = vmatprep.subr.mxu0 0.0
    %3709 = vmatpush1.msra.mxu0 0.0
    %3710 = vmatprep.subr.mxu0 0.0
    %3711 = vmatpush1.msra.mxu0 0.0
    %3712 = vmatprep.subr.mxu0 0.0
    %3713 = vmatpush1.msra.mxu0 0.0
    %3714 = vmatprep.subr.mxu0 0.0
    %3715 = vmatpush1.msra.mxu0 0.0
    %3716 = vmatprep.subr.mxu0 0.0
    %3717 = vmatpush1.msra.mxu0 0.0
    %3718 = vmatprep.mubr.f32.mxu0 0.0
    %3719 = vmatmul.mubr.f32.gmra.mrb[0].mxu0 %v3349
    %v3720 = vpop.f32.mrb[0].mxu0
    %v3721 = vadd.f32 0.0, %v3720
    %v3722 = vpop.f32.mrb[0].mxu0
    %v3723 = vadd.f32 0.0, %v3722
    %3724 = vdwg.mxu0
    %3725 = vmatprep.subr.mxu0 0.0
    %3726 = vmatpush1.msra.mxu0 %v468
    %3727 = vmatprep.subr.mxu0 0.0
    %3728 = vmatpush1.msra.mxu0 %v471
    %3729 = vmatprep.subr.mxu0 0.0
    %3730 = vmatpush1.msra.mxu0 %v474
    %3731 = vmatprep.subr.mxu0 0.0
    %3732 = vmatpush1.msra.mxu0 %v477
    %3733 = vmatprep.subr.mxu0 0.0
    %3734 = vmatpush1.msra.mxu0 %v480
    %3735 = vmatprep.subr.mxu0 0.0
    %3736 = vmatpush1.msra.mxu0 %v483
    %3737 = vmatprep.subr.mxu0 0.0
    %3738 = vmatpush1.msra.mxu0 %v486
    %3739 = vmatprep.subr.mxu0 0.0
    %3740 = vmatpush1.msra.mxu0 %v489
    %3741 = vmatprep.subr.mxu0 0.0
    %3742 = vmatpush1.msra.mxu0 %v492
    %3743 = vmatprep.subr.mxu0 0.0
    %3744 = vmatpush1.msra.mxu0 %v495
    %3745 = vmatprep.subr.mxu0 0.0
    %3746 = vmatpush1.msra.mxu0 %v498
    %3747 = vmatprep.subr.mxu0 0.0
    %3748 = vmatpush1.msra.mxu0 %v501
    %3749 = vmatprep.subr.mxu0 0.0
    %3750 = vmatpush1.msra.mxu0 %v504
    %3751 = vmatprep.subr.mxu0 0.0
    %3752 = vmatpush1.msra.mxu0 %v507
    %3753 = vmatprep.subr.mxu0 0.0
    %3754 = vmatpush1.msra.mxu0 %v510
    %3755 = vmatprep.subr.mxu0 0.0
    %3756 = vmatpush1.msra.mxu0 %v513
    %3757 = vmatprep.subr.mxu0 0.0
    %3758 = vmatpush1.msra.mxu0 0.0
    %3759 = vmatprep.subr.mxu0 0.0
    %3760 = vmatpush1.msra.mxu0 0.0
    %3761 = vmatprep.subr.mxu0 0.0
    %3762 = vmatpush1.msra.mxu0 0.0
    %3763 = vmatprep.subr.mxu0 0.0
    %3764 = vmatpush1.msra.mxu0 0.0
    %3765 = vmatprep.subr.mxu0 0.0
    %3766 = vmatpush1.msra.mxu0 0.0
    %3767 = vmatprep.subr.mxu0 0.0
    %3768 = vmatpush1.msra.mxu0 0.0
    %3769 = vmatprep.subr.mxu0 0.0
    %3770 = vmatpush1.msra.mxu0 0.0
    %3771 = vmatprep.subr.mxu0 0.0
    %3772 = vmatpush1.msra.mxu0 0.0
    %3773 = vmatprep.subr.mxu0 0.0
    %3774 = vmatpush1.msra.mxu0 0.0
    %3775 = vmatprep.subr.mxu0 0.0
    %3776 = vmatpush1.msra.mxu0 0.0
    %3777 = vmatprep.subr.mxu0 0.0
    %3778 = vmatpush1.msra.mxu0 0.0
    %3779 = vmatprep.subr.mxu0 0.0
    %3780 = vmatpush1.msra.mxu0 0.0
    %3781 = vmatprep.subr.mxu0 0.0
    %3782 = vmatpush1.msra.mxu0 0.0
    %3783 = vmatprep.subr.mxu0 0.0
    %3784 = vmatpush1.msra.mxu0 0.0
    %3785 = vmatprep.subr.mxu0 0.0
    %3786 = vmatpush1.msra.mxu0 0.0
    %3787 = vmatprep.subr.mxu0 0.0
    %3788 = vmatpush1.msra.mxu0 0.0
    %3789 = vmatprep.mubr.f32.mxu0 0.0
    %3790 = vmatmul.mubr.f32.gmra.mrb[0].mxu0 %v3349
    %v3791 = vpop.f32.mrb[0].mxu0
    %v3792 = vadd.f32 0.0, %v3791
    %v3793 = vpop.f32.mrb[0].mxu0
    %3794 = vdwg.mxu0
    %v3795 = vadd.f32 %v3580, %v3721
    %v3796 = vxor.u32 %v3795, 2147483648
    %v3797 = vmul.f32 %v3796, 1.442695
    %v3798 = vpow.pop %v3797
    %v3799 = vadd.f32 %v3798, 1.0
    %v3800 = vrcp.pop %v3799
    %v3801 = vmul.f32 1.0, %v3800
    %v3802 = vadd.f32 %v3582, %v3723
    %v3803 = vxor.u32 %v3802, 2147483648
    %v3804 = vmul.f32 %v3803, 1.442695
    %v3805 = vpow.pop %v3804
    %v3806 = vadd.f32 %v3805, 1.0
    %v3807 = vrcp.pop %v3806
    %v3808 = vmul.f32 1.0, %v3807
    %v3809 = vadd.f32 %v3792, %v543
    %v3810 = vmul.f32 %v3801, %v3809
    %v3811 = vadd.f32 %v3651, %v3810
    %v3812 = vtanh.pop %v3811
    %v3813 = vsub.f32 1.0, %v3808
    %v3814 = vmul.f32 %v3813, %v3812
    %v3815 = vmul.f32 %v3808, %v3349
    %v3816 = vadd.f32 %v3814, %v3815
    %3817 = vmatprep.subr.mxu0 %v371
    %3818 = vmatpush1.msra.mxu0 %v370
    %3819 = vmatprep.subr.mxu0 %v374
    %3820 = vmatpush1.msra.mxu0 %v373
    %3821 = vmatprep.subr.mxu0 %v377
    %3822 = vmatpush1.msra.mxu0 %v376
    %3823 = vmatprep.subr.mxu0 %v380
    %3824 = vmatpush1.msra.mxu0 %v379
    %3825 = vmatprep.subr.mxu0 %v383
    %3826 = vmatpush1.msra.mxu0 %v382
    %3827 = vmatprep.subr.mxu0 %v386
    %3828 = vmatpush1.msra.mxu0 %v385
    %3829 = vmatprep.subr.mxu0 %v389
    %3830 = vmatpush1.msra.mxu0 %v388
    %3831 = vmatprep.subr.mxu0 %v392
    %3832 = vmatpush1.msra.mxu0 %v391
    %3833 = vmatprep.subr.mxu0 %v395
    %3834 = vmatpush1.msra.mxu0 %v394
    %3835 = vmatprep.subr.mxu0 %v398
    %3836 = vmatpush1.msra.mxu0 %v397
    %3837 = vmatprep.subr.mxu0 %v401
    %3838 = vmatpush1.msra.mxu0 %v400
    %3839 = vmatprep.subr.mxu0 %v404
    %3840 = vmatpush1.msra.mxu0 %v403
    %3841 = vmatprep.subr.mxu0 %v407
    %3842 = vmatpush1.msra.mxu0 %v406
    %3843 = vmatprep.subr.mxu0 %v410
    %3844 = vmatpush1.msra.mxu0 %v409
    %3845 = vmatprep.subr.mxu0 %v413
    %3846 = vmatpush1.msra.mxu0 %v412
    %3847 = vmatprep.subr.mxu0 %v416
    %3848 = vmatpush1.msra.mxu0 %v415
    %3849 = vmatprep.subr.mxu0 0.0
    %3850 = vmatpush1.msra.mxu0 0.0
    %3851 = vmatprep.subr.mxu0 0.0
    %3852 = vmatpush1.msra.mxu0 0.0
    %3853 = vmatprep.subr.mxu0 0.0
    %3854 = vmatpush1.msra.mxu0 0.0
    %3855 = vmatprep.subr.mxu0 0.0
    %3856 = vmatpush1.msra.mxu0 0.0
    %3857 = vmatprep.subr.mxu0 0.0
    %3858 = vmatpush1.msra.mxu0 0.0
    %3859 = vmatprep.subr.mxu0 0.0
    %3860 = vmatpush1.msra.mxu0 0.0
    %3861 = vmatprep.subr.mxu0 0.0
    %3862 = vmatpush1.msra.mxu0 0.0
    %3863 = vmatprep.subr.mxu0 0.0
    %3864 = vmatpush1.msra.mxu0 0.0
    %3865 = vmatprep.subr.mxu0 0.0
    %3866 = vmatpush1.msra.mxu0 0.0
    %3867 = vmatprep.subr.mxu0 0.0
    %3868 = vmatpush1.msra.mxu0 0.0
    %3869 = vmatprep.subr.mxu0 0.0
    %3870 = vmatpush1.msra.mxu0 0.0
    %3871 = vmatprep.subr.mxu0 0.0
    %3872 = vmatpush1.msra.mxu0 0.0
    %3873 = vmatprep.subr.mxu0 0.0
    %3874 = vmatpush1.msra.mxu0 0.0
    %3875 = vmatprep.subr.mxu0 0.0
    %3876 = vmatpush1.msra.mxu0 0.0
    %3877 = vmatprep.subr.mxu0 0.0
    %3878 = vmatpush1.msra.mxu0 0.0
    %3879 = vmatprep.subr.mxu0 0.0
    %3880 = vmatpush1.msra.mxu0 0.0
    %3881 = vmatprep.mubr.f32.mxu0 0.0
    %3882 = vmatmul.mubr.f32.gmra.mrb[0].mxu0 %v3512
    %v3883 = vpop.f32.mrb[0].mxu0
    %v3884 = vadd.f32 0.0, %v3883
    %v3885 = vpop.f32.mrb[0].mxu0
    %v3886 = vadd.f32 0.0, %v3885
    %3887 = vdwg.mxu0
    %3888 = vmatprep.subr.mxu0 0.0
    %3889 = vmatpush1.msra.mxu0 %v372
    %3890 = vmatprep.subr.mxu0 0.0
    %3891 = vmatpush1.msra.mxu0 %v375
    %3892 = vmatprep.subr.mxu0 0.0
    %3893 = vmatpush1.msra.mxu0 %v378
    %3894 = vmatprep.subr.mxu0 0.0
    %3895 = vmatpush1.msra.mxu0 %v381
    %3896 = vmatprep.subr.mxu0 0.0
    %3897 = vmatpush1.msra.mxu0 %v384
    %3898 = vmatprep.subr.mxu0 0.0
    %3899 = vmatpush1.msra.mxu0 %v387
    %3900 = vmatprep.subr.mxu0 0.0
    %3901 = vmatpush1.msra.mxu0 %v390
    %3902 = vmatprep.subr.mxu0 0.0
    %3903 = vmatpush1.msra.mxu0 %v393
    %3904 = vmatprep.subr.mxu0 0.0
    %3905 = vmatpush1.msra.mxu0 %v396
    %3906 = vmatprep.subr.mxu0 0.0
    %3907 = vmatpush1.msra.mxu0 %v399
    %3908 = vmatprep.subr.mxu0 0.0
    %3909 = vmatpush1.msra.mxu0 %v402
    %3910 = vmatprep.subr.mxu0 0.0
    %3911 = vmatpush1.msra.mxu0 %v405
    %3912 = vmatprep.subr.mxu0 0.0
    %3913 = vmatpush1.msra.mxu0 %v408
    %3914 = vmatprep.subr.mxu0 0.0
    %3915 = vmatpush1.msra.mxu0 %v411
    %3916 = vmatprep.subr.mxu0 0.0
    %3917 = vmatpush1.msra.mxu0 %v414
    %3918 = vmatprep.subr.mxu0 0.0
    %3919 = vmatpush1.msra.mxu0 %v417
    %3920 = vmatprep.subr.mxu0 0.0
    %3921 = vmatpush1.msra.mxu0 0.0
    %3922 = vmatprep.subr.mxu0 0.0
    %3923 = vmatpush1.msra.mxu0 0.0
    %3924 = vmatprep.subr.mxu0 0.0
    %3925 = vmatpush1.msra.mxu0 0.0
    %3926 = vmatprep.subr.mxu0 0.0
    %3927 = vmatpush1.msra.mxu0 0.0
    %3928 = vmatprep.subr.mxu0 0.0
    %3929 = vmatpush1.msra.mxu0 0.0
    %3930 = vmatprep.subr.mxu0 0.0
    %3931 = vmatpush1.msra.mxu0 0.0
    %3932 = vmatprep.subr.mxu0 0.0
    %3933 = vmatpush1.msra.mxu0 0.0
    %3934 = vmatprep.subr.mxu0 0.0
    %3935 = vmatpush1.msra.mxu0 0.0
    %3936 = vmatprep.subr.mxu0 0.0
    %3937 = vmatpush1.msra.mxu0 0.0
    %3938 = vmatprep.subr.mxu0 0.0
    %3939 = vmatpush1.msra.mxu0 0.0
    %3940 = vmatprep.subr.mxu0 0.0
    %3941 = vmatpush1.msra.mxu0 0.0
    %3942 = vmatprep.subr.mxu0 0.0
    %3943 = vmatpush1.msra.mxu0 0.0
    %3944 = vmatprep.subr.mxu0 0.0
    %3945 = vmatpush1.msra.mxu0 0.0
    %3946 = vmatprep.subr.mxu0 0.0
    %3947 = vmatpush1.msra.mxu0 0.0
    %3948 = vmatprep.subr.mxu0 0.0
    %3949 = vmatpush1.msra.mxu0 0.0
    %3950 = vmatprep.subr.mxu0 0.0
    %3951 = vmatpush1.msra.mxu0 0.0
    %3952 = vmatprep.mubr.f32.mxu0 0.0
    %3953 = vmatmul.mubr.f32.gmra.mrb[0].mxu0 %v3512
    %v3954 = vpop.f32.mrb[0].mxu0
    %v3955 = vadd.f32 0.0, %v3954
    %v3956 = vpop.f32.mrb[0].mxu0
    %3957 = vdwg.mxu0
    %v3958 = vadd.f32 %v261, %v3884
    %v3959 = vxor.u32 %v3958, 2147483648
    %v3960 = vmul.f32 %v3959, 1.442695
    %v3961 = vpow.pop %v3960
    %v3962 = vadd.f32 %v3961, 1.0
    %v3963 = vrcp.pop %v3962
    %v3964 = vmul.f32 1.0, %v3963
    %v3965 = vadd.f32 %v263, %v3886
    %v3966 = vxor.u32 %v3965, 2147483648
    %v3967 = vmul.f32 %v3966, 1.442695
    %v3968 = vpow.pop %v3967
    %v3969 = vadd.f32 %v3968, 1.0
    %v3970 = vrcp.pop %v3969
    %v3971 = vmul.f32 1.0, %v3970
    %v3972 = vadd.f32 %v3955, %v536
    %v3973 = vmul.f32 %v3964, %v3972
    %v3974 = vadd.f32 %v367, %v3973
    %v3975 = vtanh.pop %v3974
    %v3976 = vsub.f32 1.0, %v3971
    %v3977 = vmul.f32 %v3976, %v3975
    %v3978 = vmul.f32 %v3971, %v3512
    %v3979 = vadd.f32 %v3977, %v3978
    %3980 = vmatprep.subr.mxu0 %v419
    %3981 = vmatpush1.msra.mxu0 %v418
    %3982 = vmatprep.subr.mxu0 %v422
    %3983 = vmatpush1.msra.mxu0 %v421
    %3984 = vmatprep.subr.mxu0 %v425
    %3985 = vmatpush1.msra.mxu0 %v424
    %3986 = vmatprep.subr.mxu0 %v428
    %3987 = vmatpush1.msra.mxu0 %v427
    %3988 = vmatprep.subr.mxu0 %v431
    %3989 = vmatpush1.msra.mxu0 %v430
    %3990 = vmatprep.subr.mxu0 %v434
    %3991 = vmatpush1.msra.mxu0 %v433
    %3992 = vmatprep.subr.mxu0 %v437
    %3993 = vmatpush1.msra.mxu0 %v436
    %3994 = vmatprep.subr.mxu0 %v440
    %3995 = vmatpush1.msra.mxu0 %v439
    %3996 = vmatprep.subr.mxu0 %v443
    %3997 = vmatpush1.msra.mxu0 %v442
    %3998 = vmatprep.subr.mxu0 %v446
    %3999 = vmatpush1.msra.mxu0 %v445
    %4000 = vmatprep.subr.mxu0 %v449
    %4001 = vmatpush1.msra.mxu0 %v448
    %4002 = vmatprep.subr.mxu0 %v452
    %4003 = vmatpush1.msra.mxu0 %v451
    %4004 = vmatprep.subr.mxu0 %v455
    %4005 = vmatpush1.msra.mxu0 %v454
    %4006 = vmatprep.subr.mxu0 %v458
    %4007 = vmatpush1.msra.mxu0 %v457
    %4008 = vmatprep.subr.mxu0 %v461
    %4009 = vmatpush1.msra.mxu0 %v460
    %4010 = vmatprep.subr.mxu0 %v464
    %4011 = vmatpush1.msra.mxu0 %v463
    %4012 = vmatprep.subr.mxu0 0.0
    %4013 = vmatpush1.msra.mxu0 0.0
    %4014 = vmatprep.subr.mxu0 0.0
    %4015 = vmatpush1.msra.mxu0 0.0
    %4016 = vmatprep.subr.mxu0 0.0
    %4017 = vmatpush1.msra.mxu0 0.0
    %4018 = vmatprep.subr.mxu0 0.0
    %4019 = vmatpush1.msra.mxu0 0.0
    %4020 = vmatprep.subr.mxu0 0.0
    %4021 = vmatpush1.msra.mxu0 0.0
    %4022 = vmatprep.subr.mxu0 0.0
    %4023 = vmatpush1.msra.mxu0 0.0
    %4024 = vmatprep.subr.mxu0 0.0
    %4025 = vmatpush1.msra.mxu0 0.0
    %4026 = vmatprep.subr.mxu0 0.0
    %4027 = vmatpush1.msra.mxu0 0.0
    %4028 = vmatprep.subr.mxu0 0.0
    %4029 = vmatpush1.msra.mxu0 0.0
    %4030 = vmatprep.subr.mxu0 0.0
    %4031 = vmatpush1.msra.mxu0 0.0
    %4032 = vmatprep.subr.mxu0 0.0
    %4033 = vmatpush1.msra.mxu0 0.0
    %4034 = vmatprep.subr.mxu0 0.0
    %4035 = vmatpush1.msra.mxu0 0.0
    %4036 = vmatprep.subr.mxu0 0.0
    %4037 = vmatpush1.msra.mxu0 0.0
    %4038 = vmatprep.subr.mxu0 0.0
    %4039 = vmatpush1.msra.mxu0 0.0
    %4040 = vmatprep.subr.mxu0 0.0
    %4041 = vmatpush1.msra.mxu0 0.0
    %4042 = vmatprep.subr.mxu0 0.0
    %4043 = vmatpush1.msra.mxu0 0.0
    %4044 = vmatprep.mubr.f32.mxu0 0.0
    %4045 = vmatmul.mubr.f32.gmra.mrb[0].mxu0 %v3979
    %v4046 = vpop.f32.mrb[0].mxu0
    %v4047 = vadd.f32 %v519, %v4046
    %v4048 = vpop.f32.mrb[0].mxu0
    %v4049 = vadd.f32 %v523, %v4048
    %4050 = vdwg.mxu0
    %4051 = vmatprep.subr.mxu0 0.0
    %4052 = vmatpush1.msra.mxu0 %v420
    %4053 = vmatprep.subr.mxu0 0.0
    %4054 = vmatpush1.msra.mxu0 %v423
    %4055 = vmatprep.subr.mxu0 0.0
    %4056 = vmatpush1.msra.mxu0 %v426
    %4057 = vmatprep.subr.mxu0 0.0
    %4058 = vmatpush1.msra.mxu0 %v429
    %4059 = vmatprep.subr.mxu0 0.0
    %4060 = vmatpush1.msra.mxu0 %v432
    %4061 = vmatprep.subr.mxu0 0.0
    %4062 = vmatpush1.msra.mxu0 %v435
    %4063 = vmatprep.subr.mxu0 0.0
    %4064 = vmatpush1.msra.mxu0 %v438
    %4065 = vmatprep.subr.mxu0 0.0
    %4066 = vmatpush1.msra.mxu0 %v441
    %4067 = vmatprep.subr.mxu0 0.0
    %4068 = vmatpush1.msra.mxu0 %v444
    %4069 = vmatprep.subr.mxu0 0.0
    %4070 = vmatpush1.msra.mxu0 %v447
    %4071 = vmatprep.subr.mxu0 0.0
    %4072 = vmatpush1.msra.mxu0 %v450
    %4073 = vmatprep.subr.mxu0 0.0
    %4074 = vmatpush1.msra.mxu0 %v453
    %4075 = vmatprep.subr.mxu0 0.0
    %4076 = vmatpush1.msra.mxu0 %v456
    %4077 = vmatprep.subr.mxu0 0.0
    %4078 = vmatpush1.msra.mxu0 %v459
    %4079 = vmatprep.subr.mxu0 0.0
    %4080 = vmatpush1.msra.mxu0 %v462
    %4081 = vmatprep.subr.mxu0 0.0
    %4082 = vmatpush1.msra.mxu0 %v465
    %4083 = vmatprep.subr.mxu0 0.0
    %4084 = vmatpush1.msra.mxu0 0.0
    %4085 = vmatprep.subr.mxu0 0.0
    %4086 = vmatpush1.msra.mxu0 0.0
    %4087 = vmatprep.subr.mxu0 0.0
    %4088 = vmatpush1.msra.mxu0 0.0
    %4089 = vmatprep.subr.mxu0 0.0
    %4090 = vmatpush1.msra.mxu0 0.0
    %4091 = vmatprep.subr.mxu0 0.0
    %4092 = vmatpush1.msra.mxu0 0.0
    %4093 = vmatprep.subr.mxu0 0.0
    %4094 = vmatpush1.msra.mxu0 0.0
    %4095 = vmatprep.subr.mxu0 0.0
    %4096 = vmatpush1.msra.mxu0 0.0
    %4097 = vmatprep.subr.mxu0 0.0
    %4098 = vmatpush1.msra.mxu0 0.0
    %4099 = vmatprep.subr.mxu0 0.0
    %4100 = vmatpush1.msra.mxu0 0.0
    %4101 = vmatprep.subr.mxu0 0.0
    %4102 = vmatpush1.msra.mxu0 0.0
    %4103 = vmatprep.subr.mxu0 0.0
    %4104 = vmatpush1.msra.mxu0 0.0
    %4105 = vmatprep.subr.mxu0 0.0
    %4106 = vmatpush1.msra.mxu0 0.0
    %4107 = vmatprep.subr.mxu0 0.0
    %4108 = vmatpush1.msra.mxu0 0.0
    %4109 = vmatprep.subr.mxu0 0.0
    %4110 = vmatpush1.msra.mxu0 0.0
    %4111 = vmatprep.subr.mxu0 0.0
    %4112 = vmatpush1.msra.mxu0 0.0
    %4113 = vmatprep.subr.mxu0 0.0
    %4114 = vmatpush1.msra.mxu0 0.0
    %4115 = vmatprep.mubr.f32.mxu0 0.0
    %4116 = vmatmul.mubr.f32.gmra.mrb[0].mxu0 %v3979
    %v4117 = vpop.f32.mrb[0].mxu0
    %v4118 = vadd.f32 %v527, %v4117
    %v4119 = vpop.f32.mrb[0].mxu0
    %4120 = vdwg.mxu0
    %4121 = vmatprep.subr.mxu0 %v467
    %4122 = vmatpush1.msra.mxu0 %v466
    %4123 = vmatprep.subr.mxu0 %v470
    %4124 = vmatpush1.msra.mxu0 %v469
    %4125 = vmatprep.subr.mxu0 %v473
    %4126 = vmatpush1.msra.mxu0 %v472
    %4127 = vmatprep.subr.mxu0 %v476
    %4128 = vmatpush1.msra.mxu0 %v475
    %4129 = vmatprep.subr.mxu0 %v479
    %4130 = vmatpush1.msra.mxu0 %v478
    %4131 = vmatprep.subr.mxu0 %v482
    %4132 = vmatpush1.msra.mxu0 %v481
    %4133 = vmatprep.subr.mxu0 %v485
    %4134 = vmatpush1.msra.mxu0 %v484
    %4135 = vmatprep.subr.mxu0 %v488
    %4136 = vmatpush1.msra.mxu0 %v487
    %4137 = vmatprep.subr.mxu0 %v491
    %4138 = vmatpush1.msra.mxu0 %v490
    %4139 = vmatprep.subr.mxu0 %v494
    %4140 = vmatpush1.msra.mxu0 %v493
    %4141 = vmatprep.subr.mxu0 %v497
    %4142 = vmatpush1.msra.mxu0 %v496
    %4143 = vmatprep.subr.mxu0 %v500
    %4144 = vmatpush1.msra.mxu0 %v499
    %4145 = vmatprep.subr.mxu0 %v503
    %4146 = vmatpush1.msra.mxu0 %v502
    %4147 = vmatprep.subr.mxu0 %v506
    %4148 = vmatpush1.msra.mxu0 %v505
    %4149 = vmatprep.subr.mxu0 %v509
    %4150 = vmatpush1.msra.mxu0 %v508
    %4151 = vmatprep.subr.mxu0 %v512
    %4152 = vmatpush1.msra.mxu0 %v511
    %4153 = vmatprep.subr.mxu0 0.0
    %4154 = vmatpush1.msra.mxu0 0.0
    %4155 = vmatprep.subr.mxu0 0.0
    %4156 = vmatpush1.msra.mxu0 0.0
    %4157 = vmatprep.subr.mxu0 0.0
    %4158 = vmatpush1.msra.mxu0 0.0
    %4159 = vmatprep.subr.mxu0 0.0
    %4160 = vmatpush1.msra.mxu0 0.0
    %4161 = vmatprep.subr.mxu0 0.0
    %4162 = vmatpush1.msra.mxu0 0.0
    %4163 = vmatprep.subr.mxu0 0.0
    %4164 = vmatpush1.msra.mxu0 0.0
    %4165 = vmatprep.subr.mxu0 0.0
    %4166 = vmatpush1.msra.mxu0 0.0
    %4167 = vmatprep.subr.mxu0 0.0
    %4168 = vmatpush1.msra.mxu0 0.0
    %4169 = vmatprep.subr.mxu0 0.0
    %4170 = vmatpush1.msra.mxu0 0.0
    %4171 = vmatprep.subr.mxu0 0.0
    %4172 = vmatpush1.msra.mxu0 0.0
    %4173 = vmatprep.subr.mxu0 0.0
    %4174 = vmatpush1.msra.mxu0 0.0
    %4175 = vmatprep.subr.mxu0 0.0
    %4176 = vmatpush1.msra.mxu0 0.0
    %4177 = vmatprep.subr.mxu0 0.0
    %4178 = vmatpush1.msra.mxu0 0.0
    %4179 = vmatprep.subr.mxu0 0.0
    %4180 = vmatpush1.msra.mxu0 0.0
    %4181 = vmatprep.subr.mxu0 0.0
    %4182 = vmatpush1.msra.mxu0 0.0
    %4183 = vmatprep.subr.mxu0 0.0
    %4184 = vmatpush1.msra.mxu0 0.0
    %4185 = vmatprep.mubr.f32.mxu0 0.0
    %4186 = vmatmul.mubr.f32.gmra.mrb[0].mxu0 %v3816
    %v4187 = vpop.f32.mrb[0].mxu0
    %v4188 = vadd.f32 0.0, %v4187
    %v4189 = vpop.f32.mrb[0].mxu0
    %v4190 = vadd.f32 0.0, %v4189
    %4191 = vdwg.mxu0
    %4192 = vmatprep.subr.mxu0 0.0
    %4193 = vmatpush1.msra.mxu0 %v468
    %4194 = vmatprep.subr.mxu0 0.0
    %4195 = vmatpush1.msra.mxu0 %v471
    %4196 = vmatprep.subr.mxu0 0.0
    %4197 = vmatpush1.msra.mxu0 %v474
    %4198 = vmatprep.subr.mxu0 0.0
    %4199 = vmatpush1.msra.mxu0 %v477
    %4200 = vmatprep.subr.mxu0 0.0
    %4201 = vmatpush1.msra.mxu0 %v480
    %4202 = vmatprep.subr.mxu0 0.0
    %4203 = vmatpush1.msra.mxu0 %v483
    %4204 = vmatprep.subr.mxu0 0.0
    %4205 = vmatpush1.msra.mxu0 %v486
    %4206 = vmatprep.subr.mxu0 0.0
    %4207 = vmatpush1.msra.mxu0 %v489
    %4208 = vmatprep.subr.mxu0 0.0
    %4209 = vmatpush1.msra.mxu0 %v492
    %4210 = vmatprep.subr.mxu0 0.0
    %4211 = vmatpush1.msra.mxu0 %v495
    %4212 = vmatprep.subr.mxu0 0.0
    %4213 = vmatpush1.msra.mxu0 %v498
    %4214 = vmatprep.subr.mxu0 0.0
    %4215 = vmatpush1.msra.mxu0 %v501
    %4216 = vmatprep.subr.mxu0 0.0
    %4217 = vmatpush1.msra.mxu0 %v504
    %4218 = vmatprep.subr.mxu0 0.0
    %4219 = vmatpush1.msra.mxu0 %v507
    %4220 = vmatprep.subr.mxu0 0.0
    %4221 = vmatpush1.msra.mxu0 %v510
    %4222 = vmatprep.subr.mxu0 0.0
    %4223 = vmatpush1.msra.mxu0 %v513
    %4224 = vmatprep.subr.mxu0 0.0
    %4225 = vmatpush1.msra.mxu0 0.0
    %4226 = vmatprep.subr.mxu0 0.0
    %4227 = vmatpush1.msra.mxu0 0.0
    %4228 = vmatprep.subr.mxu0 0.0
    %4229 = vmatpush1.msra.mxu0 0.0
    %4230 = vmatprep.subr.mxu0 0.0
    %4231 = vmatpush1.msra.mxu0 0.0
    %4232 = vmatprep.subr.mxu0 0.0
    %4233 = vmatpush1.msra.mxu0 0.0
    %4234 = vmatprep.subr.mxu0 0.0
    %4235 = vmatpush1.msra.mxu0 0.0
    %4236 = vmatprep.subr.mxu0 0.0
    %4237 = vmatpush1.msra.mxu0 0.0
    %4238 = vmatprep.subr.mxu0 0.0
    %4239 = vmatpush1.msra.mxu0 0.0
    %4240 = vmatprep.subr.mxu0 0.0
    %4241 = vmatpush1.msra.mxu0 0.0
    %4242 = vmatprep.subr.mxu0 0.0
    %4243 = vmatpush1.msra.mxu0 0.0
    %4244 = vmatprep.subr.mxu0 0.0
    %4245 = vmatpush1.msra.mxu0 0.0
    %4246 = vmatprep.subr.mxu0 0.0
    %4247 = vmatpush1.msra.mxu0 0.0
    %4248 = vmatprep.subr.mxu0 0.0
    %4249 = vmatpush1.msra.mxu0 0.0
    %4250 = vmatprep.subr.mxu0 0.0
    %4251 = vmatpush1.msra.mxu0 0.0
    %4252 = vmatprep.subr.mxu0 0.0
    %4253 = vmatpush1.msra.mxu0 0.0
    %4254 = vmatprep.subr.mxu0 0.0
    %4255 = vmatpush1.msra.mxu0 0.0
    %4256 = vmatprep.mubr.f32.mxu0 0.0
    %4257 = vmatmul.mubr.f32.gmra.mrb[0].mxu0 %v3816
    %v4258 = vpop.f32.mrb[0].mxu0
    %v4259 = vadd.f32 0.0, %v4258
    %v4260 = vpop.f32.mrb[0].mxu0
    %4261 = vdwg.mxu0
    %v4262 = vadd.f32 %v4047, %v4188
    %v4263 = vxor.u32 %v4262, 2147483648
    %v4264 = vmul.f32 %v4263, 1.442695
    %v4265 = vpow.pop %v4264
    %v4266 = vadd.f32 %v4265, 1.0
    %v4267 = vrcp.pop %v4266
    %v4268 = vmul.f32 1.0, %v4267
    %v4269 = vadd.f32 %v4049, %v4190
    %v4270 = vxor.u32 %v4269, 2147483648
    %v4271 = vmul.f32 %v4270, 1.442695
    %v4272 = vpow.pop %v4271
    %v4273 = vadd.f32 %v4272, 1.0
    %v4274 = vrcp.pop %v4273
    %v4275 = vmul.f32 1.0, %v4274
    %v4276 = vadd.f32 %v4259, %v543
    %v4277 = vmul.f32 %v4268, %v4276
    %v4278 = vadd.f32 %v4118, %v4277
    %v4279 = vtanh.pop %v4278
    %v4280 = vsub.f32 1.0, %v4275
    %v4281 = vmul.f32 %v4280, %v4279
    %v4282 = vmul.f32 %v4275, %v3816
    %v4283 = vadd.f32 %v4281, %v4282
    %v4284 = vld [vmem:[%s10] sm:$0xff]
    %v4285 = vld [vmem:[%s10 + $0x8] sm:$0xff]
    %v4286 = vld [vmem:[%s10 + $0x10] sm:$0xff]
    %v4287 = vld [vmem:[%s10 + $0x18] sm:$0xff]
    %v4288 = vld [vmem:[%s10 + $0x20] sm:$0xff]
    %v4289 = vld [vmem:[%s10 + $0x28] sm:$0xff]
    %v4290 = vld [vmem:[%s10 + $0x30] sm:$0xff]
    %v4291 = vld [vmem:[%s10 + $0x38] sm:$0xff]
    %v4292 = vld [vmem:[%s10 + $0x40] sm:$0xff]
    %v4293 = vld [vmem:[%s10 + $0x48] sm:$0xff]
    %v4294 = vld [vmem:[%s10 + $0x50] sm:$0xff]
    %v4295 = vld [vmem:[%s10 + $0x58] sm:$0xff]
    %v4296 = vld [vmem:[%s10 + $0x60] sm:$0xff]
    %v4297 = vld [vmem:[%s10 + $0x68] sm:$0xff]
    %v4298 = vld [vmem:[%s10 + $0x70] sm:$0xff]
    %v4299 = vld [vmem:[%s10 + $0x78] sm:$0xff]
    %v4300 = vld [vmem:[%s11] sm:$0x1]
    %v4302 = vlaneseq
    %v4303 = vshrl.u32 %v4302, 7
    %v4304 = vsub.s32 0, %v4303
    %v4305 = vrot.slane %v4300, %v4304
    %4307 = vmatprep.subr.mxu0 0.0
    %4308 = vmatpush1.msra.mxu0 %v4284
    %4309 = vmatprep.subr.mxu0 0.0
    %4310 = vmatpush1.msra.mxu0 %v4285
    %4311 = vmatprep.subr.mxu0 0.0
    %4312 = vmatpush1.msra.mxu0 %v4286
    %4313 = vmatprep.subr.mxu0 0.0
    %4314 = vmatpush1.msra.mxu0 %v4287
    %4315 = vmatprep.subr.mxu0 0.0
    %4316 = vmatpush1.msra.mxu0 %v4288
    %4317 = vmatprep.subr.mxu0 0.0
    %4318 = vmatpush1.msra.mxu0 %v4289
    %4319 = vmatprep.subr.mxu0 0.0
    %4320 = vmatpush1.msra.mxu0 %v4290
    %4321 = vmatprep.subr.mxu0 0.0
    %4322 = vmatpush1.msra.mxu0 %v4291
    %4323 = vmatprep.subr.mxu0 0.0
    %4324 = vmatpush1.msra.mxu0 %v4292
    %4325 = vmatprep.subr.mxu0 0.0
    %4326 = vmatpush1.msra.mxu0 %v4293
    %4327 = vmatprep.subr.mxu0 0.0
    %4328 = vmatpush1.msra.mxu0 %v4294
    %4329 = vmatprep.subr.mxu0 0.0
    %4330 = vmatpush1.msra.mxu0 %v4295
    %4331 = vmatprep.subr.mxu0 0.0
    %4332 = vmatpush1.msra.mxu0 %v4296
    %4333 = vmatprep.subr.mxu0 0.0
    %4334 = vmatpush1.msra.mxu0 %v4297
    %4335 = vmatprep.subr.mxu0 0.0
    %4336 = vmatpush1.msra.mxu0 %v4298
    %4337 = vmatprep.subr.mxu0 0.0
    %4338 = vmatpush1.msra.mxu0 %v4299
    %4339 = vmatprep.subr.mxu0 0.0
    %4340 = vmatpush1.msra.mxu0 0.0
    %4341 = vmatprep.subr.mxu0 0.0
    %4342 = vmatpush1.msra.mxu0 0.0
    %4343 = vmatprep.subr.mxu0 0.0
    %4344 = vmatpush1.msra.mxu0 0.0
    %4345 = vmatprep.subr.mxu0 0.0
    %4346 = vmatpush1.msra.mxu0 0.0
    %4347 = vmatprep.subr.mxu0 0.0
    %4348 = vmatpush1.msra.mxu0 0.0
    %4349 = vmatprep.subr.mxu0 0.0
    %4350 = vmatpush1.msra.mxu0 0.0
    %4351 = vmatprep.subr.mxu0 0.0
    %4352 = vmatpush1.msra.mxu0 0.0
    %4353 = vmatprep.subr.mxu0 0.0
    %4354 = vmatpush1.msra.mxu0 0.0
    %4355 = vmatprep.subr.mxu0 0.0
    %4356 = vmatpush1.msra.mxu0 0.0
    %4357 = vmatprep.subr.mxu0 0.0
    %4358 = vmatpush1.msra.mxu0 0.0
    %4359 = vmatprep.subr.mxu0 0.0
    %4360 = vmatpush1.msra.mxu0 0.0
    %4361 = vmatprep.subr.mxu0 0.0
    %4362 = vmatpush1.msra.mxu0 0.0
    %4363 = vmatprep.subr.mxu0 0.0
    %4364 = vmatpush1.msra.mxu0 0.0
    %4365 = vmatprep.subr.mxu0 0.0
    %4366 = vmatpush1.msra.mxu0 0.0
    %4367 = vmatprep.subr.mxu0 0.0
    %4368 = vmatpush1.msra.mxu0 0.0
    %4369 = vmatprep.subr.mxu0 0.0
    %4370 = vmatpush1.msra.mxu0 0.0
    %4371 = vmatprep.mubr.f32.mxu0 0.0
    %4372 = vmatmul.mubr.f32.gmra.mrb[0].mxu0 %v4283
    %v4373 = vpop.f32.mrb[0].mxu0
    %v4374 = vadd.f32 %v4305, %v4373
    %v4375 = vpop.f32.mrb[0].mxu0
    %4376 = vdwg.mxu0
    %v4377 = vmax.f32 %v4374, 0.0
    %v4378 = vld [vmem:[%s12] sm:$0xff]
    %v4379 = vld [vmem:[%s12 + $0x8] sm:$0xff]
    %v4380 = vld [vmem:[%s12 + $0x10] sm:$0xff]
    %v4381 = vld [vmem:[%s12 + $0x18] sm:$0xff]
    %v4382 = vld [vmem:[%s13] sm:$0x1]
    %v4384 = vlaneseq
    %v4385 = vshrl.u32 %v4384, 7
    %v4386 = vsub.s32 0, %v4385
    %v4387 = vrot.slane %v4382, %v4386
    %vm4389 = vcmask 261120
    %v4391 = vsel %vm4389, %v4377, 0
    %4393 = vmatprep.subr.mxu0 0.0
    %4394 = vmatpush1.msra.mxu0 %v4378
    %4395 = vmatprep.subr.mxu0 0.0
    %4396 = vmatpush1.msra.mxu0 %v4379
    %4397 = vmatprep.subr.mxu0 0.0
    %4398 = vmatpush1.msra.mxu0 %v4380
    %4399 = vmatprep.subr.mxu0 0.0
    %4400 = vmatpush1.msra.mxu0 %v4381
    %4401 = vmatprep.subr.mxu0 0.0
    %4402 = vmatpush1.msra.mxu0 0.0
    %4403 = vmatprep.subr.mxu0 0.0
    %4404 = vmatpush1.msra.mxu0 0.0
    %4405 = vmatprep.subr.mxu0 0.0
    %4406 = vmatpush1.msra.mxu0 0.0
    %4407 = vmatprep.subr.mxu0 0.0
    %4408 = vmatpush1.msra.mxu0 0.0
    %4409 = vmatprep.subr.mxu0 0.0
    %4410 = vmatpush1.msra.mxu0 0.0
    %4411 = vmatprep.subr.mxu0 0.0
    %4412 = vmatpush1.msra.mxu0 0.0
    %4413 = vmatprep.subr.mxu0 0.0
    %4414 = vmatpush1.msra.mxu0 0.0
    %4415 = vmatprep.subr.mxu0 0.0
    %4416 = vmatpush1.msra.mxu0 0.0
    %4417 = vmatprep.subr.mxu0 0.0
    %4418 = vmatpush1.msra.mxu0 0.0
    %4419 = vmatprep.subr.mxu0 0.0
    %4420 = vmatpush1.msra.mxu0 0.0
    %4421 = vmatprep.subr.mxu0 0.0
    %4422 = vmatpush1.msra.mxu0 0.0
    %4423 = vmatprep.subr.mxu0 0.0
    %4424 = vmatpush1.msra.mxu0 0.0
    %4425 = vmatprep.subr.mxu0 0.0
    %4426 = vmatpush1.msra.mxu0 0.0
    %4427 = vmatprep.subr.mxu0 0.0
    %4428 = vmatpush1.msra.mxu0 0.0
    %4429 = vmatprep.subr.mxu0 0.0
    %4430 = vmatpush1.msra.mxu0 0.0
    %4431 = vmatprep.subr.mxu0 0.0
    %4432 = vmatpush1.msra.mxu0 0.0
    %4433 = vmatprep.subr.mxu0 0.0
    %4434 = vmatpush1.msra.mxu0 0.0
    %4435 = vmatprep.subr.mxu0 0.0
    %4436 = vmatpush1.msra.mxu0 0.0
    %4437 = vmatprep.subr.mxu0 0.0
    %4438 = vmatpush1.msra.mxu0 0.0
    %4439 = vmatprep.subr.mxu0 0.0
    %4440 = vmatpush1.msra.mxu0 0.0
    %4441 = vmatprep.subr.mxu0 0.0
    %4442 = vmatpush1.msra.mxu0 0.0
    %4443 = vmatprep.subr.mxu0 0.0
    %4444 = vmatpush1.msra.mxu0 0.0
    %4445 = vmatprep.subr.mxu0 0.0
    %4446 = vmatpush1.msra.mxu0 0.0
    %4447 = vmatprep.subr.mxu0 0.0
    %4448 = vmatpush1.msra.mxu0 0.0
    %4449 = vmatprep.subr.mxu0 0.0
    %4450 = vmatpush1.msra.mxu0 0.0
    %4451 = vmatprep.subr.mxu0 0.0
    %4452 = vmatpush1.msra.mxu0 0.0
    %4453 = vmatprep.subr.mxu0 0.0
    %4454 = vmatpush1.msra.mxu0 0.0
    %4455 = vmatprep.subr.mxu0 0.0
    %4456 = vmatpush1.msra.mxu0 0.0
    %4457 = vmatprep.mubr.f32.mxu0 0.0
    %4458 = vmatmul.mubr.f32.gmra.mrb[0].mxu0 %v4391
    %v4459 = vpop.f32.mrb[0].mxu0
    %v4460 = vadd.f32 %v4387, %v4459
    %v4461 = vpop.f32.mrb[0].mxu0
    %4462 = vdwg.mxu0
    %v4463 = vmax.f32 %v4460, 0.0
    %v4464 = vld [vmem:[%s14] sm:$0xff]
    %v4465 = vld [vmem:[%s14 + $0x8] sm:$0xff]
    %v4466 = vld [vmem:[#allocation2] sm:$0x1]
    %v4468 = vlaneseq
    %v4469 = vshrl.u32 %v4468, 7
    %v4470 = vsub.s32 0, %v4469
    %v4471 = vrot.slane %v4466, %v4470
    %v4474 = vsel %vm127, %v4463, 0
    %4476 = vmatprep.subr.mxu0 0.0
    %4477 = vmatpush1.msra.mxu0 %v4464
    %4478 = vmatprep.subr.mxu0 0.0
    %4479 = vmatpush1.msra.mxu0 %v4465
    %4480 = vmatprep.subr.mxu0 0.0
    %4481 = vmatpush1.msra.mxu0 0.0
    %4482 = vmatprep.subr.mxu0 0.0
    %4483 = vmatpush1.msra.mxu0 0.0
    %4484 = vmatprep.subr.mxu0 0.0
    %4485 = vmatpush1.msra.mxu0 0.0
    %4486 = vmatprep.subr.mxu0 0.0
    %4487 = vmatpush1.msra.mxu0 0.0
    %4488 = vmatprep.subr.mxu0 0.0
    %4489 = vmatpush1.msra.mxu0 0.0
    %4490 = vmatprep.subr.mxu0 0.0
    %4491 = vmatpush1.msra.mxu0 0.0
    %4492 = vmatprep.subr.mxu0 0.0
    %4493 = vmatpush1.msra.mxu0 0.0
    %4494 = vmatprep.subr.mxu0 0.0
    %4495 = vmatpush1.msra.mxu0 0.0
    %4496 = vmatprep.subr.mxu0 0.0
    %4497 = vmatpush1.msra.mxu0 0.0
    %4498 = vmatprep.subr.mxu0 0.0
    %4499 = vmatpush1.msra.mxu0 0.0
    %4500 = vmatprep.subr.mxu0 0.0
    %4501 = vmatpush1.msra.mxu0 0.0
    %4502 = vmatprep.subr.mxu0 0.0
    %4503 = vmatpush1.msra.mxu0 0.0
    %4504 = vmatprep.subr.mxu0 0.0
    %4505 = vmatpush1.msra.mxu0 0.0
    %4506 = vmatprep.subr.mxu0 0.0
    %4507 = vmatpush1.msra.mxu0 0.0
    %4508 = vmatprep.subr.mxu0 0.0
    %4509 = vmatpush1.msra.mxu0 0.0
    %4510 = vmatprep.subr.mxu0 0.0
    %4511 = vmatpush1.msra.mxu0 0.0
    %4512 = vmatprep.subr.mxu0 0.0
    %4513 = vmatpush1.msra.mxu0 0.0
    %4514 = vmatprep.subr.mxu0 0.0
    %4515 = vmatpush1.msra.mxu0 0.0
    %4516 = vmatprep.subr.mxu0 0.0
    %4517 = vmatpush1.msra.mxu0 0.0
    %4518 = vmatprep.subr.mxu0 0.0
    %4519 = vmatpush1.msra.mxu0 0.0
    %4520 = vmatprep.subr.mxu0 0.0
    %4521 = vmatpush1.msra.mxu0 0.0
    %4522 = vmatprep.subr.mxu0 0.0
    %4523 = vmatpush1.msra.mxu0 0.0
    %4524 = vmatprep.subr.mxu0 0.0
    %4525 = vmatpush1.msra.mxu0 0.0
    %4526 = vmatprep.subr.mxu0 0.0
    %4527 = vmatpush1.msra.mxu0 0.0
    %4528 = vmatprep.subr.mxu0 0.0
    %4529 = vmatpush1.msra.mxu0 0.0
    %4530 = vmatprep.subr.mxu0 0.0
    %4531 = vmatpush1.msra.mxu0 0.0
    %4532 = vmatprep.subr.mxu0 0.0
    %4533 = vmatpush1.msra.mxu0 0.0
    %4534 = vmatprep.subr.mxu0 0.0
    %4535 = vmatpush1.msra.mxu0 0.0
    %4536 = vmatprep.subr.mxu0 0.0
    %4537 = vmatpush1.msra.mxu0 0.0
    %4538 = vmatprep.subr.mxu0 0.0
    %4539 = vmatpush1.msra.mxu0 0.0
    %4540 = vmatprep.mubr.f32.mxu0 0.0
    %4541 = vmatmul.mubr.f32.gmra.mrb[0].mxu0 %v4474
    %v4542 = vpop.f32.mrb[0].mxu0
    %v4543 = vadd.f32 %v4471, %v4542
    %v4544 = vpop.f32.mrb[0].mxu0
    %4545 = vdwg.mxu0
    %vm4546 = vcmask 7168
    %4547 = vst.msk [vmem:[%s16] sm:$0xff] %vm4546, %v4543
    // Predicated region
    $region78: #{tpu_custom_call.1} parent=1 // pred_check
      _
    $region79: #{tpu_custom_call.1} parent=1 // pred_check_branch
      %4549 = sbr.rel (0) target = $region81
    $region80: #{tpu_custom_call.1} parent=1 // pred_region
      _
    $region81: #{tpu_custom_call.1} parent=1 // pred_fallthru
      _
    // Predicated region
    $region82: #{tpu_custom_call.1} parent=1 // pred_check
      _
    $region83: #{tpu_custom_call.1} parent=1 // pred_check_branch
      %4551 = sbr.rel (0) target = $region85
    $region84: #{tpu_custom_call.1} parent=1 // pred_region
      _
    $region85: #{tpu_custom_call.1} parent=1 // pred_fallthru
      _
    %4552 = vsyncpa [#allocation4], 1
    %4553 = vsyncpa [#allocation6], 1

</llo_original>
